<compile_context>
chip_gen: v6e
topology: v6e:2x2x1
jax: 0.10.0
libtpu: 0.0.40
codegen_flags: <defaults>
</compile_context>

<pallas_src>
import functools

import jax
import jax.numpy as jnp
from jax.experimental import pallas as pl
from jax.experimental.pallas import tpu as pltpu

P_DROP = 0.1
KEEP_PROB = 1.0 - P_DROP


def _dropout_kernel(seed_ref, x_ref, o_ref, *, p_drop):
    rows, cols = x_ref.shape

    # Counter-based PRNG: unique u32 counter per element (global across the
    # grid via program_id), mixed with the seed through a murmur3-style
    # finalizer.  Pure VPU integer ops -> portable to interpret mode.
    row_ids = jax.lax.broadcasted_iota(jnp.int32, (rows, cols), 0).astype(jnp.uint32)
    col_ids = jax.lax.broadcasted_iota(jnp.int32, (rows, cols), 1).astype(jnp.uint32)
    block_off = (pl.program_id(0) * rows).astype(jnp.uint32)
    idx = (row_ids + block_off) * jnp.uint32(cols) + col_ids

    seed = seed_ref[0].astype(jnp.uint32)
    h = idx ^ (seed * jnp.uint32(0x9E3779B9))
    h = h ^ (h >> 16)
    h = h * jnp.uint32(0x7FEB352D)
    h = h ^ (h >> 15)
    h = h * jnp.uint32(0x846CA68B)
    h = h ^ (h >> 16)

    # Drop an element iff its uniform-u32 draw falls below round(p * 2^32).
    threshold = jnp.uint32(round(p_drop * (2.0 ** 32)))
    keep = (h >= threshold).astype(jnp.float32)

    scale = jnp.float32(1.0 / (1.0 - p_drop))
    o_ref[...] = (x_ref[...] * (keep * scale)).astype(o_ref.dtype)


def dropout_pallas(x, seed, p_drop=P_DROP, block_rows=None):
    """Dropout matching torch.nn.Dropout(p) in training mode.

    x: (B, S, H) float32. Returns same shape/dtype.
    """
    b, s, h = x.shape
    rows = b * s
    x2d = x.reshape(rows, h)

    if block_rows is None:
        # Whole tensor is ~1.15 MiB: one block, one grid step, fits VMEM on
        # every TPU generation (v5e/v6e/v7x).
        block_rows = rows
    assert rows % block_rows == 0, "rows must tile evenly"

    seed_arr = jnp.asarray([seed], dtype=jnp.int32)

    out2d = pl.pallas_call(
        functools.partial(_dropout_kernel, p_drop=p_drop),
        out_shape=jax.ShapeDtypeStruct((rows, h), x.dtype),
        grid_spec=pltpu.PrefetchScalarGridSpec(
            num_scalar_prefetch=1,
            grid=(rows // block_rows,),
            in_specs=[pl.BlockSpec((block_rows, h), lambda i, seed: (i, 0))],
            out_specs=pl.BlockSpec((block_rows, h), lambda i, seed: (i, 0)),
        ),
        compiler_params=pltpu.CompilerParams(
            dimension_semantics=("parallel",),
        ),
    )(seed_arr, x2d)

    return out2d.reshape(b, s, h)


if __name__ == "__main__":
    key = jax.random.PRNGKey(0)
    x428 = jax.random.normal(key, (1, 384, 768), dtype=jnp.float32)

    out = dropout_pallas(x428, seed=1234)
    out = jax.block_until_ready(out)

    # Shape / dtype preserved.
    assert out.shape == x428.shape and out.dtype == x428.dtype

    # Surviving elements must equal x / keep_prob; dropped ones are exactly 0.
    kept = out != 0
    expected = x428 / KEEP_PROB
    max_err = float(jnp.max(jnp.where(kept, jnp.abs(out - expected), 0.0)))
    assert max_err < 1e-5, f"kept-element scaling wrong: max_err={max_err}"

    frac_kept = float(jnp.mean(kept.astype(jnp.float32)))
    assert 0.85 < frac_kept < 0.95, f"unexpected keep fraction {frac_kept}"

    print("KERNEL_OK")
</pallas_src>

<mosaic_0001>
module attributes {stable_mosaic.version = 11 : i64} {
  func.func @_dropout_kernel(%arg0: i32, %arg1: memref<1xi32, #tpu.memory_space<smem>>, %arg2: memref<384x768xf32, #tpu.memory_space<vmem>>, %arg3: memref<384x768xf32, #tpu.memory_space<vmem>>) attributes {dimension_semantics = [#tpu.dimension_semantics<parallel>], iteration_bounds = array<i64: 1>, scalar_prefetch = 1 : i64, scratch_operands = 0 : i64, tpu.core_type = #tpu.core_type<tc>, window_params = [{transform_indices = @transform_0, window_bounds = array<i64: 384, 768>}, {transform_indices = @transform_1, window_bounds = array<i64: 384, 768>}]} {
    %0 = tpu.iota {dimensions = array<i32: 0>} : vector<384x768xi32>
    %1 = tpu.iota {dimensions = array<i32: 1>} : vector<384x768xi32>
    %c384_i32 = arith.constant 384 : i32
    %2 = arith.muli %arg0, %c384_i32 : i32
    %3 = vector.broadcast %2 : i32 to vector<384x768xi32>
    %4 = arith.addi %0, %3 : vector<384x768xi32>
    %c768_i32 = arith.constant 768 : i32
    %5 = vector.broadcast %c768_i32 : i32 to vector<384x768xi32>
    %6 = arith.muli %4, %5 : vector<384x768xi32>
    %7 = arith.addi %6, %1 : vector<384x768xi32>
    %c0 = arith.constant 0 : index
    %8 = memref.load %arg1[%c0] : memref<1xi32, #tpu.memory_space<smem>>
    %c-1640531527_i32 = arith.constant -1640531527 : i32
    %9 = arith.muli %8, %c-1640531527_i32 : i32
    %10 = vector.broadcast %9 : i32 to vector<384x768xi32>
    %11 = arith.xori %7, %10 : vector<384x768xi32>
    %c16_i32 = arith.constant 16 : i32
    %12 = vector.broadcast %c16_i32 : i32 to vector<384x768xi32>
    %13 = arith.shrui %11, %12 : vector<384x768xi32>
    %14 = arith.xori %11, %13 : vector<384x768xi32>
    %c2146121005_i32 = arith.constant 2146121005 : i32
    %15 = vector.broadcast %c2146121005_i32 : i32 to vector<384x768xi32>
    %16 = arith.muli %14, %15 : vector<384x768xi32>
    %c15_i32 = arith.constant 15 : i32
    %17 = vector.broadcast %c15_i32 : i32 to vector<384x768xi32>
    %18 = arith.shrui %16, %17 : vector<384x768xi32>
    %19 = arith.xori %16, %18 : vector<384x768xi32>
    %c-2073254261_i32 = arith.constant -2073254261 : i32
    %20 = vector.broadcast %c-2073254261_i32 : i32 to vector<384x768xi32>
    %21 = arith.muli %19, %20 : vector<384x768xi32>
    %c16_i32_0 = arith.constant 16 : i32
    %22 = vector.broadcast %c16_i32_0 : i32 to vector<384x768xi32>
    %23 = arith.shrui %21, %22 : vector<384x768xi32>
    %24 = arith.xori %21, %23 : vector<384x768xi32>
    %c429496730_i32 = arith.constant 429496730 : i32
    %25 = vector.broadcast %c429496730_i32 : i32 to vector<384x768xi32>
    %26 = arith.cmpi uge, %24, %25 : vector<384x768xi32>
    %27 = arith.extui %26 : vector<384x768xi1> to vector<384x768xi32>
    %28 = arith.sitofp %27 : vector<384x768xi32> to vector<384x768xf32>
    %c0_1 = arith.constant 0 : index
    %c0_2 = arith.constant 0 : index
    %29 = vector.load %arg2[%c0_1, %c0_2] : memref<384x768xf32, #tpu.memory_space<vmem>>, vector<384x768xf32>
    %cst = arith.constant 1.11111116 : f32
    %30 = vector.broadcast %cst : f32 to vector<384x768xf32>
    %31 = arith.mulf %28, %30 : vector<384x768xf32>
    %32 = arith.mulf %29, %31 : vector<384x768xf32>
    %c0_3 = arith.constant 0 : index
    %c0_4 = arith.constant 0 : index
    %33 = vector.load %arg3[%c0_3, %c0_4] : memref<384x768xf32, #tpu.memory_space<vmem>>, vector<384x768xf32>
    tpu.vector_store %arg3[%c0_3, %c0_4], %32 {strides = array<i32>} : memref<384x768xf32, #tpu.memory_space<vmem>>, vector<384x768xf32>,
    return
  }
  func.func @transform_0(%arg0: i32, %arg1: memref<1xi32, #tpu.memory_space<smem>>) -> (i32, i32) {
    %c0_i32 = arith.constant 0 : i32
    %c0_i32_0 = arith.constant 0 : i32
    return %arg0, %c0_i32 : i32, i32
  }
  func.func @transform_1(%arg0: i32, %arg1: memref<1xi32, #tpu.memory_space<smem>>) -> (i32, i32) {
    %c0_i32 = arith.constant 0 : i32
    %c0_i32_0 = arith.constant 0 : i32
    return %arg0, %c0_i32 : i32, i32
  }
}

</mosaic_0001>

<llo_original>
// kernel: tpu_custom_call.1
$region0: #{tpu_custom_call.1}
  #allocation0 [shape = 'u32[]', space=smem, size = 0x4, offset = 0x4, fixed_abs, tag = 'smem constant byte address 0x4 - core index']
  #allocation1 [shape = 'u32[144,128]{1,0:T(1,128)}', space=vmem, size = 0x12000, scoped, tag = 'internal scratch']
  #allocation2 [shape = 's32[1]{0}', space=sflag, size = 0x4, scoped, tag = 'scoped memory for tpu_custom_call.1']
  #allocation3 [shape = 's32[1]{0:T(128)S(6)}', space=smem, size = 0x200, scoped, tag = 'prefetched SMEM operand 0']
  %s0 = inlined_call_operand.<no memory space> [shape: s32[1], index: 0, kind: input, shape index: {}]
  %s1 = inlined_call_operand.hbm [shape: f32[384,768], index: 1, kind: input, shape index: {}]
  %s2 = inlined_call_operand.hbm [shape: f32[384,768], index: 2, kind: output, shape index: {}]
  %s3 = sld [smem:[#allocation0]]
  $region18: #{tpu_custom_call.1} parent=0
    _
  %s5 = ssub.s32 1, %s3
  %s6 = scalar_select 0, %s5, %s3
  %7 = sst [smem:[#allocation3]] %s0
  $region1: #{tpu_custom_call.1} parent=0
    #allocation4 [shape = 'u8[1179648]{0}', space=vmem, size = 0x120000, scoped, tag = 'input window, operand 1, single buffered']
    #allocation5 [shape = 's32[1]{0}', space=sflag, size = 0x4, scoped, tag = 'scoped memory for tpu_custom_call.1']
    #allocation6 [shape = 's32[1]{0}', space=sflag, size = 0x4, scoped, tag = 'scoped memory for tpu_custom_call.1']
    #allocation7 [shape = 'u8[1179648]{0}', space=vmem, size = 0x120000, scoped, tag = 'output window, operand 0, single buffered']
    %8 = vsyncpa [#allocation5], 0
    %9 = vsyncpa [#allocation6], 0
    // Predicated region
    $region2: #{tpu_custom_call.1} parent=1 // pred_check
      _
    $region3: #{tpu_custom_call.1} parent=1 // pred_check_branch
      %11 = sbr.rel (0) target = $region5
    $region4: #{tpu_custom_call.1} parent=1 // pred_region
      %s13 = ssub.s32 36864, 36864
      %14 = vsyncadd [#allocation5], %s13
      %s15 = sshll.u32 [#allocation4], 4
      %s16 = int_to_ptr.vmem [resolvable:$true] %s15
      %21 = dma.hbm_to_vmem [thread:$0]  %s1, 36864, %s16, [#allocation5], 768, 768, 48
    $region5: #{tpu_custom_call.1} parent=1 // pred_fallthru
      _
    // Predicated region
    $region6: #{tpu_custom_call.1} parent=1 // pred_check
      _
    $region7: #{tpu_custom_call.1} parent=1 // pred_check_branch
      %23 = sbr.rel (0) target = $region9
    $region8: #{tpu_custom_call.1} parent=1 // pred_region
      %24 = dma.done [#allocation5], 36864
    $region9: #{tpu_custom_call.1} parent=1 // pred_fallthru
      _
    %v25 = vlaneseq
    %v26 = vshrl.u32 %v25, 7
    %v27 = vadd.s32 %v26, 8
    %v28 = vadd.s32 %v26, 16
    %v29 = vadd.s32 %v26, 24
    %v30 = vadd.s32 %v26, 32
    %v31 = vadd.s32 %v26, 40
    %v32 = vadd.s32 %v26, 48
    %v33 = vadd.s32 %v26, 56
    %v34 = vadd.s32 %v26, 64
    %v35 = vadd.s32 %v26, 72
    %v36 = vadd.s32 %v26, 80
    %v37 = vadd.s32 %v26, 88
    %v38 = vadd.s32 %v26, 96
    %v39 = vadd.s32 %v26, 104
    %v40 = vadd.s32 %v26, 112
    %v41 = vadd.s32 %v26, 120
    %v42 = vadd.s32 %v26, 128
    %v43 = vadd.s32 %v26, 136
    %v44 = vadd.s32 %v26, 144
    %v45 = vadd.s32 %v26, 152
    %v46 = vadd.s32 %v26, 160
    %v47 = vadd.s32 %v26, 168
    %v48 = vadd.s32 %v26, 176
    %v49 = vadd.s32 %v26, 184
    %v50 = vadd.s32 %v26, 192
    %v51 = vadd.s32 %v26, 200
    %v52 = vadd.s32 %v26, 208
    %v53 = vadd.s32 %v26, 216
    %v54 = vadd.s32 %v26, 224
    %v55 = vadd.s32 %v26, 232
    %v56 = vadd.s32 %v26, 240
    %v57 = vadd.s32 %v26, 248
    %v58 = vadd.s32 %v26, 256
    %v59 = vadd.s32 %v26, 264
    %v60 = vadd.s32 %v26, 272
    %v61 = vadd.s32 %v26, 280
    %v62 = vadd.s32 %v26, 288
    %v63 = vadd.s32 %v26, 296
    %v64 = vadd.s32 %v26, 304
    %v65 = vadd.s32 %v26, 312
    %v66 = vadd.s32 %v26, 320
    %v67 = vadd.s32 %v26, 328
    %v68 = vadd.s32 %v26, 336
    %v69 = vadd.s32 %v26, 344
    %v70 = vadd.s32 %v26, 352
    %v71 = vadd.s32 %v26, 360
    %v72 = vadd.s32 %v26, 368
    %v73 = vadd.s32 %v26, 376
    %v74 = vlaneseq
    %v75 = vand.u32 %v74, 127
    %v76 = vadd.s32 %v75, 128
    %v77 = vadd.s32 %v75, 256
    %v78 = vadd.s32 %v75, 384
    %v79 = vadd.s32 %v75, 512
    %v80 = vadd.s32 %v75, 640
    %s81 = smul.u32 0, 384
    %v82 = vstv %s81
    %v83 = vadd.s32 %v26, %v82
    %v84 = vadd.s32 %v27, %v82
    %v85 = vadd.s32 %v28, %v82
    %v86 = vadd.s32 %v29, %v82
    %v87 = vadd.s32 %v30, %v82
    %v88 = vadd.s32 %v31, %v82
    %v89 = vadd.s32 %v32, %v82
    %v90 = vadd.s32 %v33, %v82
    %v91 = vadd.s32 %v34, %v82
    %v92 = vadd.s32 %v35, %v82
    %v93 = vadd.s32 %v36, %v82
    %v94 = vadd.s32 %v37, %v82
    %v95 = vadd.s32 %v38, %v82
    %v96 = vadd.s32 %v39, %v82
    %v97 = vadd.s32 %v40, %v82
    %v98 = vadd.s32 %v41, %v82
    %v99 = vadd.s32 %v42, %v82
    %v100 = vadd.s32 %v43, %v82
    %v101 = vadd.s32 %v44, %v82
    %v102 = vadd.s32 %v45, %v82
    %v103 = vadd.s32 %v46, %v82
    %v104 = vadd.s32 %v47, %v82
    %v105 = vadd.s32 %v48, %v82
    %v106 = vadd.s32 %v49, %v82
    %v107 = vadd.s32 %v50, %v82
    %v108 = vadd.s32 %v51, %v82
    %v109 = vadd.s32 %v52, %v82
    %v110 = vadd.s32 %v53, %v82
    %v111 = vadd.s32 %v54, %v82
    %v112 = vadd.s32 %v55, %v82
    %v113 = vadd.s32 %v56, %v82
    %v114 = vadd.s32 %v57, %v82
    %v115 = vadd.s32 %v58, %v82
    %v116 = vadd.s32 %v59, %v82
    %v117 = vadd.s32 %v60, %v82
    %v118 = vadd.s32 %v61, %v82
    %v119 = vadd.s32 %v62, %v82
    %v120 = vadd.s32 %v63, %v82
    %v121 = vadd.s32 %v64, %v82
    %v122 = vadd.s32 %v65, %v82
    %v123 = vadd.s32 %v66, %v82
    %v124 = vadd.s32 %v67, %v82
    %v125 = vadd.s32 %v68, %v82
    %v126 = vadd.s32 %v69, %v82
    %v127 = vadd.s32 %v70, %v82
    %v128 = vadd.s32 %v71, %v82
    %v129 = vadd.s32 %v72, %v82
    %v130 = vadd.s32 %v73, %v82
    %v131 = vmul.u32 %v83, 768
    %v132 = vmul.u32 %v84, 768
    %v133 = vmul.u32 %v85, 768
    %v134 = vmul.u32 %v86, 768
    %v135 = vmul.u32 %v87, 768
    %v136 = vmul.u32 %v88, 768
    %v137 = vmul.u32 %v89, 768
    %v138 = vmul.u32 %v90, 768
    %v139 = vmul.u32 %v91, 768
    %v140 = vmul.u32 %v92, 768
    %v141 = vmul.u32 %v93, 768
    %v142 = vmul.u32 %v94, 768
    %v143 = vmul.u32 %v95, 768
    %v144 = vmul.u32 %v96, 768
    %v145 = vmul.u32 %v97, 768
    %v146 = vmul.u32 %v98, 768
    %v147 = vmul.u32 %v99, 768
    %v148 = vmul.u32 %v100, 768
    %v149 = vmul.u32 %v101, 768
    %v150 = vmul.u32 %v102, 768
    %v151 = vmul.u32 %v103, 768
    %v152 = vmul.u32 %v104, 768
    %v153 = vmul.u32 %v105, 768
    %v154 = vmul.u32 %v106, 768
    %v155 = vmul.u32 %v107, 768
    %v156 = vmul.u32 %v108, 768
    %v157 = vmul.u32 %v109, 768
    %v158 = vmul.u32 %v110, 768
    %v159 = vmul.u32 %v111, 768
    %v160 = vmul.u32 %v112, 768
    %v161 = vmul.u32 %v113, 768
    %v162 = vmul.u32 %v114, 768
    %v163 = vmul.u32 %v115, 768
    %v164 = vmul.u32 %v116, 768
    %v165 = vmul.u32 %v117, 768
    %v166 = vmul.u32 %v118, 768
    %v167 = vmul.u32 %v119, 768
    %v168 = vmul.u32 %v120, 768
    %v169 = vmul.u32 %v121, 768
    %v170 = vmul.u32 %v122, 768
    %v171 = vmul.u32 %v123, 768
    %v172 = vmul.u32 %v124, 768
    %v173 = vmul.u32 %v125, 768
    %v174 = vmul.u32 %v126, 768
    %v175 = vmul.u32 %v127, 768
    %v176 = vmul.u32 %v128, 768
    %v177 = vmul.u32 %v129, 768
    %v178 = vmul.u32 %v130, 768
    %v179 = vadd.s32 %v131, %v75
    %v180 = vadd.s32 %v131, %v76
    %v181 = vadd.s32 %v131, %v77
    %v182 = vadd.s32 %v131, %v78
    %v183 = vadd.s32 %v131, %v79
    %v184 = vadd.s32 %v131, %v80
    %v185 = vadd.s32 %v132, %v75
    %v186 = vadd.s32 %v132, %v76
    %v187 = vadd.s32 %v132, %v77
    %v188 = vadd.s32 %v132, %v78
    %v189 = vadd.s32 %v132, %v79
    %v190 = vadd.s32 %v132, %v80
    %v191 = vadd.s32 %v133, %v75
    %v192 = vadd.s32 %v133, %v76
    %v193 = vadd.s32 %v133, %v77
    %v194 = vadd.s32 %v133, %v78
    %v195 = vadd.s32 %v133, %v79
    %v196 = vadd.s32 %v133, %v80
    %v197 = vadd.s32 %v134, %v75
    %v198 = vadd.s32 %v134, %v76
    %v199 = vadd.s32 %v134, %v77
    %v200 = vadd.s32 %v134, %v78
    %v201 = vadd.s32 %v134, %v79
    %v202 = vadd.s32 %v134, %v80
    %v203 = vadd.s32 %v135, %v75
    %v204 = vadd.s32 %v135, %v76
    %v205 = vadd.s32 %v135, %v77
    %v206 = vadd.s32 %v135, %v78
    %v207 = vadd.s32 %v135, %v79
    %v208 = vadd.s32 %v135, %v80
    %v209 = vadd.s32 %v136, %v75
    %v210 = vadd.s32 %v136, %v76
    %v211 = vadd.s32 %v136, %v77
    %v212 = vadd.s32 %v136, %v78
    %v213 = vadd.s32 %v136, %v79
    %v214 = vadd.s32 %v136, %v80
    %v215 = vadd.s32 %v137, %v75
    %v216 = vadd.s32 %v137, %v76
    %v217 = vadd.s32 %v137, %v77
    %v218 = vadd.s32 %v137, %v78
    %v219 = vadd.s32 %v137, %v79
    %v220 = vadd.s32 %v137, %v80
    %v221 = vadd.s32 %v138, %v75
    %v222 = vadd.s32 %v138, %v76
    %v223 = vadd.s32 %v138, %v77
    %v224 = vadd.s32 %v138, %v78
    %v225 = vadd.s32 %v138, %v79
    %v226 = vadd.s32 %v138, %v80
    %v227 = vadd.s32 %v139, %v75
    %v228 = vadd.s32 %v139, %v76
    %v229 = vadd.s32 %v139, %v77
    %v230 = vadd.s32 %v139, %v78
    %v231 = vadd.s32 %v139, %v79
    %v232 = vadd.s32 %v139, %v80
    %v233 = vadd.s32 %v140, %v75
    %v234 = vadd.s32 %v140, %v76
    %v235 = vadd.s32 %v140, %v77
    %v236 = vadd.s32 %v140, %v78
    %v237 = vadd.s32 %v140, %v79
    %v238 = vadd.s32 %v140, %v80
    %v239 = vadd.s32 %v141, %v75
    %v240 = vadd.s32 %v141, %v76
    %v241 = vadd.s32 %v141, %v77
    %v242 = vadd.s32 %v141, %v78
    %v243 = vadd.s32 %v141, %v79
    %v244 = vadd.s32 %v141, %v80
    %v245 = vadd.s32 %v142, %v75
    %v246 = vadd.s32 %v142, %v76
    %v247 = vadd.s32 %v142, %v77
    %v248 = vadd.s32 %v142, %v78
    %v249 = vadd.s32 %v142, %v79
    %v250 = vadd.s32 %v142, %v80
    %v251 = vadd.s32 %v143, %v75
    %v252 = vadd.s32 %v143, %v76
    %v253 = vadd.s32 %v143, %v77
    %v254 = vadd.s32 %v143, %v78
    %v255 = vadd.s32 %v143, %v79
    %v256 = vadd.s32 %v143, %v80
    %v257 = vadd.s32 %v144, %v75
    %v258 = vadd.s32 %v144, %v76
    %v259 = vadd.s32 %v144, %v77
    %v260 = vadd.s32 %v144, %v78
    %v261 = vadd.s32 %v144, %v79
    %v262 = vadd.s32 %v144, %v80
    %v263 = vadd.s32 %v145, %v75
    %v264 = vadd.s32 %v145, %v76
    %v265 = vadd.s32 %v145, %v77
    %v266 = vadd.s32 %v145, %v78
    %v267 = vadd.s32 %v145, %v79
    %v268 = vadd.s32 %v145, %v80
    %v269 = vadd.s32 %v146, %v75
    %v270 = vadd.s32 %v146, %v76
    %v271 = vadd.s32 %v146, %v77
    %v272 = vadd.s32 %v146, %v78
    %v273 = vadd.s32 %v146, %v79
    %v274 = vadd.s32 %v146, %v80
    %v275 = vadd.s32 %v147, %v75
    %v276 = vadd.s32 %v147, %v76
    %v277 = vadd.s32 %v147, %v77
    %v278 = vadd.s32 %v147, %v78
    %v279 = vadd.s32 %v147, %v79
    %v280 = vadd.s32 %v147, %v80
    %v281 = vadd.s32 %v148, %v75
    %v282 = vadd.s32 %v148, %v76
    %v283 = vadd.s32 %v148, %v77
    %v284 = vadd.s32 %v148, %v78
    %v285 = vadd.s32 %v148, %v79
    %v286 = vadd.s32 %v148, %v80
    %v287 = vadd.s32 %v149, %v75
    %v288 = vadd.s32 %v149, %v76
    %v289 = vadd.s32 %v149, %v77
    %v290 = vadd.s32 %v149, %v78
    %v291 = vadd.s32 %v149, %v79
    %v292 = vadd.s32 %v149, %v80
    %v293 = vadd.s32 %v150, %v75
    %v294 = vadd.s32 %v150, %v76
    %v295 = vadd.s32 %v150, %v77
    %v296 = vadd.s32 %v150, %v78
    %v297 = vadd.s32 %v150, %v79
    %v298 = vadd.s32 %v150, %v80
    %v299 = vadd.s32 %v151, %v75
    %v300 = vadd.s32 %v151, %v76
    %v301 = vadd.s32 %v151, %v77
    %v302 = vadd.s32 %v151, %v78
    %v303 = vadd.s32 %v151, %v79
    %v304 = vadd.s32 %v151, %v80
    %v305 = vadd.s32 %v152, %v75
    %v306 = vadd.s32 %v152, %v76
    %v307 = vadd.s32 %v152, %v77
    %v308 = vadd.s32 %v152, %v78
    %v309 = vadd.s32 %v152, %v79
    %v310 = vadd.s32 %v152, %v80
    %v311 = vadd.s32 %v153, %v75
    %v312 = vadd.s32 %v153, %v76
    %v313 = vadd.s32 %v153, %v77
    %v314 = vadd.s32 %v153, %v78
    %v315 = vadd.s32 %v153, %v79
    %v316 = vadd.s32 %v153, %v80
    %v317 = vadd.s32 %v154, %v75
    %v318 = vadd.s32 %v154, %v76
    %v319 = vadd.s32 %v154, %v77
    %v320 = vadd.s32 %v154, %v78
    %v321 = vadd.s32 %v154, %v79
    %v322 = vadd.s32 %v154, %v80
    %v323 = vadd.s32 %v155, %v75
    %v324 = vadd.s32 %v155, %v76
    %v325 = vadd.s32 %v155, %v77
    %v326 = vadd.s32 %v155, %v78
    %v327 = vadd.s32 %v155, %v79
    %v328 = vadd.s32 %v155, %v80
    %v329 = vadd.s32 %v156, %v75
    %v330 = vadd.s32 %v156, %v76
    %v331 = vadd.s32 %v156, %v77
    %v332 = vadd.s32 %v156, %v78
    %v333 = vadd.s32 %v156, %v79
    %v334 = vadd.s32 %v156, %v80
    %v335 = vadd.s32 %v157, %v75
    %v336 = vadd.s32 %v157, %v76
    %v337 = vadd.s32 %v157, %v77
    %v338 = vadd.s32 %v157, %v78
    %v339 = vadd.s32 %v157, %v79
    %v340 = vadd.s32 %v157, %v80
    %v341 = vadd.s32 %v158, %v75
    %v342 = vadd.s32 %v158, %v76
    %v343 = vadd.s32 %v158, %v77
    %v344 = vadd.s32 %v158, %v78
    %v345 = vadd.s32 %v158, %v79
    %v346 = vadd.s32 %v158, %v80
    %v347 = vadd.s32 %v159, %v75
    %v348 = vadd.s32 %v159, %v76
    %v349 = vadd.s32 %v159, %v77
    %v350 = vadd.s32 %v159, %v78
    %v351 = vadd.s32 %v159, %v79
    %v352 = vadd.s32 %v159, %v80
    %v353 = vadd.s32 %v160, %v75
    %v354 = vadd.s32 %v160, %v76
    %v355 = vadd.s32 %v160, %v77
    %v356 = vadd.s32 %v160, %v78
    %v357 = vadd.s32 %v160, %v79
    %v358 = vadd.s32 %v160, %v80
    %v359 = vadd.s32 %v161, %v75
    %v360 = vadd.s32 %v161, %v76
    %v361 = vadd.s32 %v161, %v77
    %v362 = vadd.s32 %v161, %v78
    %v363 = vadd.s32 %v161, %v79
    %v364 = vadd.s32 %v161, %v80
    %v365 = vadd.s32 %v162, %v75
    %v366 = vadd.s32 %v162, %v76
    %v367 = vadd.s32 %v162, %v77
    %v368 = vadd.s32 %v162, %v78
    %v369 = vadd.s32 %v162, %v79
    %v370 = vadd.s32 %v162, %v80
    %v371 = vadd.s32 %v163, %v75
    %v372 = vadd.s32 %v163, %v76
    %v373 = vadd.s32 %v163, %v77
    %v374 = vadd.s32 %v163, %v78
    %v375 = vadd.s32 %v163, %v79
    %v376 = vadd.s32 %v163, %v80
    %v377 = vadd.s32 %v164, %v75
    %v378 = vadd.s32 %v164, %v76
    %v379 = vadd.s32 %v164, %v77
    %v380 = vadd.s32 %v164, %v78
    %v381 = vadd.s32 %v164, %v79
    %v382 = vadd.s32 %v164, %v80
    %v383 = vadd.s32 %v165, %v75
    %v384 = vadd.s32 %v165, %v76
    %v385 = vadd.s32 %v165, %v77
    %v386 = vadd.s32 %v165, %v78
    %v387 = vadd.s32 %v165, %v79
    %v388 = vadd.s32 %v165, %v80
    %v389 = vadd.s32 %v166, %v75
    %v390 = vadd.s32 %v166, %v76
    %v391 = vadd.s32 %v166, %v77
    %v392 = vadd.s32 %v166, %v78
    %v393 = vadd.s32 %v166, %v79
    %v394 = vadd.s32 %v166, %v80
    %v395 = vadd.s32 %v167, %v75
    %v396 = vadd.s32 %v167, %v76
    %v397 = vadd.s32 %v167, %v77
    %v398 = vadd.s32 %v167, %v78
    %v399 = vadd.s32 %v167, %v79
    %v400 = vadd.s32 %v167, %v80
    %v401 = vadd.s32 %v168, %v75
    %v402 = vadd.s32 %v168, %v76
    %v403 = vadd.s32 %v168, %v77
    %v404 = vadd.s32 %v168, %v78
    %v405 = vadd.s32 %v168, %v79
    %v406 = vadd.s32 %v168, %v80
    %v407 = vadd.s32 %v169, %v75
    %v408 = vadd.s32 %v169, %v76
    %v409 = vadd.s32 %v169, %v77
    %v410 = vadd.s32 %v169, %v78
    %v411 = vadd.s32 %v169, %v79
    %v412 = vadd.s32 %v169, %v80
    %v413 = vadd.s32 %v170, %v75
    %v414 = vadd.s32 %v170, %v76
    %v415 = vadd.s32 %v170, %v77
    %v416 = vadd.s32 %v170, %v78
    %v417 = vadd.s32 %v170, %v79
    %v418 = vadd.s32 %v170, %v80
    %v419 = vadd.s32 %v171, %v75
    %v420 = vadd.s32 %v171, %v76
    %v421 = vadd.s32 %v171, %v77
    %v422 = vadd.s32 %v171, %v78
    %v423 = vadd.s32 %v171, %v79
    %v424 = vadd.s32 %v171, %v80
    %v425 = vadd.s32 %v172, %v75
    %v426 = vadd.s32 %v172, %v76
    %v427 = vadd.s32 %v172, %v77
    %v428 = vadd.s32 %v172, %v78
    %v429 = vadd.s32 %v172, %v79
    %v430 = vadd.s32 %v172, %v80
    %v431 = vadd.s32 %v173, %v75
    %v432 = vadd.s32 %v173, %v76
    %v433 = vadd.s32 %v173, %v77
    %v434 = vadd.s32 %v173, %v78
    %v435 = vadd.s32 %v173, %v79
    %v436 = vadd.s32 %v173, %v80
    %v437 = vadd.s32 %v174, %v75
    %v438 = vadd.s32 %v174, %v76
    %v439 = vadd.s32 %v174, %v77
    %v440 = vadd.s32 %v174, %v78
    %v441 = vadd.s32 %v174, %v79
    %v442 = vadd.s32 %v174, %v80
    %v443 = vadd.s32 %v175, %v75
    %v444 = vadd.s32 %v175, %v76
    %v445 = vadd.s32 %v175, %v77
    %v446 = vadd.s32 %v175, %v78
    %v447 = vadd.s32 %v175, %v79
    %v448 = vadd.s32 %v175, %v80
    %v449 = vadd.s32 %v176, %v75
    %v450 = vadd.s32 %v176, %v76
    %v451 = vadd.s32 %v176, %v77
    %v452 = vadd.s32 %v176, %v78
    %v453 = vadd.s32 %v176, %v79
    %v454 = vadd.s32 %v176, %v80
    %v455 = vadd.s32 %v177, %v75
    %v456 = vadd.s32 %v177, %v76
    %v457 = vadd.s32 %v177, %v77
    %v458 = vadd.s32 %v177, %v78
    %v459 = vadd.s32 %v177, %v79
    %v460 = vadd.s32 %v177, %v80
    %v461 = vadd.s32 %v178, %v75
    %v462 = vadd.s32 %v178, %v76
    %v463 = vadd.s32 %v178, %v77
    %v464 = vadd.s32 %v178, %v78
    %v465 = vadd.s32 %v178, %v79
    %v466 = vadd.s32 %v178, %v80
    %s467 = sld [smem:[#allocation3]]
    %s468 = smul.u32 %s467, 2654435769
    %v469 = vstv %s468
    %v470 = vxor.u32 %v179, %v469
    %v471 = vxor.u32 %v180, %v469
    %v472 = vxor.u32 %v181, %v469
    %v473 = vxor.u32 %v182, %v469
    %v474 = vxor.u32 %v183, %v469
    %v475 = vxor.u32 %v184, %v469
    %v476 = vxor.u32 %v185, %v469
    %v477 = vxor.u32 %v186, %v469
    %v478 = vxor.u32 %v187, %v469
    %v479 = vxor.u32 %v188, %v469
    %v480 = vxor.u32 %v189, %v469
    %v481 = vxor.u32 %v190, %v469
    %v482 = vxor.u32 %v191, %v469
    %v483 = vxor.u32 %v192, %v469
    %v484 = vxor.u32 %v193, %v469
    %v485 = vxor.u32 %v194, %v469
    %v486 = vxor.u32 %v195, %v469
    %v487 = vxor.u32 %v196, %v469
    %v488 = vxor.u32 %v197, %v469
    %v489 = vxor.u32 %v198, %v469
    %v490 = vxor.u32 %v199, %v469
    %v491 = vxor.u32 %v200, %v469
    %v492 = vxor.u32 %v201, %v469
    %v493 = vxor.u32 %v202, %v469
    %v494 = vxor.u32 %v203, %v469
    %v495 = vxor.u32 %v204, %v469
    %v496 = vxor.u32 %v205, %v469
    %v497 = vxor.u32 %v206, %v469
    %v498 = vxor.u32 %v207, %v469
    %v499 = vxor.u32 %v208, %v469
    %v500 = vxor.u32 %v209, %v469
    %v501 = vxor.u32 %v210, %v469
    %v502 = vxor.u32 %v211, %v469
    %v503 = vxor.u32 %v212, %v469
    %v504 = vxor.u32 %v213, %v469
    %v505 = vxor.u32 %v214, %v469
    %v506 = vxor.u32 %v215, %v469
    %v507 = vxor.u32 %v216, %v469
    %v508 = vxor.u32 %v217, %v469
    %v509 = vxor.u32 %v218, %v469
    %v510 = vxor.u32 %v219, %v469
    %v511 = vxor.u32 %v220, %v469
    %v512 = vxor.u32 %v221, %v469
    %v513 = vxor.u32 %v222, %v469
    %v514 = vxor.u32 %v223, %v469
    %v515 = vxor.u32 %v224, %v469
    %v516 = vxor.u32 %v225, %v469
    %v517 = vxor.u32 %v226, %v469
    %v518 = vxor.u32 %v227, %v469
    %v519 = vxor.u32 %v228, %v469
    %v520 = vxor.u32 %v229, %v469
    %v521 = vxor.u32 %v230, %v469
    %v522 = vxor.u32 %v231, %v469
    %v523 = vxor.u32 %v232, %v469
    %v524 = vxor.u32 %v233, %v469
    %v525 = vxor.u32 %v234, %v469
    %v526 = vxor.u32 %v235, %v469
    %v527 = vxor.u32 %v236, %v469
    %v528 = vxor.u32 %v237, %v469
    %v529 = vxor.u32 %v238, %v469
    %v530 = vxor.u32 %v239, %v469
    %v531 = vxor.u32 %v240, %v469
    %v532 = vxor.u32 %v241, %v469
    %v533 = vxor.u32 %v242, %v469
    %v534 = vxor.u32 %v243, %v469
    %v535 = vxor.u32 %v244, %v469
    %v536 = vxor.u32 %v245, %v469
    %v537 = vxor.u32 %v246, %v469
    %v538 = vxor.u32 %v247, %v469
    %v539 = vxor.u32 %v248, %v469
    %v540 = vxor.u32 %v249, %v469
    %v541 = vxor.u32 %v250, %v469
    %v542 = vxor.u32 %v251, %v469
    %v543 = vxor.u32 %v252, %v469
    %v544 = vxor.u32 %v253, %v469
    %v545 = vxor.u32 %v254, %v469
    %v546 = vxor.u32 %v255, %v469
    %v547 = vxor.u32 %v256, %v469
    %v548 = vxor.u32 %v257, %v469
    %v549 = vxor.u32 %v258, %v469
    %v550 = vxor.u32 %v259, %v469
    %v551 = vxor.u32 %v260, %v469
    %v552 = vxor.u32 %v261, %v469
    %v553 = vxor.u32 %v262, %v469
    %v554 = vxor.u32 %v263, %v469
    %v555 = vxor.u32 %v264, %v469
    %v556 = vxor.u32 %v265, %v469
    %v557 = vxor.u32 %v266, %v469
    %v558 = vxor.u32 %v267, %v469
    %v559 = vxor.u32 %v268, %v469
    %v560 = vxor.u32 %v269, %v469
    %v561 = vxor.u32 %v270, %v469
    %v562 = vxor.u32 %v271, %v469
    %v563 = vxor.u32 %v272, %v469
    %v564 = vxor.u32 %v273, %v469
    %v565 = vxor.u32 %v274, %v469
    %v566 = vxor.u32 %v275, %v469
    %v567 = vxor.u32 %v276, %v469
    %v568 = vxor.u32 %v277, %v469
    %v569 = vxor.u32 %v278, %v469
    %v570 = vxor.u32 %v279, %v469
    %v571 = vxor.u32 %v280, %v469
    %v572 = vxor.u32 %v281, %v469
    %v573 = vxor.u32 %v282, %v469
    %v574 = vxor.u32 %v283, %v469
    %v575 = vxor.u32 %v284, %v469
    %v576 = vxor.u32 %v285, %v469
    %v577 = vxor.u32 %v286, %v469
    %v578 = vxor.u32 %v287, %v469
    %v579 = vxor.u32 %v288, %v469
    %v580 = vxor.u32 %v289, %v469
    %v581 = vxor.u32 %v290, %v469
    %v582 = vxor.u32 %v291, %v469
    %v583 = vxor.u32 %v292, %v469
    %v584 = vxor.u32 %v293, %v469
    %v585 = vxor.u32 %v294, %v469
    %v586 = vxor.u32 %v295, %v469
    %v587 = vxor.u32 %v296, %v469
    %v588 = vxor.u32 %v297, %v469
    %v589 = vxor.u32 %v298, %v469
    %v590 = vxor.u32 %v299, %v469
    %v591 = vxor.u32 %v300, %v469
    %v592 = vxor.u32 %v301, %v469
    %v593 = vxor.u32 %v302, %v469
    %v594 = vxor.u32 %v303, %v469
    %v595 = vxor.u32 %v304, %v469
    %v596 = vxor.u32 %v305, %v469
    %v597 = vxor.u32 %v306, %v469
    %v598 = vxor.u32 %v307, %v469
    %v599 = vxor.u32 %v308, %v469
    %v600 = vxor.u32 %v309, %v469
    %v601 = vxor.u32 %v310, %v469
    %v602 = vxor.u32 %v311, %v469
    %v603 = vxor.u32 %v312, %v469
    %v604 = vxor.u32 %v313, %v469
    %v605 = vxor.u32 %v314, %v469
    %v606 = vxor.u32 %v315, %v469
    %v607 = vxor.u32 %v316, %v469
    %v608 = vxor.u32 %v317, %v469
    %v609 = vxor.u32 %v318, %v469
    %v610 = vxor.u32 %v319, %v469
    %v611 = vxor.u32 %v320, %v469
    %v612 = vxor.u32 %v321, %v469
    %v613 = vxor.u32 %v322, %v469
    %v614 = vxor.u32 %v323, %v469
    %v615 = vxor.u32 %v324, %v469
    %v616 = vxor.u32 %v325, %v469
    %v617 = vxor.u32 %v326, %v469
    %v618 = vxor.u32 %v327, %v469
    %v619 = vxor.u32 %v328, %v469
    %v620 = vxor.u32 %v329, %v469
    %v621 = vxor.u32 %v330, %v469
    %v622 = vxor.u32 %v331, %v469
    %v623 = vxor.u32 %v332, %v469
    %v624 = vxor.u32 %v333, %v469
    %v625 = vxor.u32 %v334, %v469
    %v626 = vxor.u32 %v335, %v469
    %v627 = vxor.u32 %v336, %v469
    %v628 = vxor.u32 %v337, %v469
    %v629 = vxor.u32 %v338, %v469
    %v630 = vxor.u32 %v339, %v469
    %v631 = vxor.u32 %v340, %v469
    %v632 = vxor.u32 %v341, %v469
    %v633 = vxor.u32 %v342, %v469
    %v634 = vxor.u32 %v343, %v469
    %v635 = vxor.u32 %v344, %v469
    %v636 = vxor.u32 %v345, %v469
    %v637 = vxor.u32 %v346, %v469
    %v638 = vxor.u32 %v347, %v469
    %v639 = vxor.u32 %v348, %v469
    %v640 = vxor.u32 %v349, %v469
    %v641 = vxor.u32 %v350, %v469
    %v642 = vxor.u32 %v351, %v469
    %v643 = vxor.u32 %v352, %v469
    %v644 = vxor.u32 %v353, %v469
    %v645 = vxor.u32 %v354, %v469
    %v646 = vxor.u32 %v355, %v469
    %v647 = vxor.u32 %v356, %v469
    %v648 = vxor.u32 %v357, %v469
    %v649 = vxor.u32 %v358, %v469
    %v650 = vxor.u32 %v359, %v469
    %v651 = vxor.u32 %v360, %v469
    %v652 = vxor.u32 %v361, %v469
    %v653 = vxor.u32 %v362, %v469
    %v654 = vxor.u32 %v363, %v469
    %v655 = vxor.u32 %v364, %v469
    %v656 = vxor.u32 %v365, %v469
    %v657 = vxor.u32 %v366, %v469
    %v658 = vxor.u32 %v367, %v469
    %v659 = vxor.u32 %v368, %v469
    %v660 = vxor.u32 %v369, %v469
    %v661 = vxor.u32 %v370, %v469
    %v662 = vxor.u32 %v371, %v469
    %v663 = vxor.u32 %v372, %v469
    %v664 = vxor.u32 %v373, %v469
    %v665 = vxor.u32 %v374, %v469
    %v666 = vxor.u32 %v375, %v469
    %v667 = vxor.u32 %v376, %v469
    %v668 = vxor.u32 %v377, %v469
    %v669 = vxor.u32 %v378, %v469
    %v670 = vxor.u32 %v379, %v469
    %v671 = vxor.u32 %v380, %v469
    %v672 = vxor.u32 %v381, %v469
    %v673 = vxor.u32 %v382, %v469
    %v674 = vxor.u32 %v383, %v469
    %v675 = vxor.u32 %v384, %v469
    %v676 = vxor.u32 %v385, %v469
    %v677 = vxor.u32 %v386, %v469
    %v678 = vxor.u32 %v387, %v469
    %v679 = vxor.u32 %v388, %v469
    %v680 = vxor.u32 %v389, %v469
    %v681 = vxor.u32 %v390, %v469
    %v682 = vxor.u32 %v391, %v469
    %v683 = vxor.u32 %v392, %v469
    %v684 = vxor.u32 %v393, %v469
    %v685 = vxor.u32 %v394, %v469
    %v686 = vxor.u32 %v395, %v469
    %v687 = vxor.u32 %v396, %v469
    %v688 = vxor.u32 %v397, %v469
    %v689 = vxor.u32 %v398, %v469
    %v690 = vxor.u32 %v399, %v469
    %v691 = vxor.u32 %v400, %v469
    %v692 = vxor.u32 %v401, %v469
    %v693 = vxor.u32 %v402, %v469
    %v694 = vxor.u32 %v403, %v469
    %v695 = vxor.u32 %v404, %v469
    %v696 = vxor.u32 %v405, %v469
    %v697 = vxor.u32 %v406, %v469
    %v698 = vxor.u32 %v407, %v469
    %v699 = vxor.u32 %v408, %v469
    %v700 = vxor.u32 %v409, %v469
    %v701 = vxor.u32 %v410, %v469
    %v702 = vxor.u32 %v411, %v469
    %v703 = vxor.u32 %v412, %v469
    %v704 = vxor.u32 %v413, %v469
    %v705 = vxor.u32 %v414, %v469
    %v706 = vxor.u32 %v415, %v469
    %v707 = vxor.u32 %v416, %v469
    %v708 = vxor.u32 %v417, %v469
    %v709 = vxor.u32 %v418, %v469
    %v710 = vxor.u32 %v419, %v469
    %v711 = vxor.u32 %v420, %v469
    %v712 = vxor.u32 %v421, %v469
    %v713 = vxor.u32 %v422, %v469
    %v714 = vxor.u32 %v423, %v469
    %v715 = vxor.u32 %v424, %v469
    %v716 = vxor.u32 %v425, %v469
    %v717 = vxor.u32 %v426, %v469
    %v718 = vxor.u32 %v427, %v469
    %v719 = vxor.u32 %v428, %v469
    %v720 = vxor.u32 %v429, %v469
    %v721 = vxor.u32 %v430, %v469
    %v722 = vxor.u32 %v431, %v469
    %v723 = vxor.u32 %v432, %v469
    %v724 = vxor.u32 %v433, %v469
    %v725 = vxor.u32 %v434, %v469
    %v726 = vxor.u32 %v435, %v469
    %v727 = vxor.u32 %v436, %v469
    %v728 = vxor.u32 %v437, %v469
    %v729 = vxor.u32 %v438, %v469
    %v730 = vxor.u32 %v439, %v469
    %v731 = vxor.u32 %v440, %v469
    %v732 = vxor.u32 %v441, %v469
    %v733 = vxor.u32 %v442, %v469
    %v734 = vxor.u32 %v443, %v469
    %v735 = vxor.u32 %v444, %v469
    %v736 = vxor.u32 %v445, %v469
    %v737 = vxor.u32 %v446, %v469
    %v738 = vxor.u32 %v447, %v469
    %v739 = vxor.u32 %v448, %v469
    %v740 = vxor.u32 %v449, %v469
    %v741 = vxor.u32 %v450, %v469
    %v742 = vxor.u32 %v451, %v469
    %v743 = vxor.u32 %v452, %v469
    %v744 = vxor.u32 %v453, %v469
    %v745 = vxor.u32 %v454, %v469
    %v746 = vxor.u32 %v455, %v469
    %v747 = vxor.u32 %v456, %v469
    %v748 = vxor.u32 %v457, %v469
    %v749 = vxor.u32 %v458, %v469
    %v750 = vxor.u32 %v459, %v469
    %v751 = vxor.u32 %v460, %v469
    %v752 = vxor.u32 %v461, %v469
    %v753 = vxor.u32 %v462, %v469
    %v754 = vxor.u32 %v463, %v469
    %v755 = vxor.u32 %v464, %v469
    %v756 = vxor.u32 %v465, %v469
    %v757 = vxor.u32 %v466, %v469
    %v758 = vshrl.u32 %v470, 16
    %v759 = vshrl.u32 %v471, 16
    %v760 = vshrl.u32 %v472, 16
    %v761 = vshrl.u32 %v473, 16
    %v762 = vshrl.u32 %v474, 16
    %v763 = vshrl.u32 %v475, 16
    %v764 = vshrl.u32 %v476, 16
    %v765 = vshrl.u32 %v477, 16
    %v766 = vshrl.u32 %v478, 16
    %v767 = vshrl.u32 %v479, 16
    %v768 = vshrl.u32 %v480, 16
    %v769 = vshrl.u32 %v481, 16
    %v770 = vshrl.u32 %v482, 16
    %v771 = vshrl.u32 %v483, 16
    %v772 = vshrl.u32 %v484, 16
    %v773 = vshrl.u32 %v485, 16
    %v774 = vshrl.u32 %v486, 16
    %v775 = vshrl.u32 %v487, 16
    %v776 = vshrl.u32 %v488, 16
    %v777 = vshrl.u32 %v489, 16
    %v778 = vshrl.u32 %v490, 16
    %v779 = vshrl.u32 %v491, 16
    %v780 = vshrl.u32 %v492, 16
    %v781 = vshrl.u32 %v493, 16
    %v782 = vshrl.u32 %v494, 16
    %v783 = vshrl.u32 %v495, 16
    %v784 = vshrl.u32 %v496, 16
    %v785 = vshrl.u32 %v497, 16
    %v786 = vshrl.u32 %v498, 16
    %v787 = vshrl.u32 %v499, 16
    %v788 = vshrl.u32 %v500, 16
    %v789 = vshrl.u32 %v501, 16
    %v790 = vshrl.u32 %v502, 16
    %v791 = vshrl.u32 %v503, 16
    %v792 = vshrl.u32 %v504, 16
    %v793 = vshrl.u32 %v505, 16
    %v794 = vshrl.u32 %v506, 16
    %v795 = vshrl.u32 %v507, 16
    %v796 = vshrl.u32 %v508, 16
    %v797 = vshrl.u32 %v509, 16
    %v798 = vshrl.u32 %v510, 16
    %v799 = vshrl.u32 %v511, 16
    %v800 = vshrl.u32 %v512, 16
    %v801 = vshrl.u32 %v513, 16
    %v802 = vshrl.u32 %v514, 16
    %v803 = vshrl.u32 %v515, 16
    %v804 = vshrl.u32 %v516, 16
    %v805 = vshrl.u32 %v517, 16
    %v806 = vshrl.u32 %v518, 16
    %v807 = vshrl.u32 %v519, 16
    %v808 = vshrl.u32 %v520, 16
    %v809 = vshrl.u32 %v521, 16
    %v810 = vshrl.u32 %v522, 16
    %v811 = vshrl.u32 %v523, 16
    %v812 = vshrl.u32 %v524, 16
    %v813 = vshrl.u32 %v525, 16
    %v814 = vshrl.u32 %v526, 16
    %v815 = vshrl.u32 %v527, 16
    %v816 = vshrl.u32 %v528, 16
    %v817 = vshrl.u32 %v529, 16
    %v818 = vshrl.u32 %v530, 16
    %v819 = vshrl.u32 %v531, 16
    %v820 = vshrl.u32 %v532, 16
    %v821 = vshrl.u32 %v533, 16
    %v822 = vshrl.u32 %v534, 16
    %v823 = vshrl.u32 %v535, 16
    %v824 = vshrl.u32 %v536, 16
    %v825 = vshrl.u32 %v537, 16
    %v826 = vshrl.u32 %v538, 16
    %v827 = vshrl.u32 %v539, 16
    %v828 = vshrl.u32 %v540, 16
    %v829 = vshrl.u32 %v541, 16
    %v830 = vshrl.u32 %v542, 16
    %v831 = vshrl.u32 %v543, 16
    %v832 = vshrl.u32 %v544, 16
    %v833 = vshrl.u32 %v545, 16
    %v834 = vshrl.u32 %v546, 16
    %v835 = vshrl.u32 %v547, 16
    %v836 = vshrl.u32 %v548, 16
    %v837 = vshrl.u32 %v549, 16
    %v838 = vshrl.u32 %v550, 16
    %v839 = vshrl.u32 %v551, 16
    %v840 = vshrl.u32 %v552, 16
    %v841 = vshrl.u32 %v553, 16
    %v842 = vshrl.u32 %v554, 16
    %v843 = vshrl.u32 %v555, 16
    %v844 = vshrl.u32 %v556, 16
    %v845 = vshrl.u32 %v557, 16
    %v846 = vshrl.u32 %v558, 16
    %v847 = vshrl.u32 %v559, 16
    %v848 = vshrl.u32 %v560, 16
    %v849 = vshrl.u32 %v561, 16
    %v850 = vshrl.u32 %v562, 16
    %v851 = vshrl.u32 %v563, 16
    %v852 = vshrl.u32 %v564, 16
    %v853 = vshrl.u32 %v565, 16
    %v854 = vshrl.u32 %v566, 16
    %v855 = vshrl.u32 %v567, 16
    %v856 = vshrl.u32 %v568, 16
    %v857 = vshrl.u32 %v569, 16
    %v858 = vshrl.u32 %v570, 16
    %v859 = vshrl.u32 %v571, 16
    %v860 = vshrl.u32 %v572, 16
    %v861 = vshrl.u32 %v573, 16
    %v862 = vshrl.u32 %v574, 16
    %v863 = vshrl.u32 %v575, 16
    %v864 = vshrl.u32 %v576, 16
    %v865 = vshrl.u32 %v577, 16
    %v866 = vshrl.u32 %v578, 16
    %v867 = vshrl.u32 %v579, 16
    %v868 = vshrl.u32 %v580, 16
    %v869 = vshrl.u32 %v581, 16
    %v870 = vshrl.u32 %v582, 16
    %v871 = vshrl.u32 %v583, 16
    %v872 = vshrl.u32 %v584, 16
    %v873 = vshrl.u32 %v585, 16
    %v874 = vshrl.u32 %v586, 16
    %v875 = vshrl.u32 %v587, 16
    %v876 = vshrl.u32 %v588, 16
    %v877 = vshrl.u32 %v589, 16
    %v878 = vshrl.u32 %v590, 16
    %v879 = vshrl.u32 %v591, 16
    %v880 = vshrl.u32 %v592, 16
    %v881 = vshrl.u32 %v593, 16
    %v882 = vshrl.u32 %v594, 16
    %v883 = vshrl.u32 %v595, 16
    %v884 = vshrl.u32 %v596, 16
    %v885 = vshrl.u32 %v597, 16
    %v886 = vshrl.u32 %v598, 16
    %v887 = vshrl.u32 %v599, 16
    %v888 = vshrl.u32 %v600, 16
    %v889 = vshrl.u32 %v601, 16
    %v890 = vshrl.u32 %v602, 16
    %v891 = vshrl.u32 %v603, 16
    %v892 = vshrl.u32 %v604, 16
    %v893 = vshrl.u32 %v605, 16
    %v894 = vshrl.u32 %v606, 16
    %v895 = vshrl.u32 %v607, 16
    %v896 = vshrl.u32 %v608, 16
    %v897 = vshrl.u32 %v609, 16
    %v898 = vshrl.u32 %v610, 16
    %v899 = vshrl.u32 %v611, 16
    %v900 = vshrl.u32 %v612, 16
    %v901 = vshrl.u32 %v613, 16
    %v902 = vshrl.u32 %v614, 16
    %v903 = vshrl.u32 %v615, 16
    %v904 = vshrl.u32 %v616, 16
    %v905 = vshrl.u32 %v617, 16
    %v906 = vshrl.u32 %v618, 16
    %v907 = vshrl.u32 %v619, 16
    %v908 = vshrl.u32 %v620, 16
    %v909 = vshrl.u32 %v621, 16
    %v910 = vshrl.u32 %v622, 16
    %v911 = vshrl.u32 %v623, 16
    %v912 = vshrl.u32 %v624, 16
    %v913 = vshrl.u32 %v625, 16
    %v914 = vshrl.u32 %v626, 16
    %v915 = vshrl.u32 %v627, 16
    %v916 = vshrl.u32 %v628, 16
    %v917 = vshrl.u32 %v629, 16
    %v918 = vshrl.u32 %v630, 16
    %v919 = vshrl.u32 %v631, 16
    %v920 = vshrl.u32 %v632, 16
    %v921 = vshrl.u32 %v633, 16
    %v922 = vshrl.u32 %v634, 16
    %v923 = vshrl.u32 %v635, 16
    %v924 = vshrl.u32 %v636, 16
    %v925 = vshrl.u32 %v637, 16
    %v926 = vshrl.u32 %v638, 16
    %v927 = vshrl.u32 %v639, 16
    %v928 = vshrl.u32 %v640, 16
    %v929 = vshrl.u32 %v641, 16
    %v930 = vshrl.u32 %v642, 16
    %v931 = vshrl.u32 %v643, 16
    %v932 = vshrl.u32 %v644, 16
    %v933 = vshrl.u32 %v645, 16
    %v934 = vshrl.u32 %v646, 16
    %v935 = vshrl.u32 %v647, 16
    %v936 = vshrl.u32 %v648, 16
    %v937 = vshrl.u32 %v649, 16
    %v938 = vshrl.u32 %v650, 16
    %v939 = vshrl.u32 %v651, 16
    %v940 = vshrl.u32 %v652, 16
    %v941 = vshrl.u32 %v653, 16
    %v942 = vshrl.u32 %v654, 16
    %v943 = vshrl.u32 %v655, 16
    %v944 = vshrl.u32 %v656, 16
    %v945 = vshrl.u32 %v657, 16
    %v946 = vshrl.u32 %v658, 16
    %v947 = vshrl.u32 %v659, 16
    %v948 = vshrl.u32 %v660, 16
    %v949 = vshrl.u32 %v661, 16
    %v950 = vshrl.u32 %v662, 16
    %v951 = vshrl.u32 %v663, 16
    %v952 = vshrl.u32 %v664, 16
    %v953 = vshrl.u32 %v665, 16
    %v954 = vshrl.u32 %v666, 16
    %v955 = vshrl.u32 %v667, 16
    %v956 = vshrl.u32 %v668, 16
    %v957 = vshrl.u32 %v669, 16
    %v958 = vshrl.u32 %v670, 16
    %v959 = vshrl.u32 %v671, 16
    %v960 = vshrl.u32 %v672, 16
    %v961 = vshrl.u32 %v673, 16
    %v962 = vshrl.u32 %v674, 16
    %v963 = vshrl.u32 %v675, 16
    %v964 = vshrl.u32 %v676, 16
    %v965 = vshrl.u32 %v677, 16
    %v966 = vshrl.u32 %v678, 16
    %v967 = vshrl.u32 %v679, 16
    %v968 = vshrl.u32 %v680, 16
    %v969 = vshrl.u32 %v681, 16
    %v970 = vshrl.u32 %v682, 16
    %v971 = vshrl.u32 %v683, 16
    %v972 = vshrl.u32 %v684, 16
    %v973 = vshrl.u32 %v685, 16
    %v974 = vshrl.u32 %v686, 16
    %v975 = vshrl.u32 %v687, 16
    %v976 = vshrl.u32 %v688, 16
    %v977 = vshrl.u32 %v689, 16
    %v978 = vshrl.u32 %v690, 16
    %v979 = vshrl.u32 %v691, 16
    %v980 = vshrl.u32 %v692, 16
    %v981 = vshrl.u32 %v693, 16
    %v982 = vshrl.u32 %v694, 16
    %v983 = vshrl.u32 %v695, 16
    %v984 = vshrl.u32 %v696, 16
    %v985 = vshrl.u32 %v697, 16
    %v986 = vshrl.u32 %v698, 16
    %v987 = vshrl.u32 %v699, 16
    %v988 = vshrl.u32 %v700, 16
    %v989 = vshrl.u32 %v701, 16
    %v990 = vshrl.u32 %v702, 16
    %v991 = vshrl.u32 %v703, 16
    %v992 = vshrl.u32 %v704, 16
    %v993 = vshrl.u32 %v705, 16
    %v994 = vshrl.u32 %v706, 16
    %v995 = vshrl.u32 %v707, 16
    %v996 = vshrl.u32 %v708, 16
    %v997 = vshrl.u32 %v709, 16
    %v998 = vshrl.u32 %v710, 16
    %v999 = vshrl.u32 %v711, 16
    %v1000 = vshrl.u32 %v712, 16
    %v1001 = vshrl.u32 %v713, 16
    %v1002 = vshrl.u32 %v714, 16
    %v1003 = vshrl.u32 %v715, 16
    %v1004 = vshrl.u32 %v716, 16
    %v1005 = vshrl.u32 %v717, 16
    %v1006 = vshrl.u32 %v718, 16
    %v1007 = vshrl.u32 %v719, 16
    %v1008 = vshrl.u32 %v720, 16
    %v1009 = vshrl.u32 %v721, 16
    %v1010 = vshrl.u32 %v722, 16
    %v1011 = vshrl.u32 %v723, 16
    %v1012 = vshrl.u32 %v724, 16
    %v1013 = vshrl.u32 %v725, 16
    %v1014 = vshrl.u32 %v726, 16
    %v1015 = vshrl.u32 %v727, 16
    %v1016 = vshrl.u32 %v728, 16
    %v1017 = vshrl.u32 %v729, 16
    %v1018 = vshrl.u32 %v730, 16
    %v1019 = vshrl.u32 %v731, 16
    %v1020 = vshrl.u32 %v732, 16
    %v1021 = vshrl.u32 %v733, 16
    %v1022 = vshrl.u32 %v734, 16
    %v1023 = vshrl.u32 %v735, 16
    %v1024 = vshrl.u32 %v736, 16
    %v1025 = vshrl.u32 %v737, 16
    %v1026 = vshrl.u32 %v738, 16
    %v1027 = vshrl.u32 %v739, 16
    %v1028 = vshrl.u32 %v740, 16
    %v1029 = vshrl.u32 %v741, 16
    %v1030 = vshrl.u32 %v742, 16
    %v1031 = vshrl.u32 %v743, 16
    %v1032 = vshrl.u32 %v744, 16
    %v1033 = vshrl.u32 %v745, 16
    %v1034 = vshrl.u32 %v746, 16
    %v1035 = vshrl.u32 %v747, 16
    %v1036 = vshrl.u32 %v748, 16
    %v1037 = vshrl.u32 %v749, 16
    %v1038 = vshrl.u32 %v750, 16
    %v1039 = vshrl.u32 %v751, 16
    %v1040 = vshrl.u32 %v752, 16
    %v1041 = vshrl.u32 %v753, 16
    %v1042 = vshrl.u32 %v754, 16
    %v1043 = vshrl.u32 %v755, 16
    %v1044 = vshrl.u32 %v756, 16
    %v1045 = vshrl.u32 %v757, 16
    %v1046 = vxor.u32 %v470, %v758
    %v1047 = vxor.u32 %v471, %v759
    %v1048 = vxor.u32 %v472, %v760
    %v1049 = vxor.u32 %v473, %v761
    %v1050 = vxor.u32 %v474, %v762
    %v1051 = vxor.u32 %v475, %v763
    %v1052 = vxor.u32 %v476, %v764
    %v1053 = vxor.u32 %v477, %v765
    %v1054 = vxor.u32 %v478, %v766
    %v1055 = vxor.u32 %v479, %v767
    %v1056 = vxor.u32 %v480, %v768
    %v1057 = vxor.u32 %v481, %v769
    %v1058 = vxor.u32 %v482, %v770
    %v1059 = vxor.u32 %v483, %v771
    %v1060 = vxor.u32 %v484, %v772
    %v1061 = vxor.u32 %v485, %v773
    %v1062 = vxor.u32 %v486, %v774
    %v1063 = vxor.u32 %v487, %v775
    %v1064 = vxor.u32 %v488, %v776
    %v1065 = vxor.u32 %v489, %v777
    %v1066 = vxor.u32 %v490, %v778
    %v1067 = vxor.u32 %v491, %v779
    %v1068 = vxor.u32 %v492, %v780
    %v1069 = vxor.u32 %v493, %v781
    %v1070 = vxor.u32 %v494, %v782
    %v1071 = vxor.u32 %v495, %v783
    %v1072 = vxor.u32 %v496, %v784
    %v1073 = vxor.u32 %v497, %v785
    %v1074 = vxor.u32 %v498, %v786
    %v1075 = vxor.u32 %v499, %v787
    %v1076 = vxor.u32 %v500, %v788
    %v1077 = vxor.u32 %v501, %v789
    %v1078 = vxor.u32 %v502, %v790
    %v1079 = vxor.u32 %v503, %v791
    %v1080 = vxor.u32 %v504, %v792
    %v1081 = vxor.u32 %v505, %v793
    %v1082 = vxor.u32 %v506, %v794
    %v1083 = vxor.u32 %v507, %v795
    %v1084 = vxor.u32 %v508, %v796
    %v1085 = vxor.u32 %v509, %v797
    %v1086 = vxor.u32 %v510, %v798
    %v1087 = vxor.u32 %v511, %v799
    %v1088 = vxor.u32 %v512, %v800
    %v1089 = vxor.u32 %v513, %v801
    %v1090 = vxor.u32 %v514, %v802
    %v1091 = vxor.u32 %v515, %v803
    %v1092 = vxor.u32 %v516, %v804
    %v1093 = vxor.u32 %v517, %v805
    %v1094 = vxor.u32 %v518, %v806
    %v1095 = vxor.u32 %v519, %v807
    %v1096 = vxor.u32 %v520, %v808
    %v1097 = vxor.u32 %v521, %v809
    %v1098 = vxor.u32 %v522, %v810
    %v1099 = vxor.u32 %v523, %v811
    %v1100 = vxor.u32 %v524, %v812
    %v1101 = vxor.u32 %v525, %v813
    %v1102 = vxor.u32 %v526, %v814
    %v1103 = vxor.u32 %v527, %v815
    %v1104 = vxor.u32 %v528, %v816
    %v1105 = vxor.u32 %v529, %v817
    %v1106 = vxor.u32 %v530, %v818
    %v1107 = vxor.u32 %v531, %v819
    %v1108 = vxor.u32 %v532, %v820
    %v1109 = vxor.u32 %v533, %v821
    %v1110 = vxor.u32 %v534, %v822
    %v1111 = vxor.u32 %v535, %v823
    %v1112 = vxor.u32 %v536, %v824
    %v1113 = vxor.u32 %v537, %v825
    %v1114 = vxor.u32 %v538, %v826
    %v1115 = vxor.u32 %v539, %v827
    %v1116 = vxor.u32 %v540, %v828
    %v1117 = vxor.u32 %v541, %v829
    %v1118 = vxor.u32 %v542, %v830
    %v1119 = vxor.u32 %v543, %v831
    %v1120 = vxor.u32 %v544, %v832
    %v1121 = vxor.u32 %v545, %v833
    %v1122 = vxor.u32 %v546, %v834
    %v1123 = vxor.u32 %v547, %v835
    %v1124 = vxor.u32 %v548, %v836
    %v1125 = vxor.u32 %v549, %v837
    %v1126 = vxor.u32 %v550, %v838
    %v1127 = vxor.u32 %v551, %v839
    %v1128 = vxor.u32 %v552, %v840
    %v1129 = vxor.u32 %v553, %v841
    %v1130 = vxor.u32 %v554, %v842
    %v1131 = vxor.u32 %v555, %v843
    %v1132 = vxor.u32 %v556, %v844
    %v1133 = vxor.u32 %v557, %v845
    %v1134 = vxor.u32 %v558, %v846
    %v1135 = vxor.u32 %v559, %v847
    %v1136 = vxor.u32 %v560, %v848
    %v1137 = vxor.u32 %v561, %v849
    %v1138 = vxor.u32 %v562, %v850
    %v1139 = vxor.u32 %v563, %v851
    %v1140 = vxor.u32 %v564, %v852
    %v1141 = vxor.u32 %v565, %v853
    %v1142 = vxor.u32 %v566, %v854
    %v1143 = vxor.u32 %v567, %v855
    %v1144 = vxor.u32 %v568, %v856
    %v1145 = vxor.u32 %v569, %v857
    %v1146 = vxor.u32 %v570, %v858
    %v1147 = vxor.u32 %v571, %v859
    %v1148 = vxor.u32 %v572, %v860
    %v1149 = vxor.u32 %v573, %v861
    %v1150 = vxor.u32 %v574, %v862
    %v1151 = vxor.u32 %v575, %v863
    %v1152 = vxor.u32 %v576, %v864
    %v1153 = vxor.u32 %v577, %v865
    %v1154 = vxor.u32 %v578, %v866
    %v1155 = vxor.u32 %v579, %v867
    %v1156 = vxor.u32 %v580, %v868
    %v1157 = vxor.u32 %v581, %v869
    %v1158 = vxor.u32 %v582, %v870
    %v1159 = vxor.u32 %v583, %v871
    %v1160 = vxor.u32 %v584, %v872
    %v1161 = vxor.u32 %v585, %v873
    %v1162 = vxor.u32 %v586, %v874
    %v1163 = vxor.u32 %v587, %v875
    %v1164 = vxor.u32 %v588, %v876
    %v1165 = vxor.u32 %v589, %v877
    %v1166 = vxor.u32 %v590, %v878
    %v1167 = vxor.u32 %v591, %v879
    %v1168 = vxor.u32 %v592, %v880
    %v1169 = vxor.u32 %v593, %v881
    %v1170 = vxor.u32 %v594, %v882
    %v1171 = vxor.u32 %v595, %v883
    %v1172 = vxor.u32 %v596, %v884
    %v1173 = vxor.u32 %v597, %v885
    %v1174 = vxor.u32 %v598, %v886
    %v1175 = vxor.u32 %v599, %v887
    %v1176 = vxor.u32 %v600, %v888
    %v1177 = vxor.u32 %v601, %v889
    %v1178 = vxor.u32 %v602, %v890
    %v1179 = vxor.u32 %v603, %v891
    %v1180 = vxor.u32 %v604, %v892
    %v1181 = vxor.u32 %v605, %v893
    %v1182 = vxor.u32 %v606, %v894
    %v1183 = vxor.u32 %v607, %v895
    %v1184 = vxor.u32 %v608, %v896
    %v1185 = vxor.u32 %v609, %v897
    %v1186 = vxor.u32 %v610, %v898
    %v1187 = vxor.u32 %v611, %v899
    %v1188 = vxor.u32 %v612, %v900
    %v1189 = vxor.u32 %v613, %v901
    %v1190 = vxor.u32 %v614, %v902
    %v1191 = vxor.u32 %v615, %v903
    %v1192 = vxor.u32 %v616, %v904
    %v1193 = vxor.u32 %v617, %v905
    %v1194 = vxor.u32 %v618, %v906
    %v1195 = vxor.u32 %v619, %v907
    %v1196 = vxor.u32 %v620, %v908
    %v1197 = vxor.u32 %v621, %v909
    %v1198 = vxor.u32 %v622, %v910
    %v1199 = vxor.u32 %v623, %v911
    %v1200 = vxor.u32 %v624, %v912
    %v1201 = vxor.u32 %v625, %v913
    %v1202 = vxor.u32 %v626, %v914
    %v1203 = vxor.u32 %v627, %v915
    %v1204 = vxor.u32 %v628, %v916
    %v1205 = vxor.u32 %v629, %v917
    %v1206 = vxor.u32 %v630, %v918
    %v1207 = vxor.u32 %v631, %v919
    %v1208 = vxor.u32 %v632, %v920
    %v1209 = vxor.u32 %v633, %v921
    %v1210 = vxor.u32 %v634, %v922
    %v1211 = vxor.u32 %v635, %v923
    %v1212 = vxor.u32 %v636, %v924
    %v1213 = vxor.u32 %v637, %v925
    %v1214 = vxor.u32 %v638, %v926
    %v1215 = vxor.u32 %v639, %v927
    %v1216 = vxor.u32 %v640, %v928
    %v1217 = vxor.u32 %v641, %v929
    %v1218 = vxor.u32 %v642, %v930
    %v1219 = vxor.u32 %v643, %v931
    %v1220 = vxor.u32 %v644, %v932
    %v1221 = vxor.u32 %v645, %v933
    %v1222 = vxor.u32 %v646, %v934
    %v1223 = vxor.u32 %v647, %v935
    %v1224 = vxor.u32 %v648, %v936
    %v1225 = vxor.u32 %v649, %v937
    %v1226 = vxor.u32 %v650, %v938
    %v1227 = vxor.u32 %v651, %v939
    %v1228 = vxor.u32 %v652, %v940
    %v1229 = vxor.u32 %v653, %v941
    %v1230 = vxor.u32 %v654, %v942
    %v1231 = vxor.u32 %v655, %v943
    %v1232 = vxor.u32 %v656, %v944
    %v1233 = vxor.u32 %v657, %v945
    %v1234 = vxor.u32 %v658, %v946
    %v1235 = vxor.u32 %v659, %v947
    %v1236 = vxor.u32 %v660, %v948
    %v1237 = vxor.u32 %v661, %v949
    %v1238 = vxor.u32 %v662, %v950
    %v1239 = vxor.u32 %v663, %v951
    %v1240 = vxor.u32 %v664, %v952
    %v1241 = vxor.u32 %v665, %v953
    %v1242 = vxor.u32 %v666, %v954
    %v1243 = vxor.u32 %v667, %v955
    %v1244 = vxor.u32 %v668, %v956
    %v1245 = vxor.u32 %v669, %v957
    %v1246 = vxor.u32 %v670, %v958
    %v1247 = vxor.u32 %v671, %v959
    %v1248 = vxor.u32 %v672, %v960
    %v1249 = vxor.u32 %v673, %v961
    %v1250 = vxor.u32 %v674, %v962
    %v1251 = vxor.u32 %v675, %v963
    %v1252 = vxor.u32 %v676, %v964
    %v1253 = vxor.u32 %v677, %v965
    %v1254 = vxor.u32 %v678, %v966
    %v1255 = vxor.u32 %v679, %v967
    %v1256 = vxor.u32 %v680, %v968
    %v1257 = vxor.u32 %v681, %v969
    %v1258 = vxor.u32 %v682, %v970
    %v1259 = vxor.u32 %v683, %v971
    %v1260 = vxor.u32 %v684, %v972
    %v1261 = vxor.u32 %v685, %v973
    %v1262 = vxor.u32 %v686, %v974
    %v1263 = vxor.u32 %v687, %v975
    %v1264 = vxor.u32 %v688, %v976
    %v1265 = vxor.u32 %v689, %v977
    %v1266 = vxor.u32 %v690, %v978
    %v1267 = vxor.u32 %v691, %v979
    %v1268 = vxor.u32 %v692, %v980
    %v1269 = vxor.u32 %v693, %v981
    %v1270 = vxor.u32 %v694, %v982
    %v1271 = vxor.u32 %v695, %v983
    %v1272 = vxor.u32 %v696, %v984
    %v1273 = vxor.u32 %v697, %v985
    %v1274 = vxor.u32 %v698, %v986
    %v1275 = vxor.u32 %v699, %v987
    %v1276 = vxor.u32 %v700, %v988
    %v1277 = vxor.u32 %v701, %v989
    %v1278 = vxor.u32 %v702, %v990
    %v1279 = vxor.u32 %v703, %v991
    %v1280 = vxor.u32 %v704, %v992
    %v1281 = vxor.u32 %v705, %v993
    %v1282 = vxor.u32 %v706, %v994
    %v1283 = vxor.u32 %v707, %v995
    %v1284 = vxor.u32 %v708, %v996
    %v1285 = vxor.u32 %v709, %v997
    %v1286 = vxor.u32 %v710, %v998
    %v1287 = vxor.u32 %v711, %v999
    %v1288 = vxor.u32 %v712, %v1000
    %v1289 = vxor.u32 %v713, %v1001
    %v1290 = vxor.u32 %v714, %v1002
    %v1291 = vxor.u32 %v715, %v1003
    %v1292 = vxor.u32 %v716, %v1004
    %v1293 = vxor.u32 %v717, %v1005
    %v1294 = vxor.u32 %v718, %v1006
    %v1295 = vxor.u32 %v719, %v1007
    %v1296 = vxor.u32 %v720, %v1008
    %v1297 = vxor.u32 %v721, %v1009
    %v1298 = vxor.u32 %v722, %v1010
    %v1299 = vxor.u32 %v723, %v1011
    %v1300 = vxor.u32 %v724, %v1012
    %v1301 = vxor.u32 %v725, %v1013
    %v1302 = vxor.u32 %v726, %v1014
    %v1303 = vxor.u32 %v727, %v1015
    %v1304 = vxor.u32 %v728, %v1016
    %v1305 = vxor.u32 %v729, %v1017
    %v1306 = vxor.u32 %v730, %v1018
    %v1307 = vxor.u32 %v731, %v1019
    %v1308 = vxor.u32 %v732, %v1020
    %v1309 = vxor.u32 %v733, %v1021
    %v1310 = vxor.u32 %v734, %v1022
    %v1311 = vxor.u32 %v735, %v1023
    %v1312 = vxor.u32 %v736, %v1024
    %v1313 = vxor.u32 %v737, %v1025
    %v1314 = vxor.u32 %v738, %v1026
    %v1315 = vxor.u32 %v739, %v1027
    %v1316 = vxor.u32 %v740, %v1028
    %v1317 = vxor.u32 %v741, %v1029
    %v1318 = vxor.u32 %v742, %v1030
    %v1319 = vxor.u32 %v743, %v1031
    %v1320 = vxor.u32 %v744, %v1032
    %v1321 = vxor.u32 %v745, %v1033
    %v1322 = vxor.u32 %v746, %v1034
    %v1323 = vxor.u32 %v747, %v1035
    %v1324 = vxor.u32 %v748, %v1036
    %v1325 = vxor.u32 %v749, %v1037
    %v1326 = vxor.u32 %v750, %v1038
    %v1327 = vxor.u32 %v751, %v1039
    %v1328 = vxor.u32 %v752, %v1040
    %v1329 = vxor.u32 %v753, %v1041
    %v1330 = vxor.u32 %v754, %v1042
    %v1331 = vxor.u32 %v755, %v1043
    %v1332 = vxor.u32 %v756, %v1044
    %v1333 = vxor.u32 %v757, %v1045
    %v1334 = vmul.u32 %v1046, 2146121005
    %v1335 = vmul.u32 %v1047, 2146121005
    %v1336 = vmul.u32 %v1048, 2146121005
    %v1337 = vmul.u32 %v1049, 2146121005
    %v1338 = vmul.u32 %v1050, 2146121005
    %v1339 = vmul.u32 %v1051, 2146121005
    %v1340 = vmul.u32 %v1052, 2146121005
    %v1341 = vmul.u32 %v1053, 2146121005
    %v1342 = vmul.u32 %v1054, 2146121005
    %v1343 = vmul.u32 %v1055, 2146121005
    %v1344 = vmul.u32 %v1056, 2146121005
    %v1345 = vmul.u32 %v1057, 2146121005
    %v1346 = vmul.u32 %v1058, 2146121005
    %v1347 = vmul.u32 %v1059, 2146121005
    %v1348 = vmul.u32 %v1060, 2146121005
    %v1349 = vmul.u32 %v1061, 2146121005
    %v1350 = vmul.u32 %v1062, 2146121005
    %v1351 = vmul.u32 %v1063, 2146121005
    %v1352 = vmul.u32 %v1064, 2146121005
    %v1353 = vmul.u32 %v1065, 2146121005
    %v1354 = vmul.u32 %v1066, 2146121005
    %v1355 = vmul.u32 %v1067, 2146121005
    %v1356 = vmul.u32 %v1068, 2146121005
    %v1357 = vmul.u32 %v1069, 2146121005
    %v1358 = vmul.u32 %v1070, 2146121005
    %v1359 = vmul.u32 %v1071, 2146121005
    %v1360 = vmul.u32 %v1072, 2146121005
    %v1361 = vmul.u32 %v1073, 2146121005
    %v1362 = vmul.u32 %v1074, 2146121005
    %v1363 = vmul.u32 %v1075, 2146121005
    %v1364 = vmul.u32 %v1076, 2146121005
    %v1365 = vmul.u32 %v1077, 2146121005
    %v1366 = vmul.u32 %v1078, 2146121005
    %v1367 = vmul.u32 %v1079, 2146121005
    %v1368 = vmul.u32 %v1080, 2146121005
    %v1369 = vmul.u32 %v1081, 2146121005
    %v1370 = vmul.u32 %v1082, 2146121005
    %v1371 = vmul.u32 %v1083, 2146121005
    %v1372 = vmul.u32 %v1084, 2146121005
    %v1373 = vmul.u32 %v1085, 2146121005
    %v1374 = vmul.u32 %v1086, 2146121005
    %v1375 = vmul.u32 %v1087, 2146121005
    %v1376 = vmul.u32 %v1088, 2146121005
    %v1377 = vmul.u32 %v1089, 2146121005
    %v1378 = vmul.u32 %v1090, 2146121005
    %v1379 = vmul.u32 %v1091, 2146121005
    %v1380 = vmul.u32 %v1092, 2146121005
    %v1381 = vmul.u32 %v1093, 2146121005
    %v1382 = vmul.u32 %v1094, 2146121005
    %v1383 = vmul.u32 %v1095, 2146121005
    %v1384 = vmul.u32 %v1096, 2146121005
    %v1385 = vmul.u32 %v1097, 2146121005
    %v1386 = vmul.u32 %v1098, 2146121005
    %v1387 = vmul.u32 %v1099, 2146121005
    %v1388 = vmul.u32 %v1100, 2146121005
    %v1389 = vmul.u32 %v1101, 2146121005
    %v1390 = vmul.u32 %v1102, 2146121005
    %v1391 = vmul.u32 %v1103, 2146121005
    %v1392 = vmul.u32 %v1104, 2146121005
    %v1393 = vmul.u32 %v1105, 2146121005
    %v1394 = vmul.u32 %v1106, 2146121005
    %v1395 = vmul.u32 %v1107, 2146121005
    %v1396 = vmul.u32 %v1108, 2146121005
    %v1397 = vmul.u32 %v1109, 2146121005
    %v1398 = vmul.u32 %v1110, 2146121005
    %v1399 = vmul.u32 %v1111, 2146121005
    %v1400 = vmul.u32 %v1112, 2146121005
    %v1401 = vmul.u32 %v1113, 2146121005
    %v1402 = vmul.u32 %v1114, 2146121005
    %v1403 = vmul.u32 %v1115, 2146121005
    %v1404 = vmul.u32 %v1116, 2146121005
    %v1405 = vmul.u32 %v1117, 2146121005
    %v1406 = vmul.u32 %v1118, 2146121005
    %v1407 = vmul.u32 %v1119, 2146121005
    %v1408 = vmul.u32 %v1120, 2146121005
    %v1409 = vmul.u32 %v1121, 2146121005
    %v1410 = vmul.u32 %v1122, 2146121005
    %v1411 = vmul.u32 %v1123, 2146121005
    %v1412 = vmul.u32 %v1124, 2146121005
    %v1413 = vmul.u32 %v1125, 2146121005
    %v1414 = vmul.u32 %v1126, 2146121005
    %v1415 = vmul.u32 %v1127, 2146121005
    %v1416 = vmul.u32 %v1128, 2146121005
    %v1417 = vmul.u32 %v1129, 2146121005
    %v1418 = vmul.u32 %v1130, 2146121005
    %v1419 = vmul.u32 %v1131, 2146121005
    %v1420 = vmul.u32 %v1132, 2146121005
    %v1421 = vmul.u32 %v1133, 2146121005
    %v1422 = vmul.u32 %v1134, 2146121005
    %v1423 = vmul.u32 %v1135, 2146121005
    %v1424 = vmul.u32 %v1136, 2146121005
    %v1425 = vmul.u32 %v1137, 2146121005
    %v1426 = vmul.u32 %v1138, 2146121005
    %v1427 = vmul.u32 %v1139, 2146121005
    %v1428 = vmul.u32 %v1140, 2146121005
    %v1429 = vmul.u32 %v1141, 2146121005
    %v1430 = vmul.u32 %v1142, 2146121005
    %v1431 = vmul.u32 %v1143, 2146121005
    %v1432 = vmul.u32 %v1144, 2146121005
    %v1433 = vmul.u32 %v1145, 2146121005
    %v1434 = vmul.u32 %v1146, 2146121005
    %v1435 = vmul.u32 %v1147, 2146121005
    %v1436 = vmul.u32 %v1148, 2146121005
    %v1437 = vmul.u32 %v1149, 2146121005
    %v1438 = vmul.u32 %v1150, 2146121005
    %v1439 = vmul.u32 %v1151, 2146121005
    %v1440 = vmul.u32 %v1152, 2146121005
    %v1441 = vmul.u32 %v1153, 2146121005
    %v1442 = vmul.u32 %v1154, 2146121005
    %v1443 = vmul.u32 %v1155, 2146121005
    %v1444 = vmul.u32 %v1156, 2146121005
    %v1445 = vmul.u32 %v1157, 2146121005
    %v1446 = vmul.u32 %v1158, 2146121005
    %v1447 = vmul.u32 %v1159, 2146121005
    %v1448 = vmul.u32 %v1160, 2146121005
    %v1449 = vmul.u32 %v1161, 2146121005
    %v1450 = vmul.u32 %v1162, 2146121005
    %v1451 = vmul.u32 %v1163, 2146121005
    %v1452 = vmul.u32 %v1164, 2146121005
    %v1453 = vmul.u32 %v1165, 2146121005
    %v1454 = vmul.u32 %v1166, 2146121005
    %v1455 = vmul.u32 %v1167, 2146121005
    %v1456 = vmul.u32 %v1168, 2146121005
    %v1457 = vmul.u32 %v1169, 2146121005
    %v1458 = vmul.u32 %v1170, 2146121005
    %v1459 = vmul.u32 %v1171, 2146121005
    %v1460 = vmul.u32 %v1172, 2146121005
    %v1461 = vmul.u32 %v1173, 2146121005
    %v1462 = vmul.u32 %v1174, 2146121005
    %v1463 = vmul.u32 %v1175, 2146121005
    %v1464 = vmul.u32 %v1176, 2146121005
    %v1465 = vmul.u32 %v1177, 2146121005
    %v1466 = vmul.u32 %v1178, 2146121005
    %v1467 = vmul.u32 %v1179, 2146121005
    %v1468 = vmul.u32 %v1180, 2146121005
    %v1469 = vmul.u32 %v1181, 2146121005
    %v1470 = vmul.u32 %v1182, 2146121005
    %v1471 = vmul.u32 %v1183, 2146121005
    %v1472 = vmul.u32 %v1184, 2146121005
    %v1473 = vmul.u32 %v1185, 2146121005
    %v1474 = vmul.u32 %v1186, 2146121005
    %v1475 = vmul.u32 %v1187, 2146121005
    %v1476 = vmul.u32 %v1188, 2146121005
    %v1477 = vmul.u32 %v1189, 2146121005
    %v1478 = vmul.u32 %v1190, 2146121005
    %v1479 = vmul.u32 %v1191, 2146121005
    %v1480 = vmul.u32 %v1192, 2146121005
    %v1481 = vmul.u32 %v1193, 2146121005
    %v1482 = vmul.u32 %v1194, 2146121005
    %v1483 = vmul.u32 %v1195, 2146121005
    %v1484 = vmul.u32 %v1196, 2146121005
    %v1485 = vmul.u32 %v1197, 2146121005
    %v1486 = vmul.u32 %v1198, 2146121005
    %v1487 = vmul.u32 %v1199, 2146121005
    %v1488 = vmul.u32 %v1200, 2146121005
    %v1489 = vmul.u32 %v1201, 2146121005
    %v1490 = vmul.u32 %v1202, 2146121005
    %v1491 = vmul.u32 %v1203, 2146121005
    %v1492 = vmul.u32 %v1204, 2146121005
    %v1493 = vmul.u32 %v1205, 2146121005
    %v1494 = vmul.u32 %v1206, 2146121005
    %v1495 = vmul.u32 %v1207, 2146121005
    %v1496 = vmul.u32 %v1208, 2146121005
    %v1497 = vmul.u32 %v1209, 2146121005
    %v1498 = vmul.u32 %v1210, 2146121005
    %v1499 = vmul.u32 %v1211, 2146121005
    %v1500 = vmul.u32 %v1212, 2146121005
    %v1501 = vmul.u32 %v1213, 2146121005
    %v1502 = vmul.u32 %v1214, 2146121005
    %v1503 = vmul.u32 %v1215, 2146121005
    %v1504 = vmul.u32 %v1216, 2146121005
    %v1505 = vmul.u32 %v1217, 2146121005
    %v1506 = vmul.u32 %v1218, 2146121005
    %v1507 = vmul.u32 %v1219, 2146121005
    %v1508 = vmul.u32 %v1220, 2146121005
    %v1509 = vmul.u32 %v1221, 2146121005
    %v1510 = vmul.u32 %v1222, 2146121005
    %v1511 = vmul.u32 %v1223, 2146121005
    %v1512 = vmul.u32 %v1224, 2146121005
    %v1513 = vmul.u32 %v1225, 2146121005
    %v1514 = vmul.u32 %v1226, 2146121005
    %v1515 = vmul.u32 %v1227, 2146121005
    %v1516 = vmul.u32 %v1228, 2146121005
    %v1517 = vmul.u32 %v1229, 2146121005
    %v1518 = vmul.u32 %v1230, 2146121005
    %v1519 = vmul.u32 %v1231, 2146121005
    %v1520 = vmul.u32 %v1232, 2146121005
    %v1521 = vmul.u32 %v1233, 2146121005
    %v1522 = vmul.u32 %v1234, 2146121005
    %v1523 = vmul.u32 %v1235, 2146121005
    %v1524 = vmul.u32 %v1236, 2146121005
    %v1525 = vmul.u32 %v1237, 2146121005
    %v1526 = vmul.u32 %v1238, 2146121005
    %v1527 = vmul.u32 %v1239, 2146121005
    %v1528 = vmul.u32 %v1240, 2146121005
    %v1529 = vmul.u32 %v1241, 2146121005
    %v1530 = vmul.u32 %v1242, 2146121005
    %v1531 = vmul.u32 %v1243, 2146121005
    %v1532 = vmul.u32 %v1244, 2146121005
    %v1533 = vmul.u32 %v1245, 2146121005
    %v1534 = vmul.u32 %v1246, 2146121005
    %v1535 = vmul.u32 %v1247, 2146121005
    %v1536 = vmul.u32 %v1248, 2146121005
    %v1537 = vmul.u32 %v1249, 2146121005
    %v1538 = vmul.u32 %v1250, 2146121005
    %v1539 = vmul.u32 %v1251, 2146121005
    %v1540 = vmul.u32 %v1252, 2146121005
    %v1541 = vmul.u32 %v1253, 2146121005
    %v1542 = vmul.u32 %v1254, 2146121005
    %v1543 = vmul.u32 %v1255, 2146121005
    %v1544 = vmul.u32 %v1256, 2146121005
    %v1545 = vmul.u32 %v1257, 2146121005
    %v1546 = vmul.u32 %v1258, 2146121005
    %v1547 = vmul.u32 %v1259, 2146121005
    %v1548 = vmul.u32 %v1260, 2146121005
    %v1549 = vmul.u32 %v1261, 2146121005
    %v1550 = vmul.u32 %v1262, 2146121005
    %v1551 = vmul.u32 %v1263, 2146121005
    %v1552 = vmul.u32 %v1264, 2146121005
    %v1553 = vmul.u32 %v1265, 2146121005
    %v1554 = vmul.u32 %v1266, 2146121005
    %v1555 = vmul.u32 %v1267, 2146121005
    %v1556 = vmul.u32 %v1268, 2146121005
    %v1557 = vmul.u32 %v1269, 2146121005
    %v1558 = vmul.u32 %v1270, 2146121005
    %v1559 = vmul.u32 %v1271, 2146121005
    %v1560 = vmul.u32 %v1272, 2146121005
    %v1561 = vmul.u32 %v1273, 2146121005
    %v1562 = vmul.u32 %v1274, 2146121005
    %v1563 = vmul.u32 %v1275, 2146121005
    %v1564 = vmul.u32 %v1276, 2146121005
    %v1565 = vmul.u32 %v1277, 2146121005
    %v1566 = vmul.u32 %v1278, 2146121005
    %v1567 = vmul.u32 %v1279, 2146121005
    %v1568 = vmul.u32 %v1280, 2146121005
    %v1569 = vmul.u32 %v1281, 2146121005
    %v1570 = vmul.u32 %v1282, 2146121005
    %v1571 = vmul.u32 %v1283, 2146121005
    %v1572 = vmul.u32 %v1284, 2146121005
    %v1573 = vmul.u32 %v1285, 2146121005
    %v1574 = vmul.u32 %v1286, 2146121005
    %v1575 = vmul.u32 %v1287, 2146121005
    %v1576 = vmul.u32 %v1288, 2146121005
    %v1577 = vmul.u32 %v1289, 2146121005
    %v1578 = vmul.u32 %v1290, 2146121005
    %v1579 = vmul.u32 %v1291, 2146121005
    %v1580 = vmul.u32 %v1292, 2146121005
    %v1581 = vmul.u32 %v1293, 2146121005
    %v1582 = vmul.u32 %v1294, 2146121005
    %v1583 = vmul.u32 %v1295, 2146121005
    %v1584 = vmul.u32 %v1296, 2146121005
    %v1585 = vmul.u32 %v1297, 2146121005
    %v1586 = vmul.u32 %v1298, 2146121005
    %v1587 = vmul.u32 %v1299, 2146121005
    %v1588 = vmul.u32 %v1300, 2146121005
    %v1589 = vmul.u32 %v1301, 2146121005
    %v1590 = vmul.u32 %v1302, 2146121005
    %v1591 = vmul.u32 %v1303, 2146121005
    %v1592 = vmul.u32 %v1304, 2146121005
    %v1593 = vmul.u32 %v1305, 2146121005
    %v1594 = vmul.u32 %v1306, 2146121005
    %v1595 = vmul.u32 %v1307, 2146121005
    %v1596 = vmul.u32 %v1308, 2146121005
    %v1597 = vmul.u32 %v1309, 2146121005
    %v1598 = vmul.u32 %v1310, 2146121005
    %v1599 = vmul.u32 %v1311, 2146121005
    %v1600 = vmul.u32 %v1312, 2146121005
    %v1601 = vmul.u32 %v1313, 2146121005
    %v1602 = vmul.u32 %v1314, 2146121005
    %v1603 = vmul.u32 %v1315, 2146121005
    %v1604 = vmul.u32 %v1316, 2146121005
    %v1605 = vmul.u32 %v1317, 2146121005
    %v1606 = vmul.u32 %v1318, 2146121005
    %v1607 = vmul.u32 %v1319, 2146121005
    %v1608 = vmul.u32 %v1320, 2146121005
    %v1609 = vmul.u32 %v1321, 2146121005
    %v1610 = vmul.u32 %v1322, 2146121005
    %v1611 = vmul.u32 %v1323, 2146121005
    %v1612 = vmul.u32 %v1324, 2146121005
    %v1613 = vmul.u32 %v1325, 2146121005
    %v1614 = vmul.u32 %v1326, 2146121005
    %v1615 = vmul.u32 %v1327, 2146121005
    %v1616 = vmul.u32 %v1328, 2146121005
    %v1617 = vmul.u32 %v1329, 2146121005
    %v1618 = vmul.u32 %v1330, 2146121005
    %v1619 = vmul.u32 %v1331, 2146121005
    %v1620 = vmul.u32 %v1332, 2146121005
    %v1621 = vmul.u32 %v1333, 2146121005
    %v1622 = vshrl.u32 %v1334, 15
    %v1623 = vshrl.u32 %v1335, 15
    %v1624 = vshrl.u32 %v1336, 15
    %v1625 = vshrl.u32 %v1337, 15
    %v1626 = vshrl.u32 %v1338, 15
    %v1627 = vshrl.u32 %v1339, 15
    %v1628 = vshrl.u32 %v1340, 15
    %v1629 = vshrl.u32 %v1341, 15
    %v1630 = vshrl.u32 %v1342, 15
    %v1631 = vshrl.u32 %v1343, 15
    %v1632 = vshrl.u32 %v1344, 15
    %v1633 = vshrl.u32 %v1345, 15
    %v1634 = vshrl.u32 %v1346, 15
    %v1635 = vshrl.u32 %v1347, 15
    %v1636 = vshrl.u32 %v1348, 15
    %v1637 = vshrl.u32 %v1349, 15
    %v1638 = vshrl.u32 %v1350, 15
    %v1639 = vshrl.u32 %v1351, 15
    %v1640 = vshrl.u32 %v1352, 15
    %v1641 = vshrl.u32 %v1353, 15
    %v1642 = vshrl.u32 %v1354, 15
    %v1643 = vshrl.u32 %v1355, 15
    %v1644 = vshrl.u32 %v1356, 15
    %v1645 = vshrl.u32 %v1357, 15
    %v1646 = vshrl.u32 %v1358, 15
    %v1647 = vshrl.u32 %v1359, 15
    %v1648 = vshrl.u32 %v1360, 15
    %v1649 = vshrl.u32 %v1361, 15
    %v1650 = vshrl.u32 %v1362, 15
    %v1651 = vshrl.u32 %v1363, 15
    %v1652 = vshrl.u32 %v1364, 15
    %v1653 = vshrl.u32 %v1365, 15
    %v1654 = vshrl.u32 %v1366, 15
    %v1655 = vshrl.u32 %v1367, 15
    %v1656 = vshrl.u32 %v1368, 15
    %v1657 = vshrl.u32 %v1369, 15
    %v1658 = vshrl.u32 %v1370, 15
    %v1659 = vshrl.u32 %v1371, 15
    %v1660 = vshrl.u32 %v1372, 15
    %v1661 = vshrl.u32 %v1373, 15
    %v1662 = vshrl.u32 %v1374, 15
    %v1663 = vshrl.u32 %v1375, 15
    %v1664 = vshrl.u32 %v1376, 15
    %v1665 = vshrl.u32 %v1377, 15
    %v1666 = vshrl.u32 %v1378, 15
    %v1667 = vshrl.u32 %v1379, 15
    %v1668 = vshrl.u32 %v1380, 15
    %v1669 = vshrl.u32 %v1381, 15
    %v1670 = vshrl.u32 %v1382, 15
    %v1671 = vshrl.u32 %v1383, 15
    %v1672 = vshrl.u32 %v1384, 15
    %v1673 = vshrl.u32 %v1385, 15
    %v1674 = vshrl.u32 %v1386, 15
    %v1675 = vshrl.u32 %v1387, 15
    %v1676 = vshrl.u32 %v1388, 15
    %v1677 = vshrl.u32 %v1389, 15
    %v1678 = vshrl.u32 %v1390, 15
    %v1679 = vshrl.u32 %v1391, 15
    %v1680 = vshrl.u32 %v1392, 15
    %v1681 = vshrl.u32 %v1393, 15
    %v1682 = vshrl.u32 %v1394, 15
    %v1683 = vshrl.u32 %v1395, 15
    %v1684 = vshrl.u32 %v1396, 15
    %v1685 = vshrl.u32 %v1397, 15
    %v1686 = vshrl.u32 %v1398, 15
    %v1687 = vshrl.u32 %v1399, 15
    %v1688 = vshrl.u32 %v1400, 15
    %v1689 = vshrl.u32 %v1401, 15
    %v1690 = vshrl.u32 %v1402, 15
    %v1691 = vshrl.u32 %v1403, 15
    %v1692 = vshrl.u32 %v1404, 15
    %v1693 = vshrl.u32 %v1405, 15
    %v1694 = vshrl.u32 %v1406, 15
    %v1695 = vshrl.u32 %v1407, 15
    %v1696 = vshrl.u32 %v1408, 15
    %v1697 = vshrl.u32 %v1409, 15
    %v1698 = vshrl.u32 %v1410, 15
    %v1699 = vshrl.u32 %v1411, 15
    %v1700 = vshrl.u32 %v1412, 15
    %v1701 = vshrl.u32 %v1413, 15
    %v1702 = vshrl.u32 %v1414, 15
    %v1703 = vshrl.u32 %v1415, 15
    %v1704 = vshrl.u32 %v1416, 15
    %v1705 = vshrl.u32 %v1417, 15
    %v1706 = vshrl.u32 %v1418, 15
    %v1707 = vshrl.u32 %v1419, 15
    %v1708 = vshrl.u32 %v1420, 15
    %v1709 = vshrl.u32 %v1421, 15
    %v1710 = vshrl.u32 %v1422, 15
    %v1711 = vshrl.u32 %v1423, 15
    %v1712 = vshrl.u32 %v1424, 15
    %v1713 = vshrl.u32 %v1425, 15
    %v1714 = vshrl.u32 %v1426, 15
    %v1715 = vshrl.u32 %v1427, 15
    %v1716 = vshrl.u32 %v1428, 15
    %v1717 = vshrl.u32 %v1429, 15
    %v1718 = vshrl.u32 %v1430, 15
    %v1719 = vshrl.u32 %v1431, 15
    %v1720 = vshrl.u32 %v1432, 15
    %v1721 = vshrl.u32 %v1433, 15
    %v1722 = vshrl.u32 %v1434, 15
    %v1723 = vshrl.u32 %v1435, 15
    %v1724 = vshrl.u32 %v1436, 15
    %v1725 = vshrl.u32 %v1437, 15
    %v1726 = vshrl.u32 %v1438, 15
    %v1727 = vshrl.u32 %v1439, 15
    %v1728 = vshrl.u32 %v1440, 15
    %v1729 = vshrl.u32 %v1441, 15
    %v1730 = vshrl.u32 %v1442, 15
    %v1731 = vshrl.u32 %v1443, 15
    %v1732 = vshrl.u32 %v1444, 15
    %v1733 = vshrl.u32 %v1445, 15
    %v1734 = vshrl.u32 %v1446, 15
    %v1735 = vshrl.u32 %v1447, 15
    %v1736 = vshrl.u32 %v1448, 15
    %v1737 = vshrl.u32 %v1449, 15
    %v1738 = vshrl.u32 %v1450, 15
    %v1739 = vshrl.u32 %v1451, 15
    %v1740 = vshrl.u32 %v1452, 15
    %v1741 = vshrl.u32 %v1453, 15
    %v1742 = vshrl.u32 %v1454, 15
    %v1743 = vshrl.u32 %v1455, 15
    %v1744 = vshrl.u32 %v1456, 15
    %v1745 = vshrl.u32 %v1457, 15
    %v1746 = vshrl.u32 %v1458, 15
    %v1747 = vshrl.u32 %v1459, 15
    %v1748 = vshrl.u32 %v1460, 15
    %v1749 = vshrl.u32 %v1461, 15
    %v1750 = vshrl.u32 %v1462, 15
    %v1751 = vshrl.u32 %v1463, 15
    %v1752 = vshrl.u32 %v1464, 15
    %v1753 = vshrl.u32 %v1465, 15
    %v1754 = vshrl.u32 %v1466, 15
    %v1755 = vshrl.u32 %v1467, 15
    %v1756 = vshrl.u32 %v1468, 15
    %v1757 = vshrl.u32 %v1469, 15
    %v1758 = vshrl.u32 %v1470, 15
    %v1759 = vshrl.u32 %v1471, 15
    %v1760 = vshrl.u32 %v1472, 15
    %v1761 = vshrl.u32 %v1473, 15
    %v1762 = vshrl.u32 %v1474, 15
    %v1763 = vshrl.u32 %v1475, 15
    %v1764 = vshrl.u32 %v1476, 15
    %v1765 = vshrl.u32 %v1477, 15
    %v1766 = vshrl.u32 %v1478, 15
    %v1767 = vshrl.u32 %v1479, 15
    %v1768 = vshrl.u32 %v1480, 15
    %v1769 = vshrl.u32 %v1481, 15
    %v1770 = vshrl.u32 %v1482, 15
    %v1771 = vshrl.u32 %v1483, 15
    %v1772 = vshrl.u32 %v1484, 15
    %v1773 = vshrl.u32 %v1485, 15
    %v1774 = vshrl.u32 %v1486, 15
    %v1775 = vshrl.u32 %v1487, 15
    %v1776 = vshrl.u32 %v1488, 15
    %v1777 = vshrl.u32 %v1489, 15
    %v1778 = vshrl.u32 %v1490, 15
    %v1779 = vshrl.u32 %v1491, 15
    %v1780 = vshrl.u32 %v1492, 15
    %v1781 = vshrl.u32 %v1493, 15
    %v1782 = vshrl.u32 %v1494, 15
    %v1783 = vshrl.u32 %v1495, 15
    %v1784 = vshrl.u32 %v1496, 15
    %v1785 = vshrl.u32 %v1497, 15
    %v1786 = vshrl.u32 %v1498, 15
    %v1787 = vshrl.u32 %v1499, 15
    %v1788 = vshrl.u32 %v1500, 15
    %v1789 = vshrl.u32 %v1501, 15
    %v1790 = vshrl.u32 %v1502, 15
    %v1791 = vshrl.u32 %v1503, 15
    %v1792 = vshrl.u32 %v1504, 15
    %v1793 = vshrl.u32 %v1505, 15
    %v1794 = vshrl.u32 %v1506, 15
    %v1795 = vshrl.u32 %v1507, 15
    %v1796 = vshrl.u32 %v1508, 15
    %v1797 = vshrl.u32 %v1509, 15
    %v1798 = vshrl.u32 %v1510, 15
    %v1799 = vshrl.u32 %v1511, 15
    %v1800 = vshrl.u32 %v1512, 15
    %v1801 = vshrl.u32 %v1513, 15
    %v1802 = vshrl.u32 %v1514, 15
    %v1803 = vshrl.u32 %v1515, 15
    %v1804 = vshrl.u32 %v1516, 15
    %v1805 = vshrl.u32 %v1517, 15
    %v1806 = vshrl.u32 %v1518, 15
    %v1807 = vshrl.u32 %v1519, 15
    %v1808 = vshrl.u32 %v1520, 15
    %v1809 = vshrl.u32 %v1521, 15
    %v1810 = vshrl.u32 %v1522, 15
    %v1811 = vshrl.u32 %v1523, 15
    %v1812 = vshrl.u32 %v1524, 15
    %v1813 = vshrl.u32 %v1525, 15
    %v1814 = vshrl.u32 %v1526, 15
    %v1815 = vshrl.u32 %v1527, 15
    %v1816 = vshrl.u32 %v1528, 15
    %v1817 = vshrl.u32 %v1529, 15
    %v1818 = vshrl.u32 %v1530, 15
    %v1819 = vshrl.u32 %v1531, 15
    %v1820 = vshrl.u32 %v1532, 15
    %v1821 = vshrl.u32 %v1533, 15
    %v1822 = vshrl.u32 %v1534, 15
    %v1823 = vshrl.u32 %v1535, 15
    %v1824 = vshrl.u32 %v1536, 15
    %v1825 = vshrl.u32 %v1537, 15
    %v1826 = vshrl.u32 %v1538, 15
    %v1827 = vshrl.u32 %v1539, 15
    %v1828 = vshrl.u32 %v1540, 15
    %v1829 = vshrl.u32 %v1541, 15
    %v1830 = vshrl.u32 %v1542, 15
    %v1831 = vshrl.u32 %v1543, 15
    %v1832 = vshrl.u32 %v1544, 15
    %v1833 = vshrl.u32 %v1545, 15
    %v1834 = vshrl.u32 %v1546, 15
    %v1835 = vshrl.u32 %v1547, 15
    %v1836 = vshrl.u32 %v1548, 15
    %v1837 = vshrl.u32 %v1549, 15
    %v1838 = vshrl.u32 %v1550, 15
    %v1839 = vshrl.u32 %v1551, 15
    %v1840 = vshrl.u32 %v1552, 15
    %v1841 = vshrl.u32 %v1553, 15
    %v1842 = vshrl.u32 %v1554, 15
    %v1843 = vshrl.u32 %v1555, 15
    %v1844 = vshrl.u32 %v1556, 15
    %v1845 = vshrl.u32 %v1557, 15
    %v1846 = vshrl.u32 %v1558, 15
    %v1847 = vshrl.u32 %v1559, 15
    %v1848 = vshrl.u32 %v1560, 15
    %v1849 = vshrl.u32 %v1561, 15
    %v1850 = vshrl.u32 %v1562, 15
    %v1851 = vshrl.u32 %v1563, 15
    %v1852 = vshrl.u32 %v1564, 15
    %v1853 = vshrl.u32 %v1565, 15
    %v1854 = vshrl.u32 %v1566, 15
    %v1855 = vshrl.u32 %v1567, 15
    %v1856 = vshrl.u32 %v1568, 15
    %v1857 = vshrl.u32 %v1569, 15
    %v1858 = vshrl.u32 %v1570, 15
    %v1859 = vshrl.u32 %v1571, 15
    %v1860 = vshrl.u32 %v1572, 15
    %v1861 = vshrl.u32 %v1573, 15
    %v1862 = vshrl.u32 %v1574, 15
    %v1863 = vshrl.u32 %v1575, 15
    %v1864 = vshrl.u32 %v1576, 15
    %v1865 = vshrl.u32 %v1577, 15
    %v1866 = vshrl.u32 %v1578, 15
    %v1867 = vshrl.u32 %v1579, 15
    %v1868 = vshrl.u32 %v1580, 15
    %v1869 = vshrl.u32 %v1581, 15
    %v1870 = vshrl.u32 %v1582, 15
    %v1871 = vshrl.u32 %v1583, 15
    %v1872 = vshrl.u32 %v1584, 15
    %v1873 = vshrl.u32 %v1585, 15
    %v1874 = vshrl.u32 %v1586, 15
    %v1875 = vshrl.u32 %v1587, 15
    %v1876 = vshrl.u32 %v1588, 15
    %v1877 = vshrl.u32 %v1589, 15
    %v1878 = vshrl.u32 %v1590, 15
    %v1879 = vshrl.u32 %v1591, 15
    %v1880 = vshrl.u32 %v1592, 15
    %v1881 = vshrl.u32 %v1593, 15
    %v1882 = vshrl.u32 %v1594, 15
    %v1883 = vshrl.u32 %v1595, 15
    %v1884 = vshrl.u32 %v1596, 15
    %v1885 = vshrl.u32 %v1597, 15
    %v1886 = vshrl.u32 %v1598, 15
    %v1887 = vshrl.u32 %v1599, 15
    %v1888 = vshrl.u32 %v1600, 15
    %v1889 = vshrl.u32 %v1601, 15
    %v1890 = vshrl.u32 %v1602, 15
    %v1891 = vshrl.u32 %v1603, 15
    %v1892 = vshrl.u32 %v1604, 15
    %v1893 = vshrl.u32 %v1605, 15
    %v1894 = vshrl.u32 %v1606, 15
    %v1895 = vshrl.u32 %v1607, 15
    %v1896 = vshrl.u32 %v1608, 15
    %v1897 = vshrl.u32 %v1609, 15
    %v1898 = vshrl.u32 %v1610, 15
    %v1899 = vshrl.u32 %v1611, 15
    %v1900 = vshrl.u32 %v1612, 15
    %v1901 = vshrl.u32 %v1613, 15
    %v1902 = vshrl.u32 %v1614, 15
    %v1903 = vshrl.u32 %v1615, 15
    %v1904 = vshrl.u32 %v1616, 15
    %v1905 = vshrl.u32 %v1617, 15
    %v1906 = vshrl.u32 %v1618, 15
    %v1907 = vshrl.u32 %v1619, 15
    %v1908 = vshrl.u32 %v1620, 15
    %v1909 = vshrl.u32 %v1621, 15
    %v1910 = vxor.u32 %v1334, %v1622
    %v1911 = vxor.u32 %v1335, %v1623
    %v1912 = vxor.u32 %v1336, %v1624
    %v1913 = vxor.u32 %v1337, %v1625
    %v1914 = vxor.u32 %v1338, %v1626
    %v1915 = vxor.u32 %v1339, %v1627
    %v1916 = vxor.u32 %v1340, %v1628
    %v1917 = vxor.u32 %v1341, %v1629
    %v1918 = vxor.u32 %v1342, %v1630
    %v1919 = vxor.u32 %v1343, %v1631
    %v1920 = vxor.u32 %v1344, %v1632
    %v1921 = vxor.u32 %v1345, %v1633
    %v1922 = vxor.u32 %v1346, %v1634
    %v1923 = vxor.u32 %v1347, %v1635
    %v1924 = vxor.u32 %v1348, %v1636
    %v1925 = vxor.u32 %v1349, %v1637
    %v1926 = vxor.u32 %v1350, %v1638
    %v1927 = vxor.u32 %v1351, %v1639
    %v1928 = vxor.u32 %v1352, %v1640
    %v1929 = vxor.u32 %v1353, %v1641
    %v1930 = vxor.u32 %v1354, %v1642
    %v1931 = vxor.u32 %v1355, %v1643
    %v1932 = vxor.u32 %v1356, %v1644
    %v1933 = vxor.u32 %v1357, %v1645
    %v1934 = vxor.u32 %v1358, %v1646
    %v1935 = vxor.u32 %v1359, %v1647
    %v1936 = vxor.u32 %v1360, %v1648
    %v1937 = vxor.u32 %v1361, %v1649
    %v1938 = vxor.u32 %v1362, %v1650
    %v1939 = vxor.u32 %v1363, %v1651
    %v1940 = vxor.u32 %v1364, %v1652
    %v1941 = vxor.u32 %v1365, %v1653
    %v1942 = vxor.u32 %v1366, %v1654
    %v1943 = vxor.u32 %v1367, %v1655
    %v1944 = vxor.u32 %v1368, %v1656
    %v1945 = vxor.u32 %v1369, %v1657
    %v1946 = vxor.u32 %v1370, %v1658
    %v1947 = vxor.u32 %v1371, %v1659
    %v1948 = vxor.u32 %v1372, %v1660
    %v1949 = vxor.u32 %v1373, %v1661
    %v1950 = vxor.u32 %v1374, %v1662
    %v1951 = vxor.u32 %v1375, %v1663
    %v1952 = vxor.u32 %v1376, %v1664
    %v1953 = vxor.u32 %v1377, %v1665
    %v1954 = vxor.u32 %v1378, %v1666
    %v1955 = vxor.u32 %v1379, %v1667
    %v1956 = vxor.u32 %v1380, %v1668
    %v1957 = vxor.u32 %v1381, %v1669
    %v1958 = vxor.u32 %v1382, %v1670
    %v1959 = vxor.u32 %v1383, %v1671
    %v1960 = vxor.u32 %v1384, %v1672
    %v1961 = vxor.u32 %v1385, %v1673
    %v1962 = vxor.u32 %v1386, %v1674
    %v1963 = vxor.u32 %v1387, %v1675
    %v1964 = vxor.u32 %v1388, %v1676
    %v1965 = vxor.u32 %v1389, %v1677
    %v1966 = vxor.u32 %v1390, %v1678
    %v1967 = vxor.u32 %v1391, %v1679
    %v1968 = vxor.u32 %v1392, %v1680
    %v1969 = vxor.u32 %v1393, %v1681
    %v1970 = vxor.u32 %v1394, %v1682
    %v1971 = vxor.u32 %v1395, %v1683
    %v1972 = vxor.u32 %v1396, %v1684
    %v1973 = vxor.u32 %v1397, %v1685
    %v1974 = vxor.u32 %v1398, %v1686
    %v1975 = vxor.u32 %v1399, %v1687
    %v1976 = vxor.u32 %v1400, %v1688
    %v1977 = vxor.u32 %v1401, %v1689
    %v1978 = vxor.u32 %v1402, %v1690
    %v1979 = vxor.u32 %v1403, %v1691
    %v1980 = vxor.u32 %v1404, %v1692
    %v1981 = vxor.u32 %v1405, %v1693
    %v1982 = vxor.u32 %v1406, %v1694
    %v1983 = vxor.u32 %v1407, %v1695
    %v1984 = vxor.u32 %v1408, %v1696
    %v1985 = vxor.u32 %v1409, %v1697
    %v1986 = vxor.u32 %v1410, %v1698
    %v1987 = vxor.u32 %v1411, %v1699
    %v1988 = vxor.u32 %v1412, %v1700
    %v1989 = vxor.u32 %v1413, %v1701
    %v1990 = vxor.u32 %v1414, %v1702
    %v1991 = vxor.u32 %v1415, %v1703
    %v1992 = vxor.u32 %v1416, %v1704
    %v1993 = vxor.u32 %v1417, %v1705
    %v1994 = vxor.u32 %v1418, %v1706
    %v1995 = vxor.u32 %v1419, %v1707
    %v1996 = vxor.u32 %v1420, %v1708
    %v1997 = vxor.u32 %v1421, %v1709
    %v1998 = vxor.u32 %v1422, %v1710
    %v1999 = vxor.u32 %v1423, %v1711
    %v2000 = vxor.u32 %v1424, %v1712
    %v2001 = vxor.u32 %v1425, %v1713
    %v2002 = vxor.u32 %v1426, %v1714
    %v2003 = vxor.u32 %v1427, %v1715
    %v2004 = vxor.u32 %v1428, %v1716
    %v2005 = vxor.u32 %v1429, %v1717
    %v2006 = vxor.u32 %v1430, %v1718
    %v2007 = vxor.u32 %v1431, %v1719
    %v2008 = vxor.u32 %v1432, %v1720
    %v2009 = vxor.u32 %v1433, %v1721
    %v2010 = vxor.u32 %v1434, %v1722
    %v2011 = vxor.u32 %v1435, %v1723
    %v2012 = vxor.u32 %v1436, %v1724
    %v2013 = vxor.u32 %v1437, %v1725
    %v2014 = vxor.u32 %v1438, %v1726
    %v2015 = vxor.u32 %v1439, %v1727
    %v2016 = vxor.u32 %v1440, %v1728
    %v2017 = vxor.u32 %v1441, %v1729
    %v2018 = vxor.u32 %v1442, %v1730
    %v2019 = vxor.u32 %v1443, %v1731
    %v2020 = vxor.u32 %v1444, %v1732
    %v2021 = vxor.u32 %v1445, %v1733
    %v2022 = vxor.u32 %v1446, %v1734
    %v2023 = vxor.u32 %v1447, %v1735
    %v2024 = vxor.u32 %v1448, %v1736
    %v2025 = vxor.u32 %v1449, %v1737
    %v2026 = vxor.u32 %v1450, %v1738
    %v2027 = vxor.u32 %v1451, %v1739
    %v2028 = vxor.u32 %v1452, %v1740
    %v2029 = vxor.u32 %v1453, %v1741
    %v2030 = vxor.u32 %v1454, %v1742
    %v2031 = vxor.u32 %v1455, %v1743
    %v2032 = vxor.u32 %v1456, %v1744
    %v2033 = vxor.u32 %v1457, %v1745
    %v2034 = vxor.u32 %v1458, %v1746
    %v2035 = vxor.u32 %v1459, %v1747
    %v2036 = vxor.u32 %v1460, %v1748
    %v2037 = vxor.u32 %v1461, %v1749
    %v2038 = vxor.u32 %v1462, %v1750
    %v2039 = vxor.u32 %v1463, %v1751
    %v2040 = vxor.u32 %v1464, %v1752
    %v2041 = vxor.u32 %v1465, %v1753
    %v2042 = vxor.u32 %v1466, %v1754
    %v2043 = vxor.u32 %v1467, %v1755
    %v2044 = vxor.u32 %v1468, %v1756
    %v2045 = vxor.u32 %v1469, %v1757
    %v2046 = vxor.u32 %v1470, %v1758
    %v2047 = vxor.u32 %v1471, %v1759
    %v2048 = vxor.u32 %v1472, %v1760
    %v2049 = vxor.u32 %v1473, %v1761
    %v2050 = vxor.u32 %v1474, %v1762
    %v2051 = vxor.u32 %v1475, %v1763
    %v2052 = vxor.u32 %v1476, %v1764
    %v2053 = vxor.u32 %v1477, %v1765
    %v2054 = vxor.u32 %v1478, %v1766
    %v2055 = vxor.u32 %v1479, %v1767
    %v2056 = vxor.u32 %v1480, %v1768
    %v2057 = vxor.u32 %v1481, %v1769
    %v2058 = vxor.u32 %v1482, %v1770
    %v2059 = vxor.u32 %v1483, %v1771
    %v2060 = vxor.u32 %v1484, %v1772
    %v2061 = vxor.u32 %v1485, %v1773
    %v2062 = vxor.u32 %v1486, %v1774
    %v2063 = vxor.u32 %v1487, %v1775
    %v2064 = vxor.u32 %v1488, %v1776
    %v2065 = vxor.u32 %v1489, %v1777
    %v2066 = vxor.u32 %v1490, %v1778
    %v2067 = vxor.u32 %v1491, %v1779
    %v2068 = vxor.u32 %v1492, %v1780
    %v2069 = vxor.u32 %v1493, %v1781
    %v2070 = vxor.u32 %v1494, %v1782
    %v2071 = vxor.u32 %v1495, %v1783
    %v2072 = vxor.u32 %v1496, %v1784
    %v2073 = vxor.u32 %v1497, %v1785
    %v2074 = vxor.u32 %v1498, %v1786
    %v2075 = vxor.u32 %v1499, %v1787
    %v2076 = vxor.u32 %v1500, %v1788
    %v2077 = vxor.u32 %v1501, %v1789
    %v2078 = vxor.u32 %v1502, %v1790
    %v2079 = vxor.u32 %v1503, %v1791
    %v2080 = vxor.u32 %v1504, %v1792
    %v2081 = vxor.u32 %v1505, %v1793
    %v2082 = vxor.u32 %v1506, %v1794
    %v2083 = vxor.u32 %v1507, %v1795
    %v2084 = vxor.u32 %v1508, %v1796
    %v2085 = vxor.u32 %v1509, %v1797
    %v2086 = vxor.u32 %v1510, %v1798
    %v2087 = vxor.u32 %v1511, %v1799
    %v2088 = vxor.u32 %v1512, %v1800
    %v2089 = vxor.u32 %v1513, %v1801
    %v2090 = vxor.u32 %v1514, %v1802
    %v2091 = vxor.u32 %v1515, %v1803
    %v2092 = vxor.u32 %v1516, %v1804
    %v2093 = vxor.u32 %v1517, %v1805
    %v2094 = vxor.u32 %v1518, %v1806
    %v2095 = vxor.u32 %v1519, %v1807
    %v2096 = vxor.u32 %v1520, %v1808
    %v2097 = vxor.u32 %v1521, %v1809
    %v2098 = vxor.u32 %v1522, %v1810
    %v2099 = vxor.u32 %v1523, %v1811
    %v2100 = vxor.u32 %v1524, %v1812
    %v2101 = vxor.u32 %v1525, %v1813
    %v2102 = vxor.u32 %v1526, %v1814
    %v2103 = vxor.u32 %v1527, %v1815
    %v2104 = vxor.u32 %v1528, %v1816
    %v2105 = vxor.u32 %v1529, %v1817
    %v2106 = vxor.u32 %v1530, %v1818
    %v2107 = vxor.u32 %v1531, %v1819
    %v2108 = vxor.u32 %v1532, %v1820
    %v2109 = vxor.u32 %v1533, %v1821
    %v2110 = vxor.u32 %v1534, %v1822
    %v2111 = vxor.u32 %v1535, %v1823
    %v2112 = vxor.u32 %v1536, %v1824
    %v2113 = vxor.u32 %v1537, %v1825
    %v2114 = vxor.u32 %v1538, %v1826
    %v2115 = vxor.u32 %v1539, %v1827
    %v2116 = vxor.u32 %v1540, %v1828
    %v2117 = vxor.u32 %v1541, %v1829
    %v2118 = vxor.u32 %v1542, %v1830
    %v2119 = vxor.u32 %v1543, %v1831
    %v2120 = vxor.u32 %v1544, %v1832
    %v2121 = vxor.u32 %v1545, %v1833
    %v2122 = vxor.u32 %v1546, %v1834
    %v2123 = vxor.u32 %v1547, %v1835
    %v2124 = vxor.u32 %v1548, %v1836
    %v2125 = vxor.u32 %v1549, %v1837
    %v2126 = vxor.u32 %v1550, %v1838
    %v2127 = vxor.u32 %v1551, %v1839
    %v2128 = vxor.u32 %v1552, %v1840
    %v2129 = vxor.u32 %v1553, %v1841
    %v2130 = vxor.u32 %v1554, %v1842
    %v2131 = vxor.u32 %v1555, %v1843
    %v2132 = vxor.u32 %v1556, %v1844
    %v2133 = vxor.u32 %v1557, %v1845
    %v2134 = vxor.u32 %v1558, %v1846
    %v2135 = vxor.u32 %v1559, %v1847
    %v2136 = vxor.u32 %v1560, %v1848
    %v2137 = vxor.u32 %v1561, %v1849
    %v2138 = vxor.u32 %v1562, %v1850
    %v2139 = vxor.u32 %v1563, %v1851
    %v2140 = vxor.u32 %v1564, %v1852
    %v2141 = vxor.u32 %v1565, %v1853
    %v2142 = vxor.u32 %v1566, %v1854
    %v2143 = vxor.u32 %v1567, %v1855
    %v2144 = vxor.u32 %v1568, %v1856
    %v2145 = vxor.u32 %v1569, %v1857
    %v2146 = vxor.u32 %v1570, %v1858
    %v2147 = vxor.u32 %v1571, %v1859
    %v2148 = vxor.u32 %v1572, %v1860
    %v2149 = vxor.u32 %v1573, %v1861
    %v2150 = vxor.u32 %v1574, %v1862
    %v2151 = vxor.u32 %v1575, %v1863
    %v2152 = vxor.u32 %v1576, %v1864
    %v2153 = vxor.u32 %v1577, %v1865
    %v2154 = vxor.u32 %v1578, %v1866
    %v2155 = vxor.u32 %v1579, %v1867
    %v2156 = vxor.u32 %v1580, %v1868
    %v2157 = vxor.u32 %v1581, %v1869
    %v2158 = vxor.u32 %v1582, %v1870
    %v2159 = vxor.u32 %v1583, %v1871
    %v2160 = vxor.u32 %v1584, %v1872
    %v2161 = vxor.u32 %v1585, %v1873
    %v2162 = vxor.u32 %v1586, %v1874
    %v2163 = vxor.u32 %v1587, %v1875
    %v2164 = vxor.u32 %v1588, %v1876
    %v2165 = vxor.u32 %v1589, %v1877
    %v2166 = vxor.u32 %v1590, %v1878
    %v2167 = vxor.u32 %v1591, %v1879
    %v2168 = vxor.u32 %v1592, %v1880
    %v2169 = vxor.u32 %v1593, %v1881
    %v2170 = vxor.u32 %v1594, %v1882
    %v2171 = vxor.u32 %v1595, %v1883
    %v2172 = vxor.u32 %v1596, %v1884
    %v2173 = vxor.u32 %v1597, %v1885
    %v2174 = vxor.u32 %v1598, %v1886
    %v2175 = vxor.u32 %v1599, %v1887
    %v2176 = vxor.u32 %v1600, %v1888
    %v2177 = vxor.u32 %v1601, %v1889
    %v2178 = vxor.u32 %v1602, %v1890
    %v2179 = vxor.u32 %v1603, %v1891
    %v2180 = vxor.u32 %v1604, %v1892
    %v2181 = vxor.u32 %v1605, %v1893
    %v2182 = vxor.u32 %v1606, %v1894
    %v2183 = vxor.u32 %v1607, %v1895
    %v2184 = vxor.u32 %v1608, %v1896
    %v2185 = vxor.u32 %v1609, %v1897
    %v2186 = vxor.u32 %v1610, %v1898
    %v2187 = vxor.u32 %v1611, %v1899
    %v2188 = vxor.u32 %v1612, %v1900
    %v2189 = vxor.u32 %v1613, %v1901
    %v2190 = vxor.u32 %v1614, %v1902
    %v2191 = vxor.u32 %v1615, %v1903
    %v2192 = vxor.u32 %v1616, %v1904
    %v2193 = vxor.u32 %v1617, %v1905
    %v2194 = vxor.u32 %v1618, %v1906
    %v2195 = vxor.u32 %v1619, %v1907
    %v2196 = vxor.u32 %v1620, %v1908
    %v2197 = vxor.u32 %v1621, %v1909
    %v2198 = vmul.u32 %v1910, 2221713035
    %v2199 = vmul.u32 %v1911, 2221713035
    %v2200 = vmul.u32 %v1912, 2221713035
    %v2201 = vmul.u32 %v1913, 2221713035
    %v2202 = vmul.u32 %v1914, 2221713035
    %v2203 = vmul.u32 %v1915, 2221713035
    %v2204 = vmul.u32 %v1916, 2221713035
    %v2205 = vmul.u32 %v1917, 2221713035
    %v2206 = vmul.u32 %v1918, 2221713035
    %v2207 = vmul.u32 %v1919, 2221713035
    %v2208 = vmul.u32 %v1920, 2221713035
    %v2209 = vmul.u32 %v1921, 2221713035
    %v2210 = vmul.u32 %v1922, 2221713035
    %v2211 = vmul.u32 %v1923, 2221713035
    %v2212 = vmul.u32 %v1924, 2221713035
    %v2213 = vmul.u32 %v1925, 2221713035
    %v2214 = vmul.u32 %v1926, 2221713035
    %v2215 = vmul.u32 %v1927, 2221713035
    %v2216 = vmul.u32 %v1928, 2221713035
    %v2217 = vmul.u32 %v1929, 2221713035
    %v2218 = vmul.u32 %v1930, 2221713035
    %v2219 = vmul.u32 %v1931, 2221713035
    %v2220 = vmul.u32 %v1932, 2221713035
    %v2221 = vmul.u32 %v1933, 2221713035
    %v2222 = vmul.u32 %v1934, 2221713035
    %v2223 = vmul.u32 %v1935, 2221713035
    %v2224 = vmul.u32 %v1936, 2221713035
    %v2225 = vmul.u32 %v1937, 2221713035
    %v2226 = vmul.u32 %v1938, 2221713035
    %v2227 = vmul.u32 %v1939, 2221713035
    %v2228 = vmul.u32 %v1940, 2221713035
    %v2229 = vmul.u32 %v1941, 2221713035
    %v2230 = vmul.u32 %v1942, 2221713035
    %v2231 = vmul.u32 %v1943, 2221713035
    %v2232 = vmul.u32 %v1944, 2221713035
    %v2233 = vmul.u32 %v1945, 2221713035
    %v2234 = vmul.u32 %v1946, 2221713035
    %v2235 = vmul.u32 %v1947, 2221713035
    %v2236 = vmul.u32 %v1948, 2221713035
    %v2237 = vmul.u32 %v1949, 2221713035
    %v2238 = vmul.u32 %v1950, 2221713035
    %v2239 = vmul.u32 %v1951, 2221713035
    %v2240 = vmul.u32 %v1952, 2221713035
    %v2241 = vmul.u32 %v1953, 2221713035
    %v2242 = vmul.u32 %v1954, 2221713035
    %v2243 = vmul.u32 %v1955, 2221713035
    %v2244 = vmul.u32 %v1956, 2221713035
    %v2245 = vmul.u32 %v1957, 2221713035
    %v2246 = vmul.u32 %v1958, 2221713035
    %v2247 = vmul.u32 %v1959, 2221713035
    %v2248 = vmul.u32 %v1960, 2221713035
    %v2249 = vmul.u32 %v1961, 2221713035
    %v2250 = vmul.u32 %v1962, 2221713035
    %v2251 = vmul.u32 %v1963, 2221713035
    %v2252 = vmul.u32 %v1964, 2221713035
    %v2253 = vmul.u32 %v1965, 2221713035
    %v2254 = vmul.u32 %v1966, 2221713035
    %v2255 = vmul.u32 %v1967, 2221713035
    %v2256 = vmul.u32 %v1968, 2221713035
    %v2257 = vmul.u32 %v1969, 2221713035
    %v2258 = vmul.u32 %v1970, 2221713035
    %v2259 = vmul.u32 %v1971, 2221713035
    %v2260 = vmul.u32 %v1972, 2221713035
    %v2261 = vmul.u32 %v1973, 2221713035
    %v2262 = vmul.u32 %v1974, 2221713035
    %v2263 = vmul.u32 %v1975, 2221713035
    %v2264 = vmul.u32 %v1976, 2221713035
    %v2265 = vmul.u32 %v1977, 2221713035
    %v2266 = vmul.u32 %v1978, 2221713035
    %v2267 = vmul.u32 %v1979, 2221713035
    %v2268 = vmul.u32 %v1980, 2221713035
    %v2269 = vmul.u32 %v1981, 2221713035
    %v2270 = vmul.u32 %v1982, 2221713035
    %v2271 = vmul.u32 %v1983, 2221713035
    %v2272 = vmul.u32 %v1984, 2221713035
    %v2273 = vmul.u32 %v1985, 2221713035
    %v2274 = vmul.u32 %v1986, 2221713035
    %v2275 = vmul.u32 %v1987, 2221713035
    %v2276 = vmul.u32 %v1988, 2221713035
    %v2277 = vmul.u32 %v1989, 2221713035
    %v2278 = vmul.u32 %v1990, 2221713035
    %v2279 = vmul.u32 %v1991, 2221713035
    %v2280 = vmul.u32 %v1992, 2221713035
    %v2281 = vmul.u32 %v1993, 2221713035
    %v2282 = vmul.u32 %v1994, 2221713035
    %v2283 = vmul.u32 %v1995, 2221713035
    %v2284 = vmul.u32 %v1996, 2221713035
    %v2285 = vmul.u32 %v1997, 2221713035
    %v2286 = vmul.u32 %v1998, 2221713035
    %v2287 = vmul.u32 %v1999, 2221713035
    %v2288 = vmul.u32 %v2000, 2221713035
    %v2289 = vmul.u32 %v2001, 2221713035
    %v2290 = vmul.u32 %v2002, 2221713035
    %v2291 = vmul.u32 %v2003, 2221713035
    %v2292 = vmul.u32 %v2004, 2221713035
    %v2293 = vmul.u32 %v2005, 2221713035
    %v2294 = vmul.u32 %v2006, 2221713035
    %v2295 = vmul.u32 %v2007, 2221713035
    %v2296 = vmul.u32 %v2008, 2221713035
    %v2297 = vmul.u32 %v2009, 2221713035
    %v2298 = vmul.u32 %v2010, 2221713035
    %v2299 = vmul.u32 %v2011, 2221713035
    %v2300 = vmul.u32 %v2012, 2221713035
    %v2301 = vmul.u32 %v2013, 2221713035
    %v2302 = vmul.u32 %v2014, 2221713035
    %v2303 = vmul.u32 %v2015, 2221713035
    %v2304 = vmul.u32 %v2016, 2221713035
    %v2305 = vmul.u32 %v2017, 2221713035
    %v2306 = vmul.u32 %v2018, 2221713035
    %v2307 = vmul.u32 %v2019, 2221713035
    %v2308 = vmul.u32 %v2020, 2221713035
    %v2309 = vmul.u32 %v2021, 2221713035
    %v2310 = vmul.u32 %v2022, 2221713035
    %v2311 = vmul.u32 %v2023, 2221713035
    %v2312 = vmul.u32 %v2024, 2221713035
    %v2313 = vmul.u32 %v2025, 2221713035
    %v2314 = vmul.u32 %v2026, 2221713035
    %v2315 = vmul.u32 %v2027, 2221713035
    %v2316 = vmul.u32 %v2028, 2221713035
    %v2317 = vmul.u32 %v2029, 2221713035
    %v2318 = vmul.u32 %v2030, 2221713035
    %v2319 = vmul.u32 %v2031, 2221713035
    %v2320 = vmul.u32 %v2032, 2221713035
    %v2321 = vmul.u32 %v2033, 2221713035
    %v2322 = vmul.u32 %v2034, 2221713035
    %v2323 = vmul.u32 %v2035, 2221713035
    %v2324 = vmul.u32 %v2036, 2221713035
    %v2325 = vmul.u32 %v2037, 2221713035
    %v2326 = vmul.u32 %v2038, 2221713035
    %v2327 = vmul.u32 %v2039, 2221713035
    %v2328 = vmul.u32 %v2040, 2221713035
    %v2329 = vmul.u32 %v2041, 2221713035
    %v2330 = vmul.u32 %v2042, 2221713035
    %v2331 = vmul.u32 %v2043, 2221713035
    %v2332 = vmul.u32 %v2044, 2221713035
    %v2333 = vmul.u32 %v2045, 2221713035
    %v2334 = vmul.u32 %v2046, 2221713035
    %v2335 = vmul.u32 %v2047, 2221713035
    %v2336 = vmul.u32 %v2048, 2221713035
    %v2337 = vmul.u32 %v2049, 2221713035
    %v2338 = vmul.u32 %v2050, 2221713035
    %v2339 = vmul.u32 %v2051, 2221713035
    %v2340 = vmul.u32 %v2052, 2221713035
    %v2341 = vmul.u32 %v2053, 2221713035
    %v2342 = vmul.u32 %v2054, 2221713035
    %v2343 = vmul.u32 %v2055, 2221713035
    %v2344 = vmul.u32 %v2056, 2221713035
    %v2345 = vmul.u32 %v2057, 2221713035
    %v2346 = vmul.u32 %v2058, 2221713035
    %v2347 = vmul.u32 %v2059, 2221713035
    %v2348 = vmul.u32 %v2060, 2221713035
    %v2349 = vmul.u32 %v2061, 2221713035
    %v2350 = vmul.u32 %v2062, 2221713035
    %v2351 = vmul.u32 %v2063, 2221713035
    %v2352 = vmul.u32 %v2064, 2221713035
    %v2353 = vmul.u32 %v2065, 2221713035
    %v2354 = vmul.u32 %v2066, 2221713035
    %v2355 = vmul.u32 %v2067, 2221713035
    %v2356 = vmul.u32 %v2068, 2221713035
    %v2357 = vmul.u32 %v2069, 2221713035
    %v2358 = vmul.u32 %v2070, 2221713035
    %v2359 = vmul.u32 %v2071, 2221713035
    %v2360 = vmul.u32 %v2072, 2221713035
    %v2361 = vmul.u32 %v2073, 2221713035
    %v2362 = vmul.u32 %v2074, 2221713035
    %v2363 = vmul.u32 %v2075, 2221713035
    %v2364 = vmul.u32 %v2076, 2221713035
    %v2365 = vmul.u32 %v2077, 2221713035
    %v2366 = vmul.u32 %v2078, 2221713035
    %v2367 = vmul.u32 %v2079, 2221713035
    %v2368 = vmul.u32 %v2080, 2221713035
    %v2369 = vmul.u32 %v2081, 2221713035
    %v2370 = vmul.u32 %v2082, 2221713035
    %v2371 = vmul.u32 %v2083, 2221713035
    %v2372 = vmul.u32 %v2084, 2221713035
    %v2373 = vmul.u32 %v2085, 2221713035
    %v2374 = vmul.u32 %v2086, 2221713035
    %v2375 = vmul.u32 %v2087, 2221713035
    %v2376 = vmul.u32 %v2088, 2221713035
    %v2377 = vmul.u32 %v2089, 2221713035
    %v2378 = vmul.u32 %v2090, 2221713035
    %v2379 = vmul.u32 %v2091, 2221713035
    %v2380 = vmul.u32 %v2092, 2221713035
    %v2381 = vmul.u32 %v2093, 2221713035
    %v2382 = vmul.u32 %v2094, 2221713035
    %v2383 = vmul.u32 %v2095, 2221713035
    %v2384 = vmul.u32 %v2096, 2221713035
    %v2385 = vmul.u32 %v2097, 2221713035
    %v2386 = vmul.u32 %v2098, 2221713035
    %v2387 = vmul.u32 %v2099, 2221713035
    %v2388 = vmul.u32 %v2100, 2221713035
    %v2389 = vmul.u32 %v2101, 2221713035
    %v2390 = vmul.u32 %v2102, 2221713035
    %v2391 = vmul.u32 %v2103, 2221713035
    %v2392 = vmul.u32 %v2104, 2221713035
    %v2393 = vmul.u32 %v2105, 2221713035
    %v2394 = vmul.u32 %v2106, 2221713035
    %v2395 = vmul.u32 %v2107, 2221713035
    %v2396 = vmul.u32 %v2108, 2221713035
    %v2397 = vmul.u32 %v2109, 2221713035
    %v2398 = vmul.u32 %v2110, 2221713035
    %v2399 = vmul.u32 %v2111, 2221713035
    %v2400 = vmul.u32 %v2112, 2221713035
    %v2401 = vmul.u32 %v2113, 2221713035
    %v2402 = vmul.u32 %v2114, 2221713035
    %v2403 = vmul.u32 %v2115, 2221713035
    %v2404 = vmul.u32 %v2116, 2221713035
    %v2405 = vmul.u32 %v2117, 2221713035
    %v2406 = vmul.u32 %v2118, 2221713035
    %v2407 = vmul.u32 %v2119, 2221713035
    %v2408 = vmul.u32 %v2120, 2221713035
    %v2409 = vmul.u32 %v2121, 2221713035
    %v2410 = vmul.u32 %v2122, 2221713035
    %v2411 = vmul.u32 %v2123, 2221713035
    %v2412 = vmul.u32 %v2124, 2221713035
    %v2413 = vmul.u32 %v2125, 2221713035
    %v2414 = vmul.u32 %v2126, 2221713035
    %v2415 = vmul.u32 %v2127, 2221713035
    %v2416 = vmul.u32 %v2128, 2221713035
    %v2417 = vmul.u32 %v2129, 2221713035
    %v2418 = vmul.u32 %v2130, 2221713035
    %v2419 = vmul.u32 %v2131, 2221713035
    %v2420 = vmul.u32 %v2132, 2221713035
    %v2421 = vmul.u32 %v2133, 2221713035
    %v2422 = vmul.u32 %v2134, 2221713035
    %v2423 = vmul.u32 %v2135, 2221713035
    %v2424 = vmul.u32 %v2136, 2221713035
    %v2425 = vmul.u32 %v2137, 2221713035
    %v2426 = vmul.u32 %v2138, 2221713035
    %v2427 = vmul.u32 %v2139, 2221713035
    %v2428 = vmul.u32 %v2140, 2221713035
    %v2429 = vmul.u32 %v2141, 2221713035
    %v2430 = vmul.u32 %v2142, 2221713035
    %v2431 = vmul.u32 %v2143, 2221713035
    %v2432 = vmul.u32 %v2144, 2221713035
    %v2433 = vmul.u32 %v2145, 2221713035
    %v2434 = vmul.u32 %v2146, 2221713035
    %v2435 = vmul.u32 %v2147, 2221713035
    %v2436 = vmul.u32 %v2148, 2221713035
    %v2437 = vmul.u32 %v2149, 2221713035
    %v2438 = vmul.u32 %v2150, 2221713035
    %v2439 = vmul.u32 %v2151, 2221713035
    %v2440 = vmul.u32 %v2152, 2221713035
    %v2441 = vmul.u32 %v2153, 2221713035
    %v2442 = vmul.u32 %v2154, 2221713035
    %v2443 = vmul.u32 %v2155, 2221713035
    %v2444 = vmul.u32 %v2156, 2221713035
    %v2445 = vmul.u32 %v2157, 2221713035
    %v2446 = vmul.u32 %v2158, 2221713035
    %v2447 = vmul.u32 %v2159, 2221713035
    %v2448 = vmul.u32 %v2160, 2221713035
    %v2449 = vmul.u32 %v2161, 2221713035
    %v2450 = vmul.u32 %v2162, 2221713035
    %v2451 = vmul.u32 %v2163, 2221713035
    %v2452 = vmul.u32 %v2164, 2221713035
    %v2453 = vmul.u32 %v2165, 2221713035
    %v2454 = vmul.u32 %v2166, 2221713035
    %v2455 = vmul.u32 %v2167, 2221713035
    %v2456 = vmul.u32 %v2168, 2221713035
    %v2457 = vmul.u32 %v2169, 2221713035
    %v2458 = vmul.u32 %v2170, 2221713035
    %v2459 = vmul.u32 %v2171, 2221713035
    %v2460 = vmul.u32 %v2172, 2221713035
    %v2461 = vmul.u32 %v2173, 2221713035
    %v2462 = vmul.u32 %v2174, 2221713035
    %v2463 = vmul.u32 %v2175, 2221713035
    %v2464 = vmul.u32 %v2176, 2221713035
    %v2465 = vmul.u32 %v2177, 2221713035
    %v2466 = vmul.u32 %v2178, 2221713035
    %v2467 = vmul.u32 %v2179, 2221713035
    %v2468 = vmul.u32 %v2180, 2221713035
    %v2469 = vmul.u32 %v2181, 2221713035
    %v2470 = vmul.u32 %v2182, 2221713035
    %v2471 = vmul.u32 %v2183, 2221713035
    %v2472 = vmul.u32 %v2184, 2221713035
    %v2473 = vmul.u32 %v2185, 2221713035
    %v2474 = vmul.u32 %v2186, 2221713035
    %v2475 = vmul.u32 %v2187, 2221713035
    %v2476 = vmul.u32 %v2188, 2221713035
    %v2477 = vmul.u32 %v2189, 2221713035
    %v2478 = vmul.u32 %v2190, 2221713035
    %v2479 = vmul.u32 %v2191, 2221713035
    %v2480 = vmul.u32 %v2192, 2221713035
    %v2481 = vmul.u32 %v2193, 2221713035
    %v2482 = vmul.u32 %v2194, 2221713035
    %v2483 = vmul.u32 %v2195, 2221713035
    %v2484 = vmul.u32 %v2196, 2221713035
    %v2485 = vmul.u32 %v2197, 2221713035
    %v2486 = vshrl.u32 %v2198, 16
    %v2487 = vshrl.u32 %v2199, 16
    %v2488 = vshrl.u32 %v2200, 16
    %v2489 = vshrl.u32 %v2201, 16
    %v2490 = vshrl.u32 %v2202, 16
    %v2491 = vshrl.u32 %v2203, 16
    %v2492 = vshrl.u32 %v2204, 16
    %v2493 = vshrl.u32 %v2205, 16
    %v2494 = vshrl.u32 %v2206, 16
    %v2495 = vshrl.u32 %v2207, 16
    %v2496 = vshrl.u32 %v2208, 16
    %v2497 = vshrl.u32 %v2209, 16
    %v2498 = vshrl.u32 %v2210, 16
    %v2499 = vshrl.u32 %v2211, 16
    %v2500 = vshrl.u32 %v2212, 16
    %v2501 = vshrl.u32 %v2213, 16
    %v2502 = vshrl.u32 %v2214, 16
    %v2503 = vshrl.u32 %v2215, 16
    %v2504 = vshrl.u32 %v2216, 16
    %v2505 = vshrl.u32 %v2217, 16
    %v2506 = vshrl.u32 %v2218, 16
    %v2507 = vshrl.u32 %v2219, 16
    %v2508 = vshrl.u32 %v2220, 16
    %v2509 = vshrl.u32 %v2221, 16
    %v2510 = vshrl.u32 %v2222, 16
    %v2511 = vshrl.u32 %v2223, 16
    %v2512 = vshrl.u32 %v2224, 16
    %v2513 = vshrl.u32 %v2225, 16
    %v2514 = vshrl.u32 %v2226, 16
    %v2515 = vshrl.u32 %v2227, 16
    %v2516 = vshrl.u32 %v2228, 16
    %v2517 = vshrl.u32 %v2229, 16
    %v2518 = vshrl.u32 %v2230, 16
    %v2519 = vshrl.u32 %v2231, 16
    %v2520 = vshrl.u32 %v2232, 16
    %v2521 = vshrl.u32 %v2233, 16
    %v2522 = vshrl.u32 %v2234, 16
    %v2523 = vshrl.u32 %v2235, 16
    %v2524 = vshrl.u32 %v2236, 16
    %v2525 = vshrl.u32 %v2237, 16
    %v2526 = vshrl.u32 %v2238, 16
    %v2527 = vshrl.u32 %v2239, 16
    %v2528 = vshrl.u32 %v2240, 16
    %v2529 = vshrl.u32 %v2241, 16
    %v2530 = vshrl.u32 %v2242, 16
    %v2531 = vshrl.u32 %v2243, 16
    %v2532 = vshrl.u32 %v2244, 16
    %v2533 = vshrl.u32 %v2245, 16
    %v2534 = vshrl.u32 %v2246, 16
    %v2535 = vshrl.u32 %v2247, 16
    %v2536 = vshrl.u32 %v2248, 16
    %v2537 = vshrl.u32 %v2249, 16
    %v2538 = vshrl.u32 %v2250, 16
    %v2539 = vshrl.u32 %v2251, 16
    %v2540 = vshrl.u32 %v2252, 16
    %v2541 = vshrl.u32 %v2253, 16
    %v2542 = vshrl.u32 %v2254, 16
    %v2543 = vshrl.u32 %v2255, 16
    %v2544 = vshrl.u32 %v2256, 16
    %v2545 = vshrl.u32 %v2257, 16
    %v2546 = vshrl.u32 %v2258, 16
    %v2547 = vshrl.u32 %v2259, 16
    %v2548 = vshrl.u32 %v2260, 16
    %v2549 = vshrl.u32 %v2261, 16
    %v2550 = vshrl.u32 %v2262, 16
    %v2551 = vshrl.u32 %v2263, 16
    %v2552 = vshrl.u32 %v2264, 16
    %v2553 = vshrl.u32 %v2265, 16
    %v2554 = vshrl.u32 %v2266, 16
    %v2555 = vshrl.u32 %v2267, 16
    %v2556 = vshrl.u32 %v2268, 16
    %v2557 = vshrl.u32 %v2269, 16
    %v2558 = vshrl.u32 %v2270, 16
    %v2559 = vshrl.u32 %v2271, 16
    %v2560 = vshrl.u32 %v2272, 16
    %v2561 = vshrl.u32 %v2273, 16
    %v2562 = vshrl.u32 %v2274, 16
    %v2563 = vshrl.u32 %v2275, 16
    %v2564 = vshrl.u32 %v2276, 16
    %v2565 = vshrl.u32 %v2277, 16
    %v2566 = vshrl.u32 %v2278, 16
    %v2567 = vshrl.u32 %v2279, 16
    %v2568 = vshrl.u32 %v2280, 16
    %v2569 = vshrl.u32 %v2281, 16
    %v2570 = vshrl.u32 %v2282, 16
    %v2571 = vshrl.u32 %v2283, 16
    %v2572 = vshrl.u32 %v2284, 16
    %v2573 = vshrl.u32 %v2285, 16
    %v2574 = vshrl.u32 %v2286, 16
    %v2575 = vshrl.u32 %v2287, 16
    %v2576 = vshrl.u32 %v2288, 16
    %v2577 = vshrl.u32 %v2289, 16
    %v2578 = vshrl.u32 %v2290, 16
    %v2579 = vshrl.u32 %v2291, 16
    %v2580 = vshrl.u32 %v2292, 16
    %v2581 = vshrl.u32 %v2293, 16
    %v2582 = vshrl.u32 %v2294, 16
    %v2583 = vshrl.u32 %v2295, 16
    %v2584 = vshrl.u32 %v2296, 16
    %v2585 = vshrl.u32 %v2297, 16
    %v2586 = vshrl.u32 %v2298, 16
    %v2587 = vshrl.u32 %v2299, 16
    %v2588 = vshrl.u32 %v2300, 16
    %v2589 = vshrl.u32 %v2301, 16
    %v2590 = vshrl.u32 %v2302, 16
    %v2591 = vshrl.u32 %v2303, 16
    %v2592 = vshrl.u32 %v2304, 16
    %v2593 = vshrl.u32 %v2305, 16
    %v2594 = vshrl.u32 %v2306, 16
    %v2595 = vshrl.u32 %v2307, 16
    %v2596 = vshrl.u32 %v2308, 16
    %v2597 = vshrl.u32 %v2309, 16
    %v2598 = vshrl.u32 %v2310, 16
    %v2599 = vshrl.u32 %v2311, 16
    %v2600 = vshrl.u32 %v2312, 16
    %v2601 = vshrl.u32 %v2313, 16
    %v2602 = vshrl.u32 %v2314, 16
    %v2603 = vshrl.u32 %v2315, 16
    %v2604 = vshrl.u32 %v2316, 16
    %v2605 = vshrl.u32 %v2317, 16
    %v2606 = vshrl.u32 %v2318, 16
    %v2607 = vshrl.u32 %v2319, 16
    %v2608 = vshrl.u32 %v2320, 16
    %v2609 = vshrl.u32 %v2321, 16
    %v2610 = vshrl.u32 %v2322, 16
    %v2611 = vshrl.u32 %v2323, 16
    %v2612 = vshrl.u32 %v2324, 16
    %v2613 = vshrl.u32 %v2325, 16
    %v2614 = vshrl.u32 %v2326, 16
    %v2615 = vshrl.u32 %v2327, 16
    %v2616 = vshrl.u32 %v2328, 16
    %v2617 = vshrl.u32 %v2329, 16
    %v2618 = vshrl.u32 %v2330, 16
    %v2619 = vshrl.u32 %v2331, 16
    %v2620 = vshrl.u32 %v2332, 16
    %v2621 = vshrl.u32 %v2333, 16
    %v2622 = vshrl.u32 %v2334, 16
    %v2623 = vshrl.u32 %v2335, 16
    %v2624 = vshrl.u32 %v2336, 16
    %v2625 = vshrl.u32 %v2337, 16
    %v2626 = vshrl.u32 %v2338, 16
    %v2627 = vshrl.u32 %v2339, 16
    %v2628 = vshrl.u32 %v2340, 16
    %v2629 = vshrl.u32 %v2341, 16
    %v2630 = vshrl.u32 %v2342, 16
    %v2631 = vshrl.u32 %v2343, 16
    %v2632 = vshrl.u32 %v2344, 16
    %v2633 = vshrl.u32 %v2345, 16
    %v2634 = vshrl.u32 %v2346, 16
    %v2635 = vshrl.u32 %v2347, 16
    %v2636 = vshrl.u32 %v2348, 16
    %v2637 = vshrl.u32 %v2349, 16
    %v2638 = vshrl.u32 %v2350, 16
    %v2639 = vshrl.u32 %v2351, 16
    %v2640 = vshrl.u32 %v2352, 16
    %v2641 = vshrl.u32 %v2353, 16
    %v2642 = vshrl.u32 %v2354, 16
    %v2643 = vshrl.u32 %v2355, 16
    %v2644 = vshrl.u32 %v2356, 16
    %v2645 = vshrl.u32 %v2357, 16
    %v2646 = vshrl.u32 %v2358, 16
    %v2647 = vshrl.u32 %v2359, 16
    %v2648 = vshrl.u32 %v2360, 16
    %v2649 = vshrl.u32 %v2361, 16
    %v2650 = vshrl.u32 %v2362, 16
    %v2651 = vshrl.u32 %v2363, 16
    %v2652 = vshrl.u32 %v2364, 16
    %v2653 = vshrl.u32 %v2365, 16
    %v2654 = vshrl.u32 %v2366, 16
    %v2655 = vshrl.u32 %v2367, 16
    %v2656 = vshrl.u32 %v2368, 16
    %v2657 = vshrl.u32 %v2369, 16
    %v2658 = vshrl.u32 %v2370, 16
    %v2659 = vshrl.u32 %v2371, 16
    %v2660 = vshrl.u32 %v2372, 16
    %v2661 = vshrl.u32 %v2373, 16
    %v2662 = vshrl.u32 %v2374, 16
    %v2663 = vshrl.u32 %v2375, 16
    %v2664 = vshrl.u32 %v2376, 16
    %v2665 = vshrl.u32 %v2377, 16
    %v2666 = vshrl.u32 %v2378, 16
    %v2667 = vshrl.u32 %v2379, 16
    %v2668 = vshrl.u32 %v2380, 16
    %v2669 = vshrl.u32 %v2381, 16
    %v2670 = vshrl.u32 %v2382, 16
    %v2671 = vshrl.u32 %v2383, 16
    %v2672 = vshrl.u32 %v2384, 16
    %v2673 = vshrl.u32 %v2385, 16
    %v2674 = vshrl.u32 %v2386, 16
    %v2675 = vshrl.u32 %v2387, 16
    %v2676 = vshrl.u32 %v2388, 16
    %v2677 = vshrl.u32 %v2389, 16
    %v2678 = vshrl.u32 %v2390, 16
    %v2679 = vshrl.u32 %v2391, 16
    %v2680 = vshrl.u32 %v2392, 16
    %v2681 = vshrl.u32 %v2393, 16
    %v2682 = vshrl.u32 %v2394, 16
    %v2683 = vshrl.u32 %v2395, 16
    %v2684 = vshrl.u32 %v2396, 16
    %v2685 = vshrl.u32 %v2397, 16
    %v2686 = vshrl.u32 %v2398, 16
    %v2687 = vshrl.u32 %v2399, 16
    %v2688 = vshrl.u32 %v2400, 16
    %v2689 = vshrl.u32 %v2401, 16
    %v2690 = vshrl.u32 %v2402, 16
    %v2691 = vshrl.u32 %v2403, 16
    %v2692 = vshrl.u32 %v2404, 16
    %v2693 = vshrl.u32 %v2405, 16
    %v2694 = vshrl.u32 %v2406, 16
    %v2695 = vshrl.u32 %v2407, 16
    %v2696 = vshrl.u32 %v2408, 16
    %v2697 = vshrl.u32 %v2409, 16
    %v2698 = vshrl.u32 %v2410, 16
    %v2699 = vshrl.u32 %v2411, 16
    %v2700 = vshrl.u32 %v2412, 16
    %v2701 = vshrl.u32 %v2413, 16
    %v2702 = vshrl.u32 %v2414, 16
    %v2703 = vshrl.u32 %v2415, 16
    %v2704 = vshrl.u32 %v2416, 16
    %v2705 = vshrl.u32 %v2417, 16
    %v2706 = vshrl.u32 %v2418, 16
    %v2707 = vshrl.u32 %v2419, 16
    %v2708 = vshrl.u32 %v2420, 16
    %v2709 = vshrl.u32 %v2421, 16
    %v2710 = vshrl.u32 %v2422, 16
    %v2711 = vshrl.u32 %v2423, 16
    %v2712 = vshrl.u32 %v2424, 16
    %v2713 = vshrl.u32 %v2425, 16
    %v2714 = vshrl.u32 %v2426, 16
    %v2715 = vshrl.u32 %v2427, 16
    %v2716 = vshrl.u32 %v2428, 16
    %v2717 = vshrl.u32 %v2429, 16
    %v2718 = vshrl.u32 %v2430, 16
    %v2719 = vshrl.u32 %v2431, 16
    %v2720 = vshrl.u32 %v2432, 16
    %v2721 = vshrl.u32 %v2433, 16
    %v2722 = vshrl.u32 %v2434, 16
    %v2723 = vshrl.u32 %v2435, 16
    %v2724 = vshrl.u32 %v2436, 16
    %v2725 = vshrl.u32 %v2437, 16
    %v2726 = vshrl.u32 %v2438, 16
    %v2727 = vshrl.u32 %v2439, 16
    %v2728 = vshrl.u32 %v2440, 16
    %v2729 = vshrl.u32 %v2441, 16
    %v2730 = vshrl.u32 %v2442, 16
    %v2731 = vshrl.u32 %v2443, 16
    %v2732 = vshrl.u32 %v2444, 16
    %v2733 = vshrl.u32 %v2445, 16
    %v2734 = vshrl.u32 %v2446, 16
    %v2735 = vshrl.u32 %v2447, 16
    %v2736 = vshrl.u32 %v2448, 16
    %v2737 = vshrl.u32 %v2449, 16
    %v2738 = vshrl.u32 %v2450, 16
    %v2739 = vshrl.u32 %v2451, 16
    %v2740 = vshrl.u32 %v2452, 16
    %v2741 = vshrl.u32 %v2453, 16
    %v2742 = vshrl.u32 %v2454, 16
    %v2743 = vshrl.u32 %v2455, 16
    %v2744 = vshrl.u32 %v2456, 16
    %v2745 = vshrl.u32 %v2457, 16
    %v2746 = vshrl.u32 %v2458, 16
    %v2747 = vshrl.u32 %v2459, 16
    %v2748 = vshrl.u32 %v2460, 16
    %v2749 = vshrl.u32 %v2461, 16
    %v2750 = vshrl.u32 %v2462, 16
    %v2751 = vshrl.u32 %v2463, 16
    %v2752 = vshrl.u32 %v2464, 16
    %v2753 = vshrl.u32 %v2465, 16
    %v2754 = vshrl.u32 %v2466, 16
    %v2755 = vshrl.u32 %v2467, 16
    %v2756 = vshrl.u32 %v2468, 16
    %v2757 = vshrl.u32 %v2469, 16
    %v2758 = vshrl.u32 %v2470, 16
    %v2759 = vshrl.u32 %v2471, 16
    %v2760 = vshrl.u32 %v2472, 16
    %v2761 = vshrl.u32 %v2473, 16
    %v2762 = vshrl.u32 %v2474, 16
    %v2763 = vshrl.u32 %v2475, 16
    %v2764 = vshrl.u32 %v2476, 16
    %v2765 = vshrl.u32 %v2477, 16
    %v2766 = vshrl.u32 %v2478, 16
    %v2767 = vshrl.u32 %v2479, 16
    %v2768 = vshrl.u32 %v2480, 16
    %v2769 = vshrl.u32 %v2481, 16
    %v2770 = vshrl.u32 %v2482, 16
    %v2771 = vshrl.u32 %v2483, 16
    %v2772 = vshrl.u32 %v2484, 16
    %v2773 = vshrl.u32 %v2485, 16
    %v2774 = vxor.u32 %v2198, %v2486
    %v2775 = vxor.u32 %v2199, %v2487
    %v2776 = vxor.u32 %v2200, %v2488
    %v2777 = vxor.u32 %v2201, %v2489
    %v2778 = vxor.u32 %v2202, %v2490
    %v2779 = vxor.u32 %v2203, %v2491
    %v2780 = vxor.u32 %v2204, %v2492
    %v2781 = vxor.u32 %v2205, %v2493
    %v2782 = vxor.u32 %v2206, %v2494
    %v2783 = vxor.u32 %v2207, %v2495
    %v2784 = vxor.u32 %v2208, %v2496
    %v2785 = vxor.u32 %v2209, %v2497
    %v2786 = vxor.u32 %v2210, %v2498
    %v2787 = vxor.u32 %v2211, %v2499
    %v2788 = vxor.u32 %v2212, %v2500
    %v2789 = vxor.u32 %v2213, %v2501
    %v2790 = vxor.u32 %v2214, %v2502
    %v2791 = vxor.u32 %v2215, %v2503
    %v2792 = vxor.u32 %v2216, %v2504
    %v2793 = vxor.u32 %v2217, %v2505
    %v2794 = vxor.u32 %v2218, %v2506
    %v2795 = vxor.u32 %v2219, %v2507
    %v2796 = vxor.u32 %v2220, %v2508
    %v2797 = vxor.u32 %v2221, %v2509
    %v2798 = vxor.u32 %v2222, %v2510
    %v2799 = vxor.u32 %v2223, %v2511
    %v2800 = vxor.u32 %v2224, %v2512
    %v2801 = vxor.u32 %v2225, %v2513
    %v2802 = vxor.u32 %v2226, %v2514
    %v2803 = vxor.u32 %v2227, %v2515
    %v2804 = vxor.u32 %v2228, %v2516
    %v2805 = vxor.u32 %v2229, %v2517
    %v2806 = vxor.u32 %v2230, %v2518
    %v2807 = vxor.u32 %v2231, %v2519
    %v2808 = vxor.u32 %v2232, %v2520
    %v2809 = vxor.u32 %v2233, %v2521
    %v2810 = vxor.u32 %v2234, %v2522
    %v2811 = vxor.u32 %v2235, %v2523
    %v2812 = vxor.u32 %v2236, %v2524
    %v2813 = vxor.u32 %v2237, %v2525
    %v2814 = vxor.u32 %v2238, %v2526
    %v2815 = vxor.u32 %v2239, %v2527
    %v2816 = vxor.u32 %v2240, %v2528
    %v2817 = vxor.u32 %v2241, %v2529
    %v2818 = vxor.u32 %v2242, %v2530
    %v2819 = vxor.u32 %v2243, %v2531
    %v2820 = vxor.u32 %v2244, %v2532
    %v2821 = vxor.u32 %v2245, %v2533
    %v2822 = vxor.u32 %v2246, %v2534
    %v2823 = vxor.u32 %v2247, %v2535
    %v2824 = vxor.u32 %v2248, %v2536
    %v2825 = vxor.u32 %v2249, %v2537
    %v2826 = vxor.u32 %v2250, %v2538
    %v2827 = vxor.u32 %v2251, %v2539
    %v2828 = vxor.u32 %v2252, %v2540
    %v2829 = vxor.u32 %v2253, %v2541
    %v2830 = vxor.u32 %v2254, %v2542
    %v2831 = vxor.u32 %v2255, %v2543
    %v2832 = vxor.u32 %v2256, %v2544
    %v2833 = vxor.u32 %v2257, %v2545
    %v2834 = vxor.u32 %v2258, %v2546
    %v2835 = vxor.u32 %v2259, %v2547
    %v2836 = vxor.u32 %v2260, %v2548
    %v2837 = vxor.u32 %v2261, %v2549
    %v2838 = vxor.u32 %v2262, %v2550
    %v2839 = vxor.u32 %v2263, %v2551
    %v2840 = vxor.u32 %v2264, %v2552
    %v2841 = vxor.u32 %v2265, %v2553
    %v2842 = vxor.u32 %v2266, %v2554
    %v2843 = vxor.u32 %v2267, %v2555
    %v2844 = vxor.u32 %v2268, %v2556
    %v2845 = vxor.u32 %v2269, %v2557
    %v2846 = vxor.u32 %v2270, %v2558
    %v2847 = vxor.u32 %v2271, %v2559
    %v2848 = vxor.u32 %v2272, %v2560
    %v2849 = vxor.u32 %v2273, %v2561
    %v2850 = vxor.u32 %v2274, %v2562
    %v2851 = vxor.u32 %v2275, %v2563
    %v2852 = vxor.u32 %v2276, %v2564
    %v2853 = vxor.u32 %v2277, %v2565
    %v2854 = vxor.u32 %v2278, %v2566
    %v2855 = vxor.u32 %v2279, %v2567
    %v2856 = vxor.u32 %v2280, %v2568
    %v2857 = vxor.u32 %v2281, %v2569
    %v2858 = vxor.u32 %v2282, %v2570
    %v2859 = vxor.u32 %v2283, %v2571
    %v2860 = vxor.u32 %v2284, %v2572
    %v2861 = vxor.u32 %v2285, %v2573
    %v2862 = vxor.u32 %v2286, %v2574
    %v2863 = vxor.u32 %v2287, %v2575
    %v2864 = vxor.u32 %v2288, %v2576
    %v2865 = vxor.u32 %v2289, %v2577
    %v2866 = vxor.u32 %v2290, %v2578
    %v2867 = vxor.u32 %v2291, %v2579
    %v2868 = vxor.u32 %v2292, %v2580
    %v2869 = vxor.u32 %v2293, %v2581
    %v2870 = vxor.u32 %v2294, %v2582
    %v2871 = vxor.u32 %v2295, %v2583
    %v2872 = vxor.u32 %v2296, %v2584
    %v2873 = vxor.u32 %v2297, %v2585
    %v2874 = vxor.u32 %v2298, %v2586
    %v2875 = vxor.u32 %v2299, %v2587
    %v2876 = vxor.u32 %v2300, %v2588
    %v2877 = vxor.u32 %v2301, %v2589
    %v2878 = vxor.u32 %v2302, %v2590
    %v2879 = vxor.u32 %v2303, %v2591
    %v2880 = vxor.u32 %v2304, %v2592
    %v2881 = vxor.u32 %v2305, %v2593
    %v2882 = vxor.u32 %v2306, %v2594
    %v2883 = vxor.u32 %v2307, %v2595
    %v2884 = vxor.u32 %v2308, %v2596
    %v2885 = vxor.u32 %v2309, %v2597
    %v2886 = vxor.u32 %v2310, %v2598
    %v2887 = vxor.u32 %v2311, %v2599
    %v2888 = vxor.u32 %v2312, %v2600
    %v2889 = vxor.u32 %v2313, %v2601
    %v2890 = vxor.u32 %v2314, %v2602
    %v2891 = vxor.u32 %v2315, %v2603
    %v2892 = vxor.u32 %v2316, %v2604
    %v2893 = vxor.u32 %v2317, %v2605
    %v2894 = vxor.u32 %v2318, %v2606
    %v2895 = vxor.u32 %v2319, %v2607
    %v2896 = vxor.u32 %v2320, %v2608
    %v2897 = vxor.u32 %v2321, %v2609
    %v2898 = vxor.u32 %v2322, %v2610
    %v2899 = vxor.u32 %v2323, %v2611
    %v2900 = vxor.u32 %v2324, %v2612
    %v2901 = vxor.u32 %v2325, %v2613
    %v2902 = vxor.u32 %v2326, %v2614
    %v2903 = vxor.u32 %v2327, %v2615
    %v2904 = vxor.u32 %v2328, %v2616
    %v2905 = vxor.u32 %v2329, %v2617
    %v2906 = vxor.u32 %v2330, %v2618
    %v2907 = vxor.u32 %v2331, %v2619
    %v2908 = vxor.u32 %v2332, %v2620
    %v2909 = vxor.u32 %v2333, %v2621
    %v2910 = vxor.u32 %v2334, %v2622
    %v2911 = vxor.u32 %v2335, %v2623
    %v2912 = vxor.u32 %v2336, %v2624
    %v2913 = vxor.u32 %v2337, %v2625
    %v2914 = vxor.u32 %v2338, %v2626
    %v2915 = vxor.u32 %v2339, %v2627
    %v2916 = vxor.u32 %v2340, %v2628
    %v2917 = vxor.u32 %v2341, %v2629
    %v2918 = vxor.u32 %v2342, %v2630
    %v2919 = vxor.u32 %v2343, %v2631
    %v2920 = vxor.u32 %v2344, %v2632
    %v2921 = vxor.u32 %v2345, %v2633
    %v2922 = vxor.u32 %v2346, %v2634
    %v2923 = vxor.u32 %v2347, %v2635
    %v2924 = vxor.u32 %v2348, %v2636
    %v2925 = vxor.u32 %v2349, %v2637
    %v2926 = vxor.u32 %v2350, %v2638
    %v2927 = vxor.u32 %v2351, %v2639
    %v2928 = vxor.u32 %v2352, %v2640
    %v2929 = vxor.u32 %v2353, %v2641
    %v2930 = vxor.u32 %v2354, %v2642
    %v2931 = vxor.u32 %v2355, %v2643
    %v2932 = vxor.u32 %v2356, %v2644
    %v2933 = vxor.u32 %v2357, %v2645
    %v2934 = vxor.u32 %v2358, %v2646
    %v2935 = vxor.u32 %v2359, %v2647
    %v2936 = vxor.u32 %v2360, %v2648
    %v2937 = vxor.u32 %v2361, %v2649
    %v2938 = vxor.u32 %v2362, %v2650
    %v2939 = vxor.u32 %v2363, %v2651
    %v2940 = vxor.u32 %v2364, %v2652
    %v2941 = vxor.u32 %v2365, %v2653
    %v2942 = vxor.u32 %v2366, %v2654
    %v2943 = vxor.u32 %v2367, %v2655
    %v2944 = vxor.u32 %v2368, %v2656
    %v2945 = vxor.u32 %v2369, %v2657
    %v2946 = vxor.u32 %v2370, %v2658
    %v2947 = vxor.u32 %v2371, %v2659
    %v2948 = vxor.u32 %v2372, %v2660
    %v2949 = vxor.u32 %v2373, %v2661
    %v2950 = vxor.u32 %v2374, %v2662
    %v2951 = vxor.u32 %v2375, %v2663
    %v2952 = vxor.u32 %v2376, %v2664
    %v2953 = vxor.u32 %v2377, %v2665
    %v2954 = vxor.u32 %v2378, %v2666
    %v2955 = vxor.u32 %v2379, %v2667
    %v2956 = vxor.u32 %v2380, %v2668
    %v2957 = vxor.u32 %v2381, %v2669
    %v2958 = vxor.u32 %v2382, %v2670
    %v2959 = vxor.u32 %v2383, %v2671
    %v2960 = vxor.u32 %v2384, %v2672
    %v2961 = vxor.u32 %v2385, %v2673
    %v2962 = vxor.u32 %v2386, %v2674
    %v2963 = vxor.u32 %v2387, %v2675
    %v2964 = vxor.u32 %v2388, %v2676
    %v2965 = vxor.u32 %v2389, %v2677
    %v2966 = vxor.u32 %v2390, %v2678
    %v2967 = vxor.u32 %v2391, %v2679
    %v2968 = vxor.u32 %v2392, %v2680
    %v2969 = vxor.u32 %v2393, %v2681
    %v2970 = vxor.u32 %v2394, %v2682
    %v2971 = vxor.u32 %v2395, %v2683
    %v2972 = vxor.u32 %v2396, %v2684
    %v2973 = vxor.u32 %v2397, %v2685
    %v2974 = vxor.u32 %v2398, %v2686
    %v2975 = vxor.u32 %v2399, %v2687
    %v2976 = vxor.u32 %v2400, %v2688
    %v2977 = vxor.u32 %v2401, %v2689
    %v2978 = vxor.u32 %v2402, %v2690
    %v2979 = vxor.u32 %v2403, %v2691
    %v2980 = vxor.u32 %v2404, %v2692
    %v2981 = vxor.u32 %v2405, %v2693
    %v2982 = vxor.u32 %v2406, %v2694
    %v2983 = vxor.u32 %v2407, %v2695
    %v2984 = vxor.u32 %v2408, %v2696
    %v2985 = vxor.u32 %v2409, %v2697
    %v2986 = vxor.u32 %v2410, %v2698
    %v2987 = vxor.u32 %v2411, %v2699
    %v2988 = vxor.u32 %v2412, %v2700
    %v2989 = vxor.u32 %v2413, %v2701
    %v2990 = vxor.u32 %v2414, %v2702
    %v2991 = vxor.u32 %v2415, %v2703
    %v2992 = vxor.u32 %v2416, %v2704
    %v2993 = vxor.u32 %v2417, %v2705
    %v2994 = vxor.u32 %v2418, %v2706
    %v2995 = vxor.u32 %v2419, %v2707
    %v2996 = vxor.u32 %v2420, %v2708
    %v2997 = vxor.u32 %v2421, %v2709
    %v2998 = vxor.u32 %v2422, %v2710
    %v2999 = vxor.u32 %v2423, %v2711
    %v3000 = vxor.u32 %v2424, %v2712
    %v3001 = vxor.u32 %v2425, %v2713
    %v3002 = vxor.u32 %v2426, %v2714
    %v3003 = vxor.u32 %v2427, %v2715
    %v3004 = vxor.u32 %v2428, %v2716
    %v3005 = vxor.u32 %v2429, %v2717
    %v3006 = vxor.u32 %v2430, %v2718
    %v3007 = vxor.u32 %v2431, %v2719
    %v3008 = vxor.u32 %v2432, %v2720
    %v3009 = vxor.u32 %v2433, %v2721
    %v3010 = vxor.u32 %v2434, %v2722
    %v3011 = vxor.u32 %v2435, %v2723
    %v3012 = vxor.u32 %v2436, %v2724
    %v3013 = vxor.u32 %v2437, %v2725
    %v3014 = vxor.u32 %v2438, %v2726
    %v3015 = vxor.u32 %v2439, %v2727
    %v3016 = vxor.u32 %v2440, %v2728
    %v3017 = vxor.u32 %v2441, %v2729
    %v3018 = vxor.u32 %v2442, %v2730
    %v3019 = vxor.u32 %v2443, %v2731
    %v3020 = vxor.u32 %v2444, %v2732
    %v3021 = vxor.u32 %v2445, %v2733
    %v3022 = vxor.u32 %v2446, %v2734
    %v3023 = vxor.u32 %v2447, %v2735
    %v3024 = vxor.u32 %v2448, %v2736
    %v3025 = vxor.u32 %v2449, %v2737
    %v3026 = vxor.u32 %v2450, %v2738
    %v3027 = vxor.u32 %v2451, %v2739
    %v3028 = vxor.u32 %v2452, %v2740
    %v3029 = vxor.u32 %v2453, %v2741
    %v3030 = vxor.u32 %v2454, %v2742
    %v3031 = vxor.u32 %v2455, %v2743
    %v3032 = vxor.u32 %v2456, %v2744
    %v3033 = vxor.u32 %v2457, %v2745
    %v3034 = vxor.u32 %v2458, %v2746
    %v3035 = vxor.u32 %v2459, %v2747
    %v3036 = vxor.u32 %v2460, %v2748
    %v3037 = vxor.u32 %v2461, %v2749
    %v3038 = vxor.u32 %v2462, %v2750
    %v3039 = vxor.u32 %v2463, %v2751
    %v3040 = vxor.u32 %v2464, %v2752
    %v3041 = vxor.u32 %v2465, %v2753
    %v3042 = vxor.u32 %v2466, %v2754
    %v3043 = vxor.u32 %v2467, %v2755
    %v3044 = vxor.u32 %v2468, %v2756
    %v3045 = vxor.u32 %v2469, %v2757
    %v3046 = vxor.u32 %v2470, %v2758
    %v3047 = vxor.u32 %v2471, %v2759
    %v3048 = vxor.u32 %v2472, %v2760
    %v3049 = vxor.u32 %v2473, %v2761
    %v3050 = vxor.u32 %v2474, %v2762
    %v3051 = vxor.u32 %v2475, %v2763
    %v3052 = vxor.u32 %v2476, %v2764
    %v3053 = vxor.u32 %v2477, %v2765
    %v3054 = vxor.u32 %v2478, %v2766
    %v3055 = vxor.u32 %v2479, %v2767
    %v3056 = vxor.u32 %v2480, %v2768
    %v3057 = vxor.u32 %v2481, %v2769
    %v3058 = vxor.u32 %v2482, %v2770
    %v3059 = vxor.u32 %v2483, %v2771
    %v3060 = vxor.u32 %v2484, %v2772
    %v3061 = vxor.u32 %v2485, %v2773
    %vm3062 = vcmp.ge.u32.totalorder %v2774, 429496730
    %vm3063 = vcmp.ge.u32.totalorder %v2775, 429496730
    %vm3064 = vcmp.ge.u32.totalorder %v2776, 429496730
    %vm3065 = vcmp.ge.u32.totalorder %v2777, 429496730
    %vm3066 = vcmp.ge.u32.totalorder %v2778, 429496730
    %vm3067 = vcmp.ge.u32.totalorder %v2779, 429496730
    %vm3068 = vcmp.ge.u32.totalorder %v2780, 429496730
    %vm3069 = vcmp.ge.u32.totalorder %v2781, 429496730
    %vm3070 = vcmp.ge.u32.totalorder %v2782, 429496730
    %vm3071 = vcmp.ge.u32.totalorder %v2783, 429496730
    %vm3072 = vcmp.ge.u32.totalorder %v2784, 429496730
    %vm3073 = vcmp.ge.u32.totalorder %v2785, 429496730
    %vm3074 = vcmp.ge.u32.totalorder %v2786, 429496730
    %vm3075 = vcmp.ge.u32.totalorder %v2787, 429496730
    %vm3076 = vcmp.ge.u32.totalorder %v2788, 429496730
    %vm3077 = vcmp.ge.u32.totalorder %v2789, 429496730
    %vm3078 = vcmp.ge.u32.totalorder %v2790, 429496730
    %vm3079 = vcmp.ge.u32.totalorder %v2791, 429496730
    %vm3080 = vcmp.ge.u32.totalorder %v2792, 429496730
    %vm3081 = vcmp.ge.u32.totalorder %v2793, 429496730
    %vm3082 = vcmp.ge.u32.totalorder %v2794, 429496730
    %vm3083 = vcmp.ge.u32.totalorder %v2795, 429496730
    %vm3084 = vcmp.ge.u32.totalorder %v2796, 429496730
    %vm3085 = vcmp.ge.u32.totalorder %v2797, 429496730
    %vm3086 = vcmp.ge.u32.totalorder %v2798, 429496730
    %vm3087 = vcmp.ge.u32.totalorder %v2799, 429496730
    %vm3088 = vcmp.ge.u32.totalorder %v2800, 429496730
    %vm3089 = vcmp.ge.u32.totalorder %v2801, 429496730
    %vm3090 = vcmp.ge.u32.totalorder %v2802, 429496730
    %vm3091 = vcmp.ge.u32.totalorder %v2803, 429496730
    %vm3092 = vcmp.ge.u32.totalorder %v2804, 429496730
    %vm3093 = vcmp.ge.u32.totalorder %v2805, 429496730
    %vm3094 = vcmp.ge.u32.totalorder %v2806, 429496730
    %vm3095 = vcmp.ge.u32.totalorder %v2807, 429496730
    %vm3096 = vcmp.ge.u32.totalorder %v2808, 429496730
    %vm3097 = vcmp.ge.u32.totalorder %v2809, 429496730
    %vm3098 = vcmp.ge.u32.totalorder %v2810, 429496730
    %vm3099 = vcmp.ge.u32.totalorder %v2811, 429496730
    %vm3100 = vcmp.ge.u32.totalorder %v2812, 429496730
    %vm3101 = vcmp.ge.u32.totalorder %v2813, 429496730
    %vm3102 = vcmp.ge.u32.totalorder %v2814, 429496730
    %vm3103 = vcmp.ge.u32.totalorder %v2815, 429496730
    %vm3104 = vcmp.ge.u32.totalorder %v2816, 429496730
    %vm3105 = vcmp.ge.u32.totalorder %v2817, 429496730
    %vm3106 = vcmp.ge.u32.totalorder %v2818, 429496730
    %vm3107 = vcmp.ge.u32.totalorder %v2819, 429496730
    %vm3108 = vcmp.ge.u32.totalorder %v2820, 429496730
    %vm3109 = vcmp.ge.u32.totalorder %v2821, 429496730
    %vm3110 = vcmp.ge.u32.totalorder %v2822, 429496730
    %vm3111 = vcmp.ge.u32.totalorder %v2823, 429496730
    %vm3112 = vcmp.ge.u32.totalorder %v2824, 429496730
    %vm3113 = vcmp.ge.u32.totalorder %v2825, 429496730
    %vm3114 = vcmp.ge.u32.totalorder %v2826, 429496730
    %vm3115 = vcmp.ge.u32.totalorder %v2827, 429496730
    %vm3116 = vcmp.ge.u32.totalorder %v2828, 429496730
    %vm3117 = vcmp.ge.u32.totalorder %v2829, 429496730
    %vm3118 = vcmp.ge.u32.totalorder %v2830, 429496730
    %vm3119 = vcmp.ge.u32.totalorder %v2831, 429496730
    %vm3120 = vcmp.ge.u32.totalorder %v2832, 429496730
    %vm3121 = vcmp.ge.u32.totalorder %v2833, 429496730
    %vm3122 = vcmp.ge.u32.totalorder %v2834, 429496730
    %vm3123 = vcmp.ge.u32.totalorder %v2835, 429496730
    %vm3124 = vcmp.ge.u32.totalorder %v2836, 429496730
    %vm3125 = vcmp.ge.u32.totalorder %v2837, 429496730
    %vm3126 = vcmp.ge.u32.totalorder %v2838, 429496730
    %vm3127 = vcmp.ge.u32.totalorder %v2839, 429496730
    %vm3128 = vcmp.ge.u32.totalorder %v2840, 429496730
    %vm3129 = vcmp.ge.u32.totalorder %v2841, 429496730
    %vm3130 = vcmp.ge.u32.totalorder %v2842, 429496730
    %vm3131 = vcmp.ge.u32.totalorder %v2843, 429496730
    %vm3132 = vcmp.ge.u32.totalorder %v2844, 429496730
    %vm3133 = vcmp.ge.u32.totalorder %v2845, 429496730
    %vm3134 = vcmp.ge.u32.totalorder %v2846, 429496730
    %vm3135 = vcmp.ge.u32.totalorder %v2847, 429496730
    %vm3136 = vcmp.ge.u32.totalorder %v2848, 429496730
    %vm3137 = vcmp.ge.u32.totalorder %v2849, 429496730
    %vm3138 = vcmp.ge.u32.totalorder %v2850, 429496730
    %vm3139 = vcmp.ge.u32.totalorder %v2851, 429496730
    %vm3140 = vcmp.ge.u32.totalorder %v2852, 429496730
    %vm3141 = vcmp.ge.u32.totalorder %v2853, 429496730
    %vm3142 = vcmp.ge.u32.totalorder %v2854, 429496730
    %vm3143 = vcmp.ge.u32.totalorder %v2855, 429496730
    %vm3144 = vcmp.ge.u32.totalorder %v2856, 429496730
    %vm3145 = vcmp.ge.u32.totalorder %v2857, 429496730
    %vm3146 = vcmp.ge.u32.totalorder %v2858, 429496730
    %vm3147 = vcmp.ge.u32.totalorder %v2859, 429496730
    %vm3148 = vcmp.ge.u32.totalorder %v2860, 429496730
    %vm3149 = vcmp.ge.u32.totalorder %v2861, 429496730
    %vm3150 = vcmp.ge.u32.totalorder %v2862, 429496730
    %vm3151 = vcmp.ge.u32.totalorder %v2863, 429496730
    %vm3152 = vcmp.ge.u32.totalorder %v2864, 429496730
    %vm3153 = vcmp.ge.u32.totalorder %v2865, 429496730
    %vm3154 = vcmp.ge.u32.totalorder %v2866, 429496730
    %vm3155 = vcmp.ge.u32.totalorder %v2867, 429496730
    %vm3156 = vcmp.ge.u32.totalorder %v2868, 429496730
    %vm3157 = vcmp.ge.u32.totalorder %v2869, 429496730
    %vm3158 = vcmp.ge.u32.totalorder %v2870, 429496730
    %vm3159 = vcmp.ge.u32.totalorder %v2871, 429496730
    %vm3160 = vcmp.ge.u32.totalorder %v2872, 429496730
    %vm3161 = vcmp.ge.u32.totalorder %v2873, 429496730
    %vm3162 = vcmp.ge.u32.totalorder %v2874, 429496730
    %vm3163 = vcmp.ge.u32.totalorder %v2875, 429496730
    %vm3164 = vcmp.ge.u32.totalorder %v2876, 429496730
    %vm3165 = vcmp.ge.u32.totalorder %v2877, 429496730
    %vm3166 = vcmp.ge.u32.totalorder %v2878, 429496730
    %vm3167 = vcmp.ge.u32.totalorder %v2879, 429496730
    %vm3168 = vcmp.ge.u32.totalorder %v2880, 429496730
    %vm3169 = vcmp.ge.u32.totalorder %v2881, 429496730
    %vm3170 = vcmp.ge.u32.totalorder %v2882, 429496730
    %vm3171 = vcmp.ge.u32.totalorder %v2883, 429496730
    %vm3172 = vcmp.ge.u32.totalorder %v2884, 429496730
    %vm3173 = vcmp.ge.u32.totalorder %v2885, 429496730
    %vm3174 = vcmp.ge.u32.totalorder %v2886, 429496730
    %vm3175 = vcmp.ge.u32.totalorder %v2887, 429496730
    %vm3176 = vcmp.ge.u32.totalorder %v2888, 429496730
    %vm3177 = vcmp.ge.u32.totalorder %v2889, 429496730
    %vm3178 = vcmp.ge.u32.totalorder %v2890, 429496730
    %vm3179 = vcmp.ge.u32.totalorder %v2891, 429496730
    %vm3180 = vcmp.ge.u32.totalorder %v2892, 429496730
    %vm3181 = vcmp.ge.u32.totalorder %v2893, 429496730
    %vm3182 = vcmp.ge.u32.totalorder %v2894, 429496730
    %vm3183 = vcmp.ge.u32.totalorder %v2895, 429496730
    %vm3184 = vcmp.ge.u32.totalorder %v2896, 429496730
    %vm3185 = vcmp.ge.u32.totalorder %v2897, 429496730
    %vm3186 = vcmp.ge.u32.totalorder %v2898, 429496730
    %vm3187 = vcmp.ge.u32.totalorder %v2899, 429496730
    %vm3188 = vcmp.ge.u32.totalorder %v2900, 429496730
    %vm3189 = vcmp.ge.u32.totalorder %v2901, 429496730
    %vm3190 = vcmp.ge.u32.totalorder %v2902, 429496730
    %vm3191 = vcmp.ge.u32.totalorder %v2903, 429496730
    %vm3192 = vcmp.ge.u32.totalorder %v2904, 429496730
    %vm3193 = vcmp.ge.u32.totalorder %v2905, 429496730
    %vm3194 = vcmp.ge.u32.totalorder %v2906, 429496730
    %vm3195 = vcmp.ge.u32.totalorder %v2907, 429496730
    %vm3196 = vcmp.ge.u32.totalorder %v2908, 429496730
    %vm3197 = vcmp.ge.u32.totalorder %v2909, 429496730
    %vm3198 = vcmp.ge.u32.totalorder %v2910, 429496730
    %vm3199 = vcmp.ge.u32.totalorder %v2911, 429496730
    %vm3200 = vcmp.ge.u32.totalorder %v2912, 429496730
    %vm3201 = vcmp.ge.u32.totalorder %v2913, 429496730
    %vm3202 = vcmp.ge.u32.totalorder %v2914, 429496730
    %vm3203 = vcmp.ge.u32.totalorder %v2915, 429496730
    %vm3204 = vcmp.ge.u32.totalorder %v2916, 429496730
    %vm3205 = vcmp.ge.u32.totalorder %v2917, 429496730
    %vm3206 = vcmp.ge.u32.totalorder %v2918, 429496730
    %vm3207 = vcmp.ge.u32.totalorder %v2919, 429496730
    %vm3208 = vcmp.ge.u32.totalorder %v2920, 429496730
    %vm3209 = vcmp.ge.u32.totalorder %v2921, 429496730
    %vm3210 = vcmp.ge.u32.totalorder %v2922, 429496730
    %vm3211 = vcmp.ge.u32.totalorder %v2923, 429496730
    %vm3212 = vcmp.ge.u32.totalorder %v2924, 429496730
    %vm3213 = vcmp.ge.u32.totalorder %v2925, 429496730
    %vm3214 = vcmp.ge.u32.totalorder %v2926, 429496730
    %vm3215 = vcmp.ge.u32.totalorder %v2927, 429496730
    %vm3216 = vcmp.ge.u32.totalorder %v2928, 429496730
    %vm3217 = vcmp.ge.u32.totalorder %v2929, 429496730
    %vm3218 = vcmp.ge.u32.totalorder %v2930, 429496730
    %vm3219 = vcmp.ge.u32.totalorder %v2931, 429496730
    %vm3220 = vcmp.ge.u32.totalorder %v2932, 429496730
    %vm3221 = vcmp.ge.u32.totalorder %v2933, 429496730
    %vm3222 = vcmp.ge.u32.totalorder %v2934, 429496730
    %vm3223 = vcmp.ge.u32.totalorder %v2935, 429496730
    %vm3224 = vcmp.ge.u32.totalorder %v2936, 429496730
    %vm3225 = vcmp.ge.u32.totalorder %v2937, 429496730
    %vm3226 = vcmp.ge.u32.totalorder %v2938, 429496730
    %vm3227 = vcmp.ge.u32.totalorder %v2939, 429496730
    %vm3228 = vcmp.ge.u32.totalorder %v2940, 429496730
    %vm3229 = vcmp.ge.u32.totalorder %v2941, 429496730
    %vm3230 = vcmp.ge.u32.totalorder %v2942, 429496730
    %vm3231 = vcmp.ge.u32.totalorder %v2943, 429496730
    %vm3232 = vcmp.ge.u32.totalorder %v2944, 429496730
    %vm3233 = vcmp.ge.u32.totalorder %v2945, 429496730
    %vm3234 = vcmp.ge.u32.totalorder %v2946, 429496730
    %vm3235 = vcmp.ge.u32.totalorder %v2947, 429496730
    %vm3236 = vcmp.ge.u32.totalorder %v2948, 429496730
    %vm3237 = vcmp.ge.u32.totalorder %v2949, 429496730
    %vm3238 = vcmp.ge.u32.totalorder %v2950, 429496730
    %vm3239 = vcmp.ge.u32.totalorder %v2951, 429496730
    %vm3240 = vcmp.ge.u32.totalorder %v2952, 429496730
    %vm3241 = vcmp.ge.u32.totalorder %v2953, 429496730
    %vm3242 = vcmp.ge.u32.totalorder %v2954, 429496730
    %vm3243 = vcmp.ge.u32.totalorder %v2955, 429496730
    %vm3244 = vcmp.ge.u32.totalorder %v2956, 429496730
    %vm3245 = vcmp.ge.u32.totalorder %v2957, 429496730
    %vm3246 = vcmp.ge.u32.totalorder %v2958, 429496730
    %vm3247 = vcmp.ge.u32.totalorder %v2959, 429496730
    %vm3248 = vcmp.ge.u32.totalorder %v2960, 429496730
    %vm3249 = vcmp.ge.u32.totalorder %v2961, 429496730
    %vm3250 = vcmp.ge.u32.totalorder %v2962, 429496730
    %vm3251 = vcmp.ge.u32.totalorder %v2963, 429496730
    %vm3252 = vcmp.ge.u32.totalorder %v2964, 429496730
    %vm3253 = vcmp.ge.u32.totalorder %v2965, 429496730
    %vm3254 = vcmp.ge.u32.totalorder %v2966, 429496730
    %vm3255 = vcmp.ge.u32.totalorder %v2967, 429496730
    %vm3256 = vcmp.ge.u32.totalorder %v2968, 429496730
    %vm3257 = vcmp.ge.u32.totalorder %v2969, 429496730
    %vm3258 = vcmp.ge.u32.totalorder %v2970, 429496730
    %vm3259 = vcmp.ge.u32.totalorder %v2971, 429496730
    %vm3260 = vcmp.ge.u32.totalorder %v2972, 429496730
    %vm3261 = vcmp.ge.u32.totalorder %v2973, 429496730
    %vm3262 = vcmp.ge.u32.totalorder %v2974, 429496730
    %vm3263 = vcmp.ge.u32.totalorder %v2975, 429496730
    %vm3264 = vcmp.ge.u32.totalorder %v2976, 429496730
    %vm3265 = vcmp.ge.u32.totalorder %v2977, 429496730
    %vm3266 = vcmp.ge.u32.totalorder %v2978, 429496730
    %vm3267 = vcmp.ge.u32.totalorder %v2979, 429496730
    %vm3268 = vcmp.ge.u32.totalorder %v2980, 429496730
    %vm3269 = vcmp.ge.u32.totalorder %v2981, 429496730
    %vm3270 = vcmp.ge.u32.totalorder %v2982, 429496730
    %vm3271 = vcmp.ge.u32.totalorder %v2983, 429496730
    %vm3272 = vcmp.ge.u32.totalorder %v2984, 429496730
    %vm3273 = vcmp.ge.u32.totalorder %v2985, 429496730
    %vm3274 = vcmp.ge.u32.totalorder %v2986, 429496730
    %vm3275 = vcmp.ge.u32.totalorder %v2987, 429496730
    %vm3276 = vcmp.ge.u32.totalorder %v2988, 429496730
    %vm3277 = vcmp.ge.u32.totalorder %v2989, 429496730
    %vm3278 = vcmp.ge.u32.totalorder %v2990, 429496730
    %vm3279 = vcmp.ge.u32.totalorder %v2991, 429496730
    %vm3280 = vcmp.ge.u32.totalorder %v2992, 429496730
    %vm3281 = vcmp.ge.u32.totalorder %v2993, 429496730
    %vm3282 = vcmp.ge.u32.totalorder %v2994, 429496730
    %vm3283 = vcmp.ge.u32.totalorder %v2995, 429496730
    %vm3284 = vcmp.ge.u32.totalorder %v2996, 429496730
    %vm3285 = vcmp.ge.u32.totalorder %v2997, 429496730
    %vm3286 = vcmp.ge.u32.totalorder %v2998, 429496730
    %vm3287 = vcmp.ge.u32.totalorder %v2999, 429496730
    %vm3288 = vcmp.ge.u32.totalorder %v3000, 429496730
    %vm3289 = vcmp.ge.u32.totalorder %v3001, 429496730
    %vm3290 = vcmp.ge.u32.totalorder %v3002, 429496730
    %vm3291 = vcmp.ge.u32.totalorder %v3003, 429496730
    %vm3292 = vcmp.ge.u32.totalorder %v3004, 429496730
    %vm3293 = vcmp.ge.u32.totalorder %v3005, 429496730
    %vm3294 = vcmp.ge.u32.totalorder %v3006, 429496730
    %vm3295 = vcmp.ge.u32.totalorder %v3007, 429496730
    %vm3296 = vcmp.ge.u32.totalorder %v3008, 429496730
    %vm3297 = vcmp.ge.u32.totalorder %v3009, 429496730
    %vm3298 = vcmp.ge.u32.totalorder %v3010, 429496730
    %vm3299 = vcmp.ge.u32.totalorder %v3011, 429496730
    %vm3300 = vcmp.ge.u32.totalorder %v3012, 429496730
    %vm3301 = vcmp.ge.u32.totalorder %v3013, 429496730
    %vm3302 = vcmp.ge.u32.totalorder %v3014, 429496730
    %vm3303 = vcmp.ge.u32.totalorder %v3015, 429496730
    %vm3304 = vcmp.ge.u32.totalorder %v3016, 429496730
    %vm3305 = vcmp.ge.u32.totalorder %v3017, 429496730
    %vm3306 = vcmp.ge.u32.totalorder %v3018, 429496730
    %vm3307 = vcmp.ge.u32.totalorder %v3019, 429496730
    %vm3308 = vcmp.ge.u32.totalorder %v3020, 429496730
    %vm3309 = vcmp.ge.u32.totalorder %v3021, 429496730
    %vm3310 = vcmp.ge.u32.totalorder %v3022, 429496730
    %vm3311 = vcmp.ge.u32.totalorder %v3023, 429496730
    %vm3312 = vcmp.ge.u32.totalorder %v3024, 429496730
    %vm3313 = vcmp.ge.u32.totalorder %v3025, 429496730
    %vm3314 = vcmp.ge.u32.totalorder %v3026, 429496730
    %vm3315 = vcmp.ge.u32.totalorder %v3027, 429496730
    %vm3316 = vcmp.ge.u32.totalorder %v3028, 429496730
    %vm3317 = vcmp.ge.u32.totalorder %v3029, 429496730
    %vm3318 = vcmp.ge.u32.totalorder %v3030, 429496730
    %vm3319 = vcmp.ge.u32.totalorder %v3031, 429496730
    %vm3320 = vcmp.ge.u32.totalorder %v3032, 429496730
    %vm3321 = vcmp.ge.u32.totalorder %v3033, 429496730
    %vm3322 = vcmp.ge.u32.totalorder %v3034, 429496730
    %vm3323 = vcmp.ge.u32.totalorder %v3035, 429496730
    %vm3324 = vcmp.ge.u32.totalorder %v3036, 429496730
    %vm3325 = vcmp.ge.u32.totalorder %v3037, 429496730
    %vm3326 = vcmp.ge.u32.totalorder %v3038, 429496730
    %vm3327 = vcmp.ge.u32.totalorder %v3039, 429496730
    %vm3328 = vcmp.ge.u32.totalorder %v3040, 429496730
    %vm3329 = vcmp.ge.u32.totalorder %v3041, 429496730
    %vm3330 = vcmp.ge.u32.totalorder %v3042, 429496730
    %vm3331 = vcmp.ge.u32.totalorder %v3043, 429496730
    %vm3332 = vcmp.ge.u32.totalorder %v3044, 429496730
    %vm3333 = vcmp.ge.u32.totalorder %v3045, 429496730
    %vm3334 = vcmp.ge.u32.totalorder %v3046, 429496730
    %vm3335 = vcmp.ge.u32.totalorder %v3047, 429496730
    %vm3336 = vcmp.ge.u32.totalorder %v3048, 429496730
    %vm3337 = vcmp.ge.u32.totalorder %v3049, 429496730
    %vm3338 = vcmp.ge.u32.totalorder %v3050, 429496730
    %vm3339 = vcmp.ge.u32.totalorder %v3051, 429496730
    %vm3340 = vcmp.ge.u32.totalorder %v3052, 429496730
    %vm3341 = vcmp.ge.u32.totalorder %v3053, 429496730
    %vm3342 = vcmp.ge.u32.totalorder %v3054, 429496730
    %vm3343 = vcmp.ge.u32.totalorder %v3055, 429496730
    %vm3344 = vcmp.ge.u32.totalorder %v3056, 429496730
    %vm3345 = vcmp.ge.u32.totalorder %v3057, 429496730
    %vm3346 = vcmp.ge.u32.totalorder %v3058, 429496730
    %vm3347 = vcmp.ge.u32.totalorder %v3059, 429496730
    %vm3348 = vcmp.ge.u32.totalorder %v3060, 429496730
    %vm3349 = vcmp.ge.u32.totalorder %v3061, 429496730
    %v3350 = vsel %vm3062, 1, 0
    %v3351 = vsel %vm3063, 1, 0
    %v3352 = vsel %vm3064, 1, 0
    %v3353 = vsel %vm3065, 1, 0
    %v3354 = vsel %vm3066, 1, 0
    %v3355 = vsel %vm3067, 1, 0
    %v3356 = vsel %vm3068, 1, 0
    %v3357 = vsel %vm3069, 1, 0
    %v3358 = vsel %vm3070, 1, 0
    %v3359 = vsel %vm3071, 1, 0
    %v3360 = vsel %vm3072, 1, 0
    %v3361 = vsel %vm3073, 1, 0
    %v3362 = vsel %vm3074, 1, 0
    %v3363 = vsel %vm3075, 1, 0
    %v3364 = vsel %vm3076, 1, 0
    %v3365 = vsel %vm3077, 1, 0
    %v3366 = vsel %vm3078, 1, 0
    %v3367 = vsel %vm3079, 1, 0
    %v3368 = vsel %vm3080, 1, 0
    %v3369 = vsel %vm3081, 1, 0
    %v3370 = vsel %vm3082, 1, 0
    %v3371 = vsel %vm3083, 1, 0
    %v3372 = vsel %vm3084, 1, 0
    %v3373 = vsel %vm3085, 1, 0
    %v3374 = vsel %vm3086, 1, 0
    %v3375 = vsel %vm3087, 1, 0
    %v3376 = vsel %vm3088, 1, 0
    %v3377 = vsel %vm3089, 1, 0
    %v3378 = vsel %vm3090, 1, 0
    %v3379 = vsel %vm3091, 1, 0
    %v3380 = vsel %vm3092, 1, 0
    %v3381 = vsel %vm3093, 1, 0
    %v3382 = vsel %vm3094, 1, 0
    %v3383 = vsel %vm3095, 1, 0
    %v3384 = vsel %vm3096, 1, 0
    %v3385 = vsel %vm3097, 1, 0
    %v3386 = vsel %vm3098, 1, 0
    %v3387 = vsel %vm3099, 1, 0
    %v3388 = vsel %vm3100, 1, 0
    %v3389 = vsel %vm3101, 1, 0
    %v3390 = vsel %vm3102, 1, 0
    %v3391 = vsel %vm3103, 1, 0
    %v3392 = vsel %vm3104, 1, 0
    %v3393 = vsel %vm3105, 1, 0
    %v3394 = vsel %vm3106, 1, 0
    %v3395 = vsel %vm3107, 1, 0
    %v3396 = vsel %vm3108, 1, 0
    %v3397 = vsel %vm3109, 1, 0
    %v3398 = vsel %vm3110, 1, 0
    %v3399 = vsel %vm3111, 1, 0
    %v3400 = vsel %vm3112, 1, 0
    %v3401 = vsel %vm3113, 1, 0
    %v3402 = vsel %vm3114, 1, 0
    %v3403 = vsel %vm3115, 1, 0
    %v3404 = vsel %vm3116, 1, 0
    %v3405 = vsel %vm3117, 1, 0
    %v3406 = vsel %vm3118, 1, 0
    %v3407 = vsel %vm3119, 1, 0
    %v3408 = vsel %vm3120, 1, 0
    %v3409 = vsel %vm3121, 1, 0
    %v3410 = vsel %vm3122, 1, 0
    %v3411 = vsel %vm3123, 1, 0
    %v3412 = vsel %vm3124, 1, 0
    %v3413 = vsel %vm3125, 1, 0
    %v3414 = vsel %vm3126, 1, 0
    %v3415 = vsel %vm3127, 1, 0
    %v3416 = vsel %vm3128, 1, 0
    %v3417 = vsel %vm3129, 1, 0
    %v3418 = vsel %vm3130, 1, 0
    %v3419 = vsel %vm3131, 1, 0
    %v3420 = vsel %vm3132, 1, 0
    %v3421 = vsel %vm3133, 1, 0
    %v3422 = vsel %vm3134, 1, 0
    %v3423 = vsel %vm3135, 1, 0
    %v3424 = vsel %vm3136, 1, 0
    %v3425 = vsel %vm3137, 1, 0
    %v3426 = vsel %vm3138, 1, 0
    %v3427 = vsel %vm3139, 1, 0
    %v3428 = vsel %vm3140, 1, 0
    %v3429 = vsel %vm3141, 1, 0
    %v3430 = vsel %vm3142, 1, 0
    %v3431 = vsel %vm3143, 1, 0
    %v3432 = vsel %vm3144, 1, 0
    %v3433 = vsel %vm3145, 1, 0
    %v3434 = vsel %vm3146, 1, 0
    %v3435 = vsel %vm3147, 1, 0
    %v3436 = vsel %vm3148, 1, 0
    %v3437 = vsel %vm3149, 1, 0
    %v3438 = vsel %vm3150, 1, 0
    %v3439 = vsel %vm3151, 1, 0
    %v3440 = vsel %vm3152, 1, 0
    %v3441 = vsel %vm3153, 1, 0
    %v3442 = vsel %vm3154, 1, 0
    %v3443 = vsel %vm3155, 1, 0
    %v3444 = vsel %vm3156, 1, 0
    %v3445 = vsel %vm3157, 1, 0
    %v3446 = vsel %vm3158, 1, 0
    %v3447 = vsel %vm3159, 1, 0
    %v3448 = vsel %vm3160, 1, 0
    %v3449 = vsel %vm3161, 1, 0
    %v3450 = vsel %vm3162, 1, 0
    %v3451 = vsel %vm3163, 1, 0
    %v3452 = vsel %vm3164, 1, 0
    %v3453 = vsel %vm3165, 1, 0
    %v3454 = vsel %vm3166, 1, 0
    %v3455 = vsel %vm3167, 1, 0
    %v3456 = vsel %vm3168, 1, 0
    %v3457 = vsel %vm3169, 1, 0
    %v3458 = vsel %vm3170, 1, 0
    %v3459 = vsel %vm3171, 1, 0
    %v3460 = vsel %vm3172, 1, 0
    %v3461 = vsel %vm3173, 1, 0
    %v3462 = vsel %vm3174, 1, 0
    %v3463 = vsel %vm3175, 1, 0
    %v3464 = vsel %vm3176, 1, 0
    %v3465 = vsel %vm3177, 1, 0
    %v3466 = vsel %vm3178, 1, 0
    %v3467 = vsel %vm3179, 1, 0
    %v3468 = vsel %vm3180, 1, 0
    %v3469 = vsel %vm3181, 1, 0
    %v3470 = vsel %vm3182, 1, 0
    %v3471 = vsel %vm3183, 1, 0
    %v3472 = vsel %vm3184, 1, 0
    %v3473 = vsel %vm3185, 1, 0
    %v3474 = vsel %vm3186, 1, 0
    %v3475 = vsel %vm3187, 1, 0
    %v3476 = vsel %vm3188, 1, 0
    %v3477 = vsel %vm3189, 1, 0
    %v3478 = vsel %vm3190, 1, 0
    %v3479 = vsel %vm3191, 1, 0
    %v3480 = vsel %vm3192, 1, 0
    %v3481 = vsel %vm3193, 1, 0
    %v3482 = vsel %vm3194, 1, 0
    %v3483 = vsel %vm3195, 1, 0
    %v3484 = vsel %vm3196, 1, 0
    %v3485 = vsel %vm3197, 1, 0
    %v3486 = vsel %vm3198, 1, 0
    %v3487 = vsel %vm3199, 1, 0
    %v3488 = vsel %vm3200, 1, 0
    %v3489 = vsel %vm3201, 1, 0
    %v3490 = vsel %vm3202, 1, 0
    %v3491 = vsel %vm3203, 1, 0
    %v3492 = vsel %vm3204, 1, 0
    %v3493 = vsel %vm3205, 1, 0
    %v3494 = vsel %vm3206, 1, 0
    %v3495 = vsel %vm3207, 1, 0
    %v3496 = vsel %vm3208, 1, 0
    %v3497 = vsel %vm3209, 1, 0
    %v3498 = vsel %vm3210, 1, 0
    %v3499 = vsel %vm3211, 1, 0
    %v3500 = vsel %vm3212, 1, 0
    %v3501 = vsel %vm3213, 1, 0
    %v3502 = vsel %vm3214, 1, 0
    %v3503 = vsel %vm3215, 1, 0
    %v3504 = vsel %vm3216, 1, 0
    %v3505 = vsel %vm3217, 1, 0
    %v3506 = vsel %vm3218, 1, 0
    %v3507 = vsel %vm3219, 1, 0
    %v3508 = vsel %vm3220, 1, 0
    %v3509 = vsel %vm3221, 1, 0
    %v3510 = vsel %vm3222, 1, 0
    %v3511 = vsel %vm3223, 1, 0
    %v3512 = vsel %vm3224, 1, 0
    %v3513 = vsel %vm3225, 1, 0
    %v3514 = vsel %vm3226, 1, 0
    %v3515 = vsel %vm3227, 1, 0
    %v3516 = vsel %vm3228, 1, 0
    %v3517 = vsel %vm3229, 1, 0
    %v3518 = vsel %vm3230, 1, 0
    %v3519 = vsel %vm3231, 1, 0
    %v3520 = vsel %vm3232, 1, 0
    %v3521 = vsel %vm3233, 1, 0
    %v3522 = vsel %vm3234, 1, 0
    %v3523 = vsel %vm3235, 1, 0
    %v3524 = vsel %vm3236, 1, 0
    %v3525 = vsel %vm3237, 1, 0
    %v3526 = vsel %vm3238, 1, 0
    %v3527 = vsel %vm3239, 1, 0
    %v3528 = vsel %vm3240, 1, 0
    %v3529 = vsel %vm3241, 1, 0
    %v3530 = vsel %vm3242, 1, 0
    %v3531 = vsel %vm3243, 1, 0
    %v3532 = vsel %vm3244, 1, 0
    %v3533 = vsel %vm3245, 1, 0
    %v3534 = vsel %vm3246, 1, 0
    %v3535 = vsel %vm3247, 1, 0
    %v3536 = vsel %vm3248, 1, 0
    %v3537 = vsel %vm3249, 1, 0
    %v3538 = vsel %vm3250, 1, 0
    %v3539 = vsel %vm3251, 1, 0
    %v3540 = vsel %vm3252, 1, 0
    %v3541 = vsel %vm3253, 1, 0
    %v3542 = vsel %vm3254, 1, 0
    %v3543 = vsel %vm3255, 1, 0
    %v3544 = vsel %vm3256, 1, 0
    %v3545 = vsel %vm3257, 1, 0
    %v3546 = vsel %vm3258, 1, 0
    %v3547 = vsel %vm3259, 1, 0
    %v3548 = vsel %vm3260, 1, 0
    %v3549 = vsel %vm3261, 1, 0
    %v3550 = vsel %vm3262, 1, 0
    %v3551 = vsel %vm3263, 1, 0
    %v3552 = vsel %vm3264, 1, 0
    %v3553 = vsel %vm3265, 1, 0
    %v3554 = vsel %vm3266, 1, 0
    %v3555 = vsel %vm3267, 1, 0
    %v3556 = vsel %vm3268, 1, 0
    %v3557 = vsel %vm3269, 1, 0
    %v3558 = vsel %vm3270, 1, 0
    %v3559 = vsel %vm3271, 1, 0
    %v3560 = vsel %vm3272, 1, 0
    %v3561 = vsel %vm3273, 1, 0
    %v3562 = vsel %vm3274, 1, 0
    %v3563 = vsel %vm3275, 1, 0
    %v3564 = vsel %vm3276, 1, 0
    %v3565 = vsel %vm3277, 1, 0
    %v3566 = vsel %vm3278, 1, 0
    %v3567 = vsel %vm3279, 1, 0
    %v3568 = vsel %vm3280, 1, 0
    %v3569 = vsel %vm3281, 1, 0
    %v3570 = vsel %vm3282, 1, 0
    %v3571 = vsel %vm3283, 1, 0
    %v3572 = vsel %vm3284, 1, 0
    %v3573 = vsel %vm3285, 1, 0
    %v3574 = vsel %vm3286, 1, 0
    %v3575 = vsel %vm3287, 1, 0
    %v3576 = vsel %vm3288, 1, 0
    %v3577 = vsel %vm3289, 1, 0
    %v3578 = vsel %vm3290, 1, 0
    %v3579 = vsel %vm3291, 1, 0
    %v3580 = vsel %vm3292, 1, 0
    %v3581 = vsel %vm3293, 1, 0
    %v3582 = vsel %vm3294, 1, 0
    %v3583 = vsel %vm3295, 1, 0
    %v3584 = vsel %vm3296, 1, 0
    %v3585 = vsel %vm3297, 1, 0
    %v3586 = vsel %vm3298, 1, 0
    %v3587 = vsel %vm3299, 1, 0
    %v3588 = vsel %vm3300, 1, 0
    %v3589 = vsel %vm3301, 1, 0
    %v3590 = vsel %vm3302, 1, 0
    %v3591 = vsel %vm3303, 1, 0
    %v3592 = vsel %vm3304, 1, 0
    %v3593 = vsel %vm3305, 1, 0
    %v3594 = vsel %vm3306, 1, 0
    %v3595 = vsel %vm3307, 1, 0
    %v3596 = vsel %vm3308, 1, 0
    %v3597 = vsel %vm3309, 1, 0
    %v3598 = vsel %vm3310, 1, 0
    %v3599 = vsel %vm3311, 1, 0
    %v3600 = vsel %vm3312, 1, 0
    %v3601 = vsel %vm3313, 1, 0
    %v3602 = vsel %vm3314, 1, 0
    %v3603 = vsel %vm3315, 1, 0
    %v3604 = vsel %vm3316, 1, 0
    %v3605 = vsel %vm3317, 1, 0
    %v3606 = vsel %vm3318, 1, 0
    %v3607 = vsel %vm3319, 1, 0
    %v3608 = vsel %vm3320, 1, 0
    %v3609 = vsel %vm3321, 1, 0
    %v3610 = vsel %vm3322, 1, 0
    %v3611 = vsel %vm3323, 1, 0
    %v3612 = vsel %vm3324, 1, 0
    %v3613 = vsel %vm3325, 1, 0
    %v3614 = vsel %vm3326, 1, 0
    %v3615 = vsel %vm3327, 1, 0
    %v3616 = vsel %vm3328, 1, 0
    %v3617 = vsel %vm3329, 1, 0
    %v3618 = vsel %vm3330, 1, 0
    %v3619 = vsel %vm3331, 1, 0
    %v3620 = vsel %vm3332, 1, 0
    %v3621 = vsel %vm3333, 1, 0
    %v3622 = vsel %vm3334, 1, 0
    %v3623 = vsel %vm3335, 1, 0
    %v3624 = vsel %vm3336, 1, 0
    %v3625 = vsel %vm3337, 1, 0
    %v3626 = vsel %vm3338, 1, 0
    %v3627 = vsel %vm3339, 1, 0
    %v3628 = vsel %vm3340, 1, 0
    %v3629 = vsel %vm3341, 1, 0
    %v3630 = vsel %vm3342, 1, 0
    %v3631 = vsel %vm3343, 1, 0
    %v3632 = vsel %vm3344, 1, 0
    %v3633 = vsel %vm3345, 1, 0
    %v3634 = vsel %vm3346, 1, 0
    %v3635 = vsel %vm3347, 1, 0
    %v3636 = vsel %vm3348, 1, 0
    %v3637 = vsel %vm3349, 1, 0
    %v3638 = vcvt.s32.f32 %v3350
    %v3639 = vcvt.s32.f32 %v3351
    %v3640 = vcvt.s32.f32 %v3352
    %v3641 = vcvt.s32.f32 %v3353
    %v3642 = vcvt.s32.f32 %v3354
    %v3643 = vcvt.s32.f32 %v3355
    %v3644 = vcvt.s32.f32 %v3356
    %v3645 = vcvt.s32.f32 %v3357
    %v3646 = vcvt.s32.f32 %v3358
    %v3647 = vcvt.s32.f32 %v3359
    %v3648 = vcvt.s32.f32 %v3360
    %v3649 = vcvt.s32.f32 %v3361
    %v3650 = vcvt.s32.f32 %v3362
    %v3651 = vcvt.s32.f32 %v3363
    %v3652 = vcvt.s32.f32 %v3364
    %v3653 = vcvt.s32.f32 %v3365
    %v3654 = vcvt.s32.f32 %v3366
    %v3655 = vcvt.s32.f32 %v3367
    %v3656 = vcvt.s32.f32 %v3368
    %v3657 = vcvt.s32.f32 %v3369
    %v3658 = vcvt.s32.f32 %v3370
    %v3659 = vcvt.s32.f32 %v3371
    %v3660 = vcvt.s32.f32 %v3372
    %v3661 = vcvt.s32.f32 %v3373
    %v3662 = vcvt.s32.f32 %v3374
    %v3663 = vcvt.s32.f32 %v3375
    %v3664 = vcvt.s32.f32 %v3376
    %v3665 = vcvt.s32.f32 %v3377
    %v3666 = vcvt.s32.f32 %v3378
    %v3667 = vcvt.s32.f32 %v3379
    %v3668 = vcvt.s32.f32 %v3380
    %v3669 = vcvt.s32.f32 %v3381
    %v3670 = vcvt.s32.f32 %v3382
    %v3671 = vcvt.s32.f32 %v3383
    %v3672 = vcvt.s32.f32 %v3384
    %v3673 = vcvt.s32.f32 %v3385
    %v3674 = vcvt.s32.f32 %v3386
    %v3675 = vcvt.s32.f32 %v3387
    %v3676 = vcvt.s32.f32 %v3388
    %v3677 = vcvt.s32.f32 %v3389
    %v3678 = vcvt.s32.f32 %v3390
    %v3679 = vcvt.s32.f32 %v3391
    %v3680 = vcvt.s32.f32 %v3392
    %v3681 = vcvt.s32.f32 %v3393
    %v3682 = vcvt.s32.f32 %v3394
    %v3683 = vcvt.s32.f32 %v3395
    %v3684 = vcvt.s32.f32 %v3396
    %v3685 = vcvt.s32.f32 %v3397
    %v3686 = vcvt.s32.f32 %v3398
    %v3687 = vcvt.s32.f32 %v3399
    %v3688 = vcvt.s32.f32 %v3400
    %v3689 = vcvt.s32.f32 %v3401
    %v3690 = vcvt.s32.f32 %v3402
    %v3691 = vcvt.s32.f32 %v3403
    %v3692 = vcvt.s32.f32 %v3404
    %v3693 = vcvt.s32.f32 %v3405
    %v3694 = vcvt.s32.f32 %v3406
    %v3695 = vcvt.s32.f32 %v3407
    %v3696 = vcvt.s32.f32 %v3408
    %v3697 = vcvt.s32.f32 %v3409
    %v3698 = vcvt.s32.f32 %v3410
    %v3699 = vcvt.s32.f32 %v3411
    %v3700 = vcvt.s32.f32 %v3412
    %v3701 = vcvt.s32.f32 %v3413
    %v3702 = vcvt.s32.f32 %v3414
    %v3703 = vcvt.s32.f32 %v3415
    %v3704 = vcvt.s32.f32 %v3416
    %v3705 = vcvt.s32.f32 %v3417
    %v3706 = vcvt.s32.f32 %v3418
    %v3707 = vcvt.s32.f32 %v3419
    %v3708 = vcvt.s32.f32 %v3420
    %v3709 = vcvt.s32.f32 %v3421
    %v3710 = vcvt.s32.f32 %v3422
    %v3711 = vcvt.s32.f32 %v3423
    %v3712 = vcvt.s32.f32 %v3424
    %v3713 = vcvt.s32.f32 %v3425
    %v3714 = vcvt.s32.f32 %v3426
    %v3715 = vcvt.s32.f32 %v3427
    %v3716 = vcvt.s32.f32 %v3428
    %v3717 = vcvt.s32.f32 %v3429
    %v3718 = vcvt.s32.f32 %v3430
    %v3719 = vcvt.s32.f32 %v3431
    %v3720 = vcvt.s32.f32 %v3432
    %v3721 = vcvt.s32.f32 %v3433
    %v3722 = vcvt.s32.f32 %v3434
    %v3723 = vcvt.s32.f32 %v3435
    %v3724 = vcvt.s32.f32 %v3436
    %v3725 = vcvt.s32.f32 %v3437
    %v3726 = vcvt.s32.f32 %v3438
    %v3727 = vcvt.s32.f32 %v3439
    %v3728 = vcvt.s32.f32 %v3440
    %v3729 = vcvt.s32.f32 %v3441
    %v3730 = vcvt.s32.f32 %v3442
    %v3731 = vcvt.s32.f32 %v3443
    %v3732 = vcvt.s32.f32 %v3444
    %v3733 = vcvt.s32.f32 %v3445
    %v3734 = vcvt.s32.f32 %v3446
    %v3735 = vcvt.s32.f32 %v3447
    %v3736 = vcvt.s32.f32 %v3448
    %v3737 = vcvt.s32.f32 %v3449
    %v3738 = vcvt.s32.f32 %v3450
    %v3739 = vcvt.s32.f32 %v3451
    %v3740 = vcvt.s32.f32 %v3452
    %v3741 = vcvt.s32.f32 %v3453
    %v3742 = vcvt.s32.f32 %v3454
    %v3743 = vcvt.s32.f32 %v3455
    %v3744 = vcvt.s32.f32 %v3456
    %v3745 = vcvt.s32.f32 %v3457
    %v3746 = vcvt.s32.f32 %v3458
    %v3747 = vcvt.s32.f32 %v3459
    %v3748 = vcvt.s32.f32 %v3460
    %v3749 = vcvt.s32.f32 %v3461
    %v3750 = vcvt.s32.f32 %v3462
    %v3751 = vcvt.s32.f32 %v3463
    %v3752 = vcvt.s32.f32 %v3464
    %v3753 = vcvt.s32.f32 %v3465
    %v3754 = vcvt.s32.f32 %v3466
    %v3755 = vcvt.s32.f32 %v3467
    %v3756 = vcvt.s32.f32 %v3468
    %v3757 = vcvt.s32.f32 %v3469
    %v3758 = vcvt.s32.f32 %v3470
    %v3759 = vcvt.s32.f32 %v3471
    %v3760 = vcvt.s32.f32 %v3472
    %v3761 = vcvt.s32.f32 %v3473
    %v3762 = vcvt.s32.f32 %v3474
    %v3763 = vcvt.s32.f32 %v3475
    %v3764 = vcvt.s32.f32 %v3476
    %v3765 = vcvt.s32.f32 %v3477
    %v3766 = vcvt.s32.f32 %v3478
    %v3767 = vcvt.s32.f32 %v3479
    %v3768 = vcvt.s32.f32 %v3480
    %v3769 = vcvt.s32.f32 %v3481
    %v3770 = vcvt.s32.f32 %v3482
    %v3771 = vcvt.s32.f32 %v3483
    %v3772 = vcvt.s32.f32 %v3484
    %v3773 = vcvt.s32.f32 %v3485
    %v3774 = vcvt.s32.f32 %v3486
    %v3775 = vcvt.s32.f32 %v3487
    %v3776 = vcvt.s32.f32 %v3488
    %v3777 = vcvt.s32.f32 %v3489
    %v3778 = vcvt.s32.f32 %v3490
    %v3779 = vcvt.s32.f32 %v3491
    %v3780 = vcvt.s32.f32 %v3492
    %v3781 = vcvt.s32.f32 %v3493
    %v3782 = vcvt.s32.f32 %v3494
    %v3783 = vcvt.s32.f32 %v3495
    %v3784 = vcvt.s32.f32 %v3496
    %v3785 = vcvt.s32.f32 %v3497
    %v3786 = vcvt.s32.f32 %v3498
    %v3787 = vcvt.s32.f32 %v3499
    %v3788 = vcvt.s32.f32 %v3500
    %v3789 = vcvt.s32.f32 %v3501
    %v3790 = vcvt.s32.f32 %v3502
    %v3791 = vcvt.s32.f32 %v3503
    %v3792 = vcvt.s32.f32 %v3504
    %v3793 = vcvt.s32.f32 %v3505
    %v3794 = vcvt.s32.f32 %v3506
    %v3795 = vcvt.s32.f32 %v3507
    %v3796 = vcvt.s32.f32 %v3508
    %v3797 = vcvt.s32.f32 %v3509
    %v3798 = vcvt.s32.f32 %v3510
    %v3799 = vcvt.s32.f32 %v3511
    %v3800 = vcvt.s32.f32 %v3512
    %v3801 = vcvt.s32.f32 %v3513
    %v3802 = vcvt.s32.f32 %v3514
    %v3803 = vcvt.s32.f32 %v3515
    %v3804 = vcvt.s32.f32 %v3516
    %v3805 = vcvt.s32.f32 %v3517
    %v3806 = vcvt.s32.f32 %v3518
    %v3807 = vcvt.s32.f32 %v3519
    %v3808 = vcvt.s32.f32 %v3520
    %v3809 = vcvt.s32.f32 %v3521
    %v3810 = vcvt.s32.f32 %v3522
    %v3811 = vcvt.s32.f32 %v3523
    %v3812 = vcvt.s32.f32 %v3524
    %v3813 = vcvt.s32.f32 %v3525
    %v3814 = vcvt.s32.f32 %v3526
    %v3815 = vcvt.s32.f32 %v3527
    %v3816 = vcvt.s32.f32 %v3528
    %v3817 = vcvt.s32.f32 %v3529
    %v3818 = vcvt.s32.f32 %v3530
    %v3819 = vcvt.s32.f32 %v3531
    %v3820 = vcvt.s32.f32 %v3532
    %v3821 = vcvt.s32.f32 %v3533
    %v3822 = vcvt.s32.f32 %v3534
    %v3823 = vcvt.s32.f32 %v3535
    %v3824 = vcvt.s32.f32 %v3536
    %v3825 = vcvt.s32.f32 %v3537
    %v3826 = vcvt.s32.f32 %v3538
    %v3827 = vcvt.s32.f32 %v3539
    %v3828 = vcvt.s32.f32 %v3540
    %v3829 = vcvt.s32.f32 %v3541
    %v3830 = vcvt.s32.f32 %v3542
    %v3831 = vcvt.s32.f32 %v3543
    %v3832 = vcvt.s32.f32 %v3544
    %v3833 = vcvt.s32.f32 %v3545
    %v3834 = vcvt.s32.f32 %v3546
    %v3835 = vcvt.s32.f32 %v3547
    %v3836 = vcvt.s32.f32 %v3548
    %v3837 = vcvt.s32.f32 %v3549
    %v3838 = vcvt.s32.f32 %v3550
    %v3839 = vcvt.s32.f32 %v3551
    %v3840 = vcvt.s32.f32 %v3552
    %v3841 = vcvt.s32.f32 %v3553
    %v3842 = vcvt.s32.f32 %v3554
    %v3843 = vcvt.s32.f32 %v3555
    %v3844 = vcvt.s32.f32 %v3556
    %v3845 = vcvt.s32.f32 %v3557
    %v3846 = vcvt.s32.f32 %v3558
    %v3847 = vcvt.s32.f32 %v3559
    %v3848 = vcvt.s32.f32 %v3560
    %v3849 = vcvt.s32.f32 %v3561
    %v3850 = vcvt.s32.f32 %v3562
    %v3851 = vcvt.s32.f32 %v3563
    %v3852 = vcvt.s32.f32 %v3564
    %v3853 = vcvt.s32.f32 %v3565
    %v3854 = vcvt.s32.f32 %v3566
    %v3855 = vcvt.s32.f32 %v3567
    %v3856 = vcvt.s32.f32 %v3568
    %v3857 = vcvt.s32.f32 %v3569
    %v3858 = vcvt.s32.f32 %v3570
    %v3859 = vcvt.s32.f32 %v3571
    %v3860 = vcvt.s32.f32 %v3572
    %v3861 = vcvt.s32.f32 %v3573
    %v3862 = vcvt.s32.f32 %v3574
    %v3863 = vcvt.s32.f32 %v3575
    %v3864 = vcvt.s32.f32 %v3576
    %v3865 = vcvt.s32.f32 %v3577
    %v3866 = vcvt.s32.f32 %v3578
    %v3867 = vcvt.s32.f32 %v3579
    %v3868 = vcvt.s32.f32 %v3580
    %v3869 = vcvt.s32.f32 %v3581
    %v3870 = vcvt.s32.f32 %v3582
    %v3871 = vcvt.s32.f32 %v3583
    %v3872 = vcvt.s32.f32 %v3584
    %v3873 = vcvt.s32.f32 %v3585
    %v3874 = vcvt.s32.f32 %v3586
    %v3875 = vcvt.s32.f32 %v3587
    %v3876 = vcvt.s32.f32 %v3588
    %v3877 = vcvt.s32.f32 %v3589
    %v3878 = vcvt.s32.f32 %v3590
    %v3879 = vcvt.s32.f32 %v3591
    %v3880 = vcvt.s32.f32 %v3592
    %v3881 = vcvt.s32.f32 %v3593
    %v3882 = vcvt.s32.f32 %v3594
    %v3883 = vcvt.s32.f32 %v3595
    %v3884 = vcvt.s32.f32 %v3596
    %v3885 = vcvt.s32.f32 %v3597
    %v3886 = vcvt.s32.f32 %v3598
    %v3887 = vcvt.s32.f32 %v3599
    %v3888 = vcvt.s32.f32 %v3600
    %v3889 = vcvt.s32.f32 %v3601
    %v3890 = vcvt.s32.f32 %v3602
    %v3891 = vcvt.s32.f32 %v3603
    %v3892 = vcvt.s32.f32 %v3604
    %v3893 = vcvt.s32.f32 %v3605
    %v3894 = vcvt.s32.f32 %v3606
    %v3895 = vcvt.s32.f32 %v3607
    %v3896 = vcvt.s32.f32 %v3608
    %v3897 = vcvt.s32.f32 %v3609
    %v3898 = vcvt.s32.f32 %v3610
    %v3899 = vcvt.s32.f32 %v3611
    %v3900 = vcvt.s32.f32 %v3612
    %v3901 = vcvt.s32.f32 %v3613
    %v3902 = vcvt.s32.f32 %v3614
    %v3903 = vcvt.s32.f32 %v3615
    %v3904 = vcvt.s32.f32 %v3616
    %v3905 = vcvt.s32.f32 %v3617
    %v3906 = vcvt.s32.f32 %v3618
    %v3907 = vcvt.s32.f32 %v3619
    %v3908 = vcvt.s32.f32 %v3620
    %v3909 = vcvt.s32.f32 %v3621
    %v3910 = vcvt.s32.f32 %v3622
    %v3911 = vcvt.s32.f32 %v3623
    %v3912 = vcvt.s32.f32 %v3624
    %v3913 = vcvt.s32.f32 %v3625
    %v3914 = vcvt.s32.f32 %v3626
    %v3915 = vcvt.s32.f32 %v3627
    %v3916 = vcvt.s32.f32 %v3628
    %v3917 = vcvt.s32.f32 %v3629
    %v3918 = vcvt.s32.f32 %v3630
    %v3919 = vcvt.s32.f32 %v3631
    %v3920 = vcvt.s32.f32 %v3632
    %v3921 = vcvt.s32.f32 %v3633
    %v3922 = vcvt.s32.f32 %v3634
    %v3923 = vcvt.s32.f32 %v3635
    %v3924 = vcvt.s32.f32 %v3636
    %v3925 = vcvt.s32.f32 %v3637
    %v3926 = vld [vmem:[#allocation4] sm:$0xff]
    %v3927 = vld [vmem:[#allocation4 + $0x8] sm:$0xff]
    %v3928 = vld [vmem:[#allocation4 + $0x10] sm:$0xff]
    %v3929 = vld [vmem:[#allocation4 + $0x18] sm:$0xff]
    %v3930 = vld [vmem:[#allocation4 + $0x20] sm:$0xff]
    %v3931 = vld [vmem:[#allocation4 + $0x28] sm:$0xff]
    %v3932 = vld [vmem:[#allocation4 + $0x30] sm:$0xff]
    %v3933 = vld [vmem:[#allocation4 + $0x38] sm:$0xff]
    %v3934 = vld [vmem:[#allocation4 + $0x40] sm:$0xff]
    %v3935 = vld [vmem:[#allocation4 + $0x48] sm:$0xff]
    %v3936 = vld [vmem:[#allocation4 + $0x50] sm:$0xff]
    %v3937 = vld [vmem:[#allocation4 + $0x58] sm:$0xff]
    %v3938 = vld [vmem:[#allocation4 + $0x60] sm:$0xff]
    %v3939 = vld [vmem:[#allocation4 + $0x68] sm:$0xff]
    %v3940 = vld [vmem:[#allocation4 + $0x70] sm:$0xff]
    %v3941 = vld [vmem:[#allocation4 + $0x78] sm:$0xff]
    %v3942 = vld [vmem:[#allocation4 + $0x80] sm:$0xff]
    %v3943 = vld [vmem:[#allocation4 + $0x88] sm:$0xff]
    %v3944 = vld [vmem:[#allocation4 + $0x90] sm:$0xff]
    %v3945 = vld [vmem:[#allocation4 + $0x98] sm:$0xff]
    %v3946 = vld [vmem:[#allocation4 + $0xa0] sm:$0xff]
    %v3947 = vld [vmem:[#allocation4 + $0xa8] sm:$0xff]
    %v3948 = vld [vmem:[#allocation4 + $0xb0] sm:$0xff]
    %v3949 = vld [vmem:[#allocation4 + $0xb8] sm:$0xff]
    %v3950 = vld [vmem:[#allocation4 + $0xc0] sm:$0xff]
    %v3951 = vld [vmem:[#allocation4 + $0xc8] sm:$0xff]
    %v3952 = vld [vmem:[#allocation4 + $0xd0] sm:$0xff]
    %v3953 = vld [vmem:[#allocation4 + $0xd8] sm:$0xff]
    %v3954 = vld [vmem:[#allocation4 + $0xe0] sm:$0xff]
    %v3955 = vld [vmem:[#allocation4 + $0xe8] sm:$0xff]
    %v3956 = vld [vmem:[#allocation4 + $0xf0] sm:$0xff]
    %v3957 = vld [vmem:[#allocation4 + $0xf8] sm:$0xff]
    %v3958 = vld [vmem:[#allocation4 + $0x100] sm:$0xff]
    %v3959 = vld [vmem:[#allocation4 + $0x108] sm:$0xff]
    %v3960 = vld [vmem:[#allocation4 + $0x110] sm:$0xff]
    %v3961 = vld [vmem:[#allocation4 + $0x118] sm:$0xff]
    %v3962 = vld [vmem:[#allocation4 + $0x120] sm:$0xff]
    %v3963 = vld [vmem:[#allocation4 + $0x128] sm:$0xff]
    %v3964 = vld [vmem:[#allocation4 + $0x130] sm:$0xff]
    %v3965 = vld [vmem:[#allocation4 + $0x138] sm:$0xff]
    %v3966 = vld [vmem:[#allocation4 + $0x140] sm:$0xff]
    %v3967 = vld [vmem:[#allocation4 + $0x148] sm:$0xff]
    %v3968 = vld [vmem:[#allocation4 + $0x150] sm:$0xff]
    %v3969 = vld [vmem:[#allocation4 + $0x158] sm:$0xff]
    %v3970 = vld [vmem:[#allocation4 + $0x160] sm:$0xff]
    %v3971 = vld [vmem:[#allocation4 + $0x168] sm:$0xff]
    %v3972 = vld [vmem:[#allocation4 + $0x170] sm:$0xff]
    %v3973 = vld [vmem:[#allocation4 + $0x178] sm:$0xff]
    %v3974 = vld [vmem:[#allocation4 + $0x180] sm:$0xff]
    %v3975 = vld [vmem:[#allocation4 + $0x188] sm:$0xff]
    %v3976 = vld [vmem:[#allocation4 + $0x190] sm:$0xff]
    %v3977 = vld [vmem:[#allocation4 + $0x198] sm:$0xff]
    %v3978 = vld [vmem:[#allocation4 + $0x1a0] sm:$0xff]
    %v3979 = vld [vmem:[#allocation4 + $0x1a8] sm:$0xff]
    %v3980 = vld [vmem:[#allocation4 + $0x1b0] sm:$0xff]
    %v3981 = vld [vmem:[#allocation4 + $0x1b8] sm:$0xff]
    %v3982 = vld [vmem:[#allocation4 + $0x1c0] sm:$0xff]
    %v3983 = vld [vmem:[#allocation4 + $0x1c8] sm:$0xff]
    %v3984 = vld [vmem:[#allocation4 + $0x1d0] sm:$0xff]
    %v3985 = vld [vmem:[#allocation4 + $0x1d8] sm:$0xff]
    %v3986 = vld [vmem:[#allocation4 + $0x1e0] sm:$0xff]
    %v3987 = vld [vmem:[#allocation4 + $0x1e8] sm:$0xff]
    %v3988 = vld [vmem:[#allocation4 + $0x1f0] sm:$0xff]
    %v3989 = vld [vmem:[#allocation4 + $0x1f8] sm:$0xff]
    %v3990 = vld [vmem:[#allocation4 + $0x200] sm:$0xff]
    %v3991 = vld [vmem:[#allocation4 + $0x208] sm:$0xff]
    %v3992 = vld [vmem:[#allocation4 + $0x210] sm:$0xff]
    %v3993 = vld [vmem:[#allocation4 + $0x218] sm:$0xff]
    %v3994 = vld [vmem:[#allocation4 + $0x220] sm:$0xff]
    %v3995 = vld [vmem:[#allocation4 + $0x228] sm:$0xff]
    %v3996 = vld [vmem:[#allocation4 + $0x230] sm:$0xff]
    %v3997 = vld [vmem:[#allocation4 + $0x238] sm:$0xff]
    %v3998 = vld [vmem:[#allocation4 + $0x240] sm:$0xff]
    %v3999 = vld [vmem:[#allocation4 + $0x248] sm:$0xff]
    %v4000 = vld [vmem:[#allocation4 + $0x250] sm:$0xff]
    %v4001 = vld [vmem:[#allocation4 + $0x258] sm:$0xff]
    %v4002 = vld [vmem:[#allocation4 + $0x260] sm:$0xff]
    %v4003 = vld [vmem:[#allocation4 + $0x268] sm:$0xff]
    %v4004 = vld [vmem:[#allocation4 + $0x270] sm:$0xff]
    %v4005 = vld [vmem:[#allocation4 + $0x278] sm:$0xff]
    %v4006 = vld [vmem:[#allocation4 + $0x280] sm:$0xff]
    %v4007 = vld [vmem:[#allocation4 + $0x288] sm:$0xff]
    %v4008 = vld [vmem:[#allocation4 + $0x290] sm:$0xff]
    %v4009 = vld [vmem:[#allocation4 + $0x298] sm:$0xff]
    %v4010 = vld [vmem:[#allocation4 + $0x2a0] sm:$0xff]
    %v4011 = vld [vmem:[#allocation4 + $0x2a8] sm:$0xff]
    %v4012 = vld [vmem:[#allocation4 + $0x2b0] sm:$0xff]
    %v4013 = vld [vmem:[#allocation4 + $0x2b8] sm:$0xff]
    %v4014 = vld [vmem:[#allocation4 + $0x2c0] sm:$0xff]
    %v4015 = vld [vmem:[#allocation4 + $0x2c8] sm:$0xff]
    %v4016 = vld [vmem:[#allocation4 + $0x2d0] sm:$0xff]
    %v4017 = vld [vmem:[#allocation4 + $0x2d8] sm:$0xff]
    %v4018 = vld [vmem:[#allocation4 + $0x2e0] sm:$0xff]
    %v4019 = vld [vmem:[#allocation4 + $0x2e8] sm:$0xff]
    %v4020 = vld [vmem:[#allocation4 + $0x2f0] sm:$0xff]
    %v4021 = vld [vmem:[#allocation4 + $0x2f8] sm:$0xff]
    %v4022 = vld [vmem:[#allocation4 + $0x300] sm:$0xff]
    %v4023 = vld [vmem:[#allocation4 + $0x308] sm:$0xff]
    %v4024 = vld [vmem:[#allocation4 + $0x310] sm:$0xff]
    %v4025 = vld [vmem:[#allocation4 + $0x318] sm:$0xff]
    %v4026 = vld [vmem:[#allocation4 + $0x320] sm:$0xff]
    %v4027 = vld [vmem:[#allocation4 + $0x328] sm:$0xff]
    %v4028 = vld [vmem:[#allocation4 + $0x330] sm:$0xff]
    %v4029 = vld [vmem:[#allocation4 + $0x338] sm:$0xff]
    %v4030 = vld [vmem:[#allocation4 + $0x340] sm:$0xff]
    %v4031 = vld [vmem:[#allocation4 + $0x348] sm:$0xff]
    %v4032 = vld [vmem:[#allocation4 + $0x350] sm:$0xff]
    %v4033 = vld [vmem:[#allocation4 + $0x358] sm:$0xff]
    %v4034 = vld [vmem:[#allocation4 + $0x360] sm:$0xff]
    %v4035 = vld [vmem:[#allocation4 + $0x368] sm:$0xff]
    %v4036 = vld [vmem:[#allocation4 + $0x370] sm:$0xff]
    %v4037 = vld [vmem:[#allocation4 + $0x378] sm:$0xff]
    %v4038 = vld [vmem:[#allocation4 + $0x380] sm:$0xff]
    %v4039 = vld [vmem:[#allocation4 + $0x388] sm:$0xff]
    %v4040 = vld [vmem:[#allocation4 + $0x390] sm:$0xff]
    %v4041 = vld [vmem:[#allocation4 + $0x398] sm:$0xff]
    %v4042 = vld [vmem:[#allocation4 + $0x3a0] sm:$0xff]
    %v4043 = vld [vmem:[#allocation4 + $0x3a8] sm:$0xff]
    %v4044 = vld [vmem:[#allocation4 + $0x3b0] sm:$0xff]
    %v4045 = vld [vmem:[#allocation4 + $0x3b8] sm:$0xff]
    %v4046 = vld [vmem:[#allocation4 + $0x3c0] sm:$0xff]
    %v4047 = vld [vmem:[#allocation4 + $0x3c8] sm:$0xff]
    %v4048 = vld [vmem:[#allocation4 + $0x3d0] sm:$0xff]
    %v4049 = vld [vmem:[#allocation4 + $0x3d8] sm:$0xff]
    %v4050 = vld [vmem:[#allocation4 + $0x3e0] sm:$0xff]
    %v4051 = vld [vmem:[#allocation4 + $0x3e8] sm:$0xff]
    %v4052 = vld [vmem:[#allocation4 + $0x3f0] sm:$0xff]
    %v4053 = vld [vmem:[#allocation4 + $0x3f8] sm:$0xff]
    %v4054 = vld [vmem:[#allocation4 + $0x400] sm:$0xff]
    %v4055 = vld [vmem:[#allocation4 + $0x408] sm:$0xff]
    %v4056 = vld [vmem:[#allocation4 + $0x410] sm:$0xff]
    %v4057 = vld [vmem:[#allocation4 + $0x418] sm:$0xff]
    %v4058 = vld [vmem:[#allocation4 + $0x420] sm:$0xff]
    %v4059 = vld [vmem:[#allocation4 + $0x428] sm:$0xff]
    %v4060 = vld [vmem:[#allocation4 + $0x430] sm:$0xff]
    %v4061 = vld [vmem:[#allocation4 + $0x438] sm:$0xff]
    %v4062 = vld [vmem:[#allocation4 + $0x440] sm:$0xff]
    %v4063 = vld [vmem:[#allocation4 + $0x448] sm:$0xff]
    %v4064 = vld [vmem:[#allocation4 + $0x450] sm:$0xff]
    %v4065 = vld [vmem:[#allocation4 + $0x458] sm:$0xff]
    %v4066 = vld [vmem:[#allocation4 + $0x460] sm:$0xff]
    %v4067 = vld [vmem:[#allocation4 + $0x468] sm:$0xff]
    %v4068 = vld [vmem:[#allocation4 + $0x470] sm:$0xff]
    %v4069 = vld [vmem:[#allocation4 + $0x478] sm:$0xff]
    %v4070 = vld [vmem:[#allocation4 + $0x480] sm:$0xff]
    %v4071 = vld [vmem:[#allocation4 + $0x488] sm:$0xff]
    %v4072 = vld [vmem:[#allocation4 + $0x490] sm:$0xff]
    %v4073 = vld [vmem:[#allocation4 + $0x498] sm:$0xff]
    %v4074 = vld [vmem:[#allocation4 + $0x4a0] sm:$0xff]
    %v4075 = vld [vmem:[#allocation4 + $0x4a8] sm:$0xff]
    %v4076 = vld [vmem:[#allocation4 + $0x4b0] sm:$0xff]
    %v4077 = vld [vmem:[#allocation4 + $0x4b8] sm:$0xff]
    %v4078 = vld [vmem:[#allocation4 + $0x4c0] sm:$0xff]
    %v4079 = vld [vmem:[#allocation4 + $0x4c8] sm:$0xff]
    %v4080 = vld [vmem:[#allocation4 + $0x4d0] sm:$0xff]
    %v4081 = vld [vmem:[#allocation4 + $0x4d8] sm:$0xff]
    %v4082 = vld [vmem:[#allocation4 + $0x4e0] sm:$0xff]
    %v4083 = vld [vmem:[#allocation4 + $0x4e8] sm:$0xff]
    %v4084 = vld [vmem:[#allocation4 + $0x4f0] sm:$0xff]
    %v4085 = vld [vmem:[#allocation4 + $0x4f8] sm:$0xff]
    %v4086 = vld [vmem:[#allocation4 + $0x500] sm:$0xff]
    %v4087 = vld [vmem:[#allocation4 + $0x508] sm:$0xff]
    %v4088 = vld [vmem:[#allocation4 + $0x510] sm:$0xff]
    %v4089 = vld [vmem:[#allocation4 + $0x518] sm:$0xff]
    %v4090 = vld [vmem:[#allocation4 + $0x520] sm:$0xff]
    %v4091 = vld [vmem:[#allocation4 + $0x528] sm:$0xff]
    %v4092 = vld [vmem:[#allocation4 + $0x530] sm:$0xff]
    %v4093 = vld [vmem:[#allocation4 + $0x538] sm:$0xff]
    %v4094 = vld [vmem:[#allocation4 + $0x540] sm:$0xff]
    %v4095 = vld [vmem:[#allocation4 + $0x548] sm:$0xff]
    %v4096 = vld [vmem:[#allocation4 + $0x550] sm:$0xff]
    %v4097 = vld [vmem:[#allocation4 + $0x558] sm:$0xff]
    %v4098 = vld [vmem:[#allocation4 + $0x560] sm:$0xff]
    %v4099 = vld [vmem:[#allocation4 + $0x568] sm:$0xff]
    %v4100 = vld [vmem:[#allocation4 + $0x570] sm:$0xff]
    %v4101 = vld [vmem:[#allocation4 + $0x578] sm:$0xff]
    %v4102 = vld [vmem:[#allocation4 + $0x580] sm:$0xff]
    %v4103 = vld [vmem:[#allocation4 + $0x588] sm:$0xff]
    %v4104 = vld [vmem:[#allocation4 + $0x590] sm:$0xff]
    %v4105 = vld [vmem:[#allocation4 + $0x598] sm:$0xff]
    %v4106 = vld [vmem:[#allocation4 + $0x5a0] sm:$0xff]
    %v4107 = vld [vmem:[#allocation4 + $0x5a8] sm:$0xff]
    %v4108 = vld [vmem:[#allocation4 + $0x5b0] sm:$0xff]
    %v4109 = vld [vmem:[#allocation4 + $0x5b8] sm:$0xff]
    %v4110 = vld [vmem:[#allocation4 + $0x5c0] sm:$0xff]
    %v4111 = vld [vmem:[#allocation4 + $0x5c8] sm:$0xff]
    %v4112 = vld [vmem:[#allocation4 + $0x5d0] sm:$0xff]
    %v4113 = vld [vmem:[#allocation4 + $0x5d8] sm:$0xff]
    %v4114 = vld [vmem:[#allocation4 + $0x5e0] sm:$0xff]
    %v4115 = vld [vmem:[#allocation4 + $0x5e8] sm:$0xff]
    %v4116 = vld [vmem:[#allocation4 + $0x5f0] sm:$0xff]
    %v4117 = vld [vmem:[#allocation4 + $0x5f8] sm:$0xff]
    %v4118 = vld [vmem:[#allocation4 + $0x600] sm:$0xff]
    %v4119 = vld [vmem:[#allocation4 + $0x608] sm:$0xff]
    %v4120 = vld [vmem:[#allocation4 + $0x610] sm:$0xff]
    %v4121 = vld [vmem:[#allocation4 + $0x618] sm:$0xff]
    %v4122 = vld [vmem:[#allocation4 + $0x620] sm:$0xff]
    %v4123 = vld [vmem:[#allocation4 + $0x628] sm:$0xff]
    %v4124 = vld [vmem:[#allocation4 + $0x630] sm:$0xff]
    %v4125 = vld [vmem:[#allocation4 + $0x638] sm:$0xff]
    %v4126 = vld [vmem:[#allocation4 + $0x640] sm:$0xff]
    %v4127 = vld [vmem:[#allocation4 + $0x648] sm:$0xff]
    %v4128 = vld [vmem:[#allocation4 + $0x650] sm:$0xff]
    %v4129 = vld [vmem:[#allocation4 + $0x658] sm:$0xff]
    %v4130 = vld [vmem:[#allocation4 + $0x660] sm:$0xff]
    %v4131 = vld [vmem:[#allocation4 + $0x668] sm:$0xff]
    %v4132 = vld [vmem:[#allocation4 + $0x670] sm:$0xff]
    %v4133 = vld [vmem:[#allocation4 + $0x678] sm:$0xff]
    %v4134 = vld [vmem:[#allocation4 + $0x680] sm:$0xff]
    %v4135 = vld [vmem:[#allocation4 + $0x688] sm:$0xff]
    %v4136 = vld [vmem:[#allocation4 + $0x690] sm:$0xff]
    %v4137 = vld [vmem:[#allocation4 + $0x698] sm:$0xff]
    %v4138 = vld [vmem:[#allocation4 + $0x6a0] sm:$0xff]
    %v4139 = vld [vmem:[#allocation4 + $0x6a8] sm:$0xff]
    %v4140 = vld [vmem:[#allocation4 + $0x6b0] sm:$0xff]
    %v4141 = vld [vmem:[#allocation4 + $0x6b8] sm:$0xff]
    %v4142 = vld [vmem:[#allocation4 + $0x6c0] sm:$0xff]
    %v4143 = vld [vmem:[#allocation4 + $0x6c8] sm:$0xff]
    %v4144 = vld [vmem:[#allocation4 + $0x6d0] sm:$0xff]
    %v4145 = vld [vmem:[#allocation4 + $0x6d8] sm:$0xff]
    %v4146 = vld [vmem:[#allocation4 + $0x6e0] sm:$0xff]
    %v4147 = vld [vmem:[#allocation4 + $0x6e8] sm:$0xff]
    %v4148 = vld [vmem:[#allocation4 + $0x6f0] sm:$0xff]
    %v4149 = vld [vmem:[#allocation4 + $0x6f8] sm:$0xff]
    %v4150 = vld [vmem:[#allocation4 + $0x700] sm:$0xff]
    %v4151 = vld [vmem:[#allocation4 + $0x708] sm:$0xff]
    %v4152 = vld [vmem:[#allocation4 + $0x710] sm:$0xff]
    %v4153 = vld [vmem:[#allocation4 + $0x718] sm:$0xff]
    %v4154 = vld [vmem:[#allocation4 + $0x720] sm:$0xff]
    %v4155 = vld [vmem:[#allocation4 + $0x728] sm:$0xff]
    %v4156 = vld [vmem:[#allocation4 + $0x730] sm:$0xff]
    %v4157 = vld [vmem:[#allocation4 + $0x738] sm:$0xff]
    %v4158 = vld [vmem:[#allocation4 + $0x740] sm:$0xff]
    %v4159 = vld [vmem:[#allocation4 + $0x748] sm:$0xff]
    %v4160 = vld [vmem:[#allocation4 + $0x750] sm:$0xff]
    %v4161 = vld [vmem:[#allocation4 + $0x758] sm:$0xff]
    %v4162 = vld [vmem:[#allocation4 + $0x760] sm:$0xff]
    %v4163 = vld [vmem:[#allocation4 + $0x768] sm:$0xff]
    %v4164 = vld [vmem:[#allocation4 + $0x770] sm:$0xff]
    %v4165 = vld [vmem:[#allocation4 + $0x778] sm:$0xff]
    %v4166 = vld [vmem:[#allocation4 + $0x780] sm:$0xff]
    %v4167 = vld [vmem:[#allocation4 + $0x788] sm:$0xff]
    %v4168 = vld [vmem:[#allocation4 + $0x790] sm:$0xff]
    %v4169 = vld [vmem:[#allocation4 + $0x798] sm:$0xff]
    %v4170 = vld [vmem:[#allocation4 + $0x7a0] sm:$0xff]
    %v4171 = vld [vmem:[#allocation4 + $0x7a8] sm:$0xff]
    %v4172 = vld [vmem:[#allocation4 + $0x7b0] sm:$0xff]
    %v4173 = vld [vmem:[#allocation4 + $0x7b8] sm:$0xff]
    %v4174 = vld [vmem:[#allocation4 + $0x7c0] sm:$0xff]
    %v4175 = vld [vmem:[#allocation4 + $0x7c8] sm:$0xff]
    %v4176 = vld [vmem:[#allocation4 + $0x7d0] sm:$0xff]
    %v4177 = vld [vmem:[#allocation4 + $0x7d8] sm:$0xff]
    %v4178 = vld [vmem:[#allocation4 + $0x7e0] sm:$0xff]
    %v4179 = vld [vmem:[#allocation4 + $0x7e8] sm:$0xff]
    %v4180 = vld [vmem:[#allocation4 + $0x7f0] sm:$0xff]
    %v4181 = vld [vmem:[#allocation4 + $0x7f8] sm:$0xff]
    %v4182 = vld [vmem:[#allocation4 + $0x800] sm:$0xff]
    %v4183 = vld [vmem:[#allocation4 + $0x808] sm:$0xff]
    %v4184 = vld [vmem:[#allocation4 + $0x810] sm:$0xff]
    %v4185 = vld [vmem:[#allocation4 + $0x818] sm:$0xff]
    %v4186 = vld [vmem:[#allocation4 + $0x820] sm:$0xff]
    %v4187 = vld [vmem:[#allocation4 + $0x828] sm:$0xff]
    %v4188 = vld [vmem:[#allocation4 + $0x830] sm:$0xff]
    %v4189 = vld [vmem:[#allocation4 + $0x838] sm:$0xff]
    %v4190 = vld [vmem:[#allocation4 + $0x840] sm:$0xff]
    %v4191 = vld [vmem:[#allocation4 + $0x848] sm:$0xff]
    %v4192 = vld [vmem:[#allocation4 + $0x850] sm:$0xff]
    %v4193 = vld [vmem:[#allocation4 + $0x858] sm:$0xff]
    %v4194 = vld [vmem:[#allocation4 + $0x860] sm:$0xff]
    %v4195 = vld [vmem:[#allocation4 + $0x868] sm:$0xff]
    %v4196 = vld [vmem:[#allocation4 + $0x870] sm:$0xff]
    %v4197 = vld [vmem:[#allocation4 + $0x878] sm:$0xff]
    %v4198 = vld [vmem:[#allocation4 + $0x880] sm:$0xff]
    %v4199 = vld [vmem:[#allocation4 + $0x888] sm:$0xff]
    %v4200 = vld [vmem:[#allocation4 + $0x890] sm:$0xff]
    %v4201 = vld [vmem:[#allocation4 + $0x898] sm:$0xff]
    %v4202 = vld [vmem:[#allocation4 + $0x8a0] sm:$0xff]
    %v4203 = vld [vmem:[#allocation4 + $0x8a8] sm:$0xff]
    %v4204 = vld [vmem:[#allocation4 + $0x8b0] sm:$0xff]
    %v4205 = vld [vmem:[#allocation4 + $0x8b8] sm:$0xff]
    %v4206 = vld [vmem:[#allocation4 + $0x8c0] sm:$0xff]
    %v4207 = vld [vmem:[#allocation4 + $0x8c8] sm:$0xff]
    %v4208 = vld [vmem:[#allocation4 + $0x8d0] sm:$0xff]
    %v4209 = vld [vmem:[#allocation4 + $0x8d8] sm:$0xff]
    %v4210 = vld [vmem:[#allocation4 + $0x8e0] sm:$0xff]
    %v4211 = vld [vmem:[#allocation4 + $0x8e8] sm:$0xff]
    %v4212 = vld [vmem:[#allocation4 + $0x8f0] sm:$0xff]
    %v4213 = vld [vmem:[#allocation4 + $0x8f8] sm:$0xff]
    %v4214 = vmul.f32 %v3638, 1.1111112
    %v4215 = vmul.f32 %v3639, 1.1111112
    %v4216 = vmul.f32 %v3640, 1.1111112
    %v4217 = vmul.f32 %v3641, 1.1111112
    %v4218 = vmul.f32 %v3642, 1.1111112
    %v4219 = vmul.f32 %v3643, 1.1111112
    %v4220 = vmul.f32 %v3644, 1.1111112
    %v4221 = vmul.f32 %v3645, 1.1111112
    %v4222 = vmul.f32 %v3646, 1.1111112
    %v4223 = vmul.f32 %v3647, 1.1111112
    %v4224 = vmul.f32 %v3648, 1.1111112
    %v4225 = vmul.f32 %v3649, 1.1111112
    %v4226 = vmul.f32 %v3650, 1.1111112
    %v4227 = vmul.f32 %v3651, 1.1111112
    %v4228 = vmul.f32 %v3652, 1.1111112
    %v4229 = vmul.f32 %v3653, 1.1111112
    %v4230 = vmul.f32 %v3654, 1.1111112
    %v4231 = vmul.f32 %v3655, 1.1111112
    %v4232 = vmul.f32 %v3656, 1.1111112
    %v4233 = vmul.f32 %v3657, 1.1111112
    %v4234 = vmul.f32 %v3658, 1.1111112
    %v4235 = vmul.f32 %v3659, 1.1111112
    %v4236 = vmul.f32 %v3660, 1.1111112
    %v4237 = vmul.f32 %v3661, 1.1111112
    %v4238 = vmul.f32 %v3662, 1.1111112
    %v4239 = vmul.f32 %v3663, 1.1111112
    %v4240 = vmul.f32 %v3664, 1.1111112
    %v4241 = vmul.f32 %v3665, 1.1111112
    %v4242 = vmul.f32 %v3666, 1.1111112
    %v4243 = vmul.f32 %v3667, 1.1111112
    %v4244 = vmul.f32 %v3668, 1.1111112
    %v4245 = vmul.f32 %v3669, 1.1111112
    %v4246 = vmul.f32 %v3670, 1.1111112
    %v4247 = vmul.f32 %v3671, 1.1111112
    %v4248 = vmul.f32 %v3672, 1.1111112
    %v4249 = vmul.f32 %v3673, 1.1111112
    %v4250 = vmul.f32 %v3674, 1.1111112
    %v4251 = vmul.f32 %v3675, 1.1111112
    %v4252 = vmul.f32 %v3676, 1.1111112
    %v4253 = vmul.f32 %v3677, 1.1111112
    %v4254 = vmul.f32 %v3678, 1.1111112
    %v4255 = vmul.f32 %v3679, 1.1111112
    %v4256 = vmul.f32 %v3680, 1.1111112
    %v4257 = vmul.f32 %v3681, 1.1111112
    %v4258 = vmul.f32 %v3682, 1.1111112
    %v4259 = vmul.f32 %v3683, 1.1111112
    %v4260 = vmul.f32 %v3684, 1.1111112
    %v4261 = vmul.f32 %v3685, 1.1111112
    %v4262 = vmul.f32 %v3686, 1.1111112
    %v4263 = vmul.f32 %v3687, 1.1111112
    %v4264 = vmul.f32 %v3688, 1.1111112
    %v4265 = vmul.f32 %v3689, 1.1111112
    %v4266 = vmul.f32 %v3690, 1.1111112
    %v4267 = vmul.f32 %v3691, 1.1111112
    %v4268 = vmul.f32 %v3692, 1.1111112
    %v4269 = vmul.f32 %v3693, 1.1111112
    %v4270 = vmul.f32 %v3694, 1.1111112
    %v4271 = vmul.f32 %v3695, 1.1111112
    %v4272 = vmul.f32 %v3696, 1.1111112
    %v4273 = vmul.f32 %v3697, 1.1111112
    %v4274 = vmul.f32 %v3698, 1.1111112
    %v4275 = vmul.f32 %v3699, 1.1111112
    %v4276 = vmul.f32 %v3700, 1.1111112
    %v4277 = vmul.f32 %v3701, 1.1111112
    %v4278 = vmul.f32 %v3702, 1.1111112
    %v4279 = vmul.f32 %v3703, 1.1111112
    %v4280 = vmul.f32 %v3704, 1.1111112
    %v4281 = vmul.f32 %v3705, 1.1111112
    %v4282 = vmul.f32 %v3706, 1.1111112
    %v4283 = vmul.f32 %v3707, 1.1111112
    %v4284 = vmul.f32 %v3708, 1.1111112
    %v4285 = vmul.f32 %v3709, 1.1111112
    %v4286 = vmul.f32 %v3710, 1.1111112
    %v4287 = vmul.f32 %v3711, 1.1111112
    %v4288 = vmul.f32 %v3712, 1.1111112
    %v4289 = vmul.f32 %v3713, 1.1111112
    %v4290 = vmul.f32 %v3714, 1.1111112
    %v4291 = vmul.f32 %v3715, 1.1111112
    %v4292 = vmul.f32 %v3716, 1.1111112
    %v4293 = vmul.f32 %v3717, 1.1111112
    %v4294 = vmul.f32 %v3718, 1.1111112
    %v4295 = vmul.f32 %v3719, 1.1111112
    %v4296 = vmul.f32 %v3720, 1.1111112
    %v4297 = vmul.f32 %v3721, 1.1111112
    %v4298 = vmul.f32 %v3722, 1.1111112
    %v4299 = vmul.f32 %v3723, 1.1111112
    %v4300 = vmul.f32 %v3724, 1.1111112
    %v4301 = vmul.f32 %v3725, 1.1111112
    %v4302 = vmul.f32 %v3726, 1.1111112
    %v4303 = vmul.f32 %v3727, 1.1111112
    %v4304 = vmul.f32 %v3728, 1.1111112
    %v4305 = vmul.f32 %v3729, 1.1111112
    %v4306 = vmul.f32 %v3730, 1.1111112
    %v4307 = vmul.f32 %v3731, 1.1111112
    %v4308 = vmul.f32 %v3732, 1.1111112
    %v4309 = vmul.f32 %v3733, 1.1111112
    %v4310 = vmul.f32 %v3734, 1.1111112
    %v4311 = vmul.f32 %v3735, 1.1111112
    %v4312 = vmul.f32 %v3736, 1.1111112
    %v4313 = vmul.f32 %v3737, 1.1111112
    %v4314 = vmul.f32 %v3738, 1.1111112
    %v4315 = vmul.f32 %v3739, 1.1111112
    %v4316 = vmul.f32 %v3740, 1.1111112
    %v4317 = vmul.f32 %v3741, 1.1111112
    %v4318 = vmul.f32 %v3742, 1.1111112
    %v4319 = vmul.f32 %v3743, 1.1111112
    %v4320 = vmul.f32 %v3744, 1.1111112
    %v4321 = vmul.f32 %v3745, 1.1111112
    %v4322 = vmul.f32 %v3746, 1.1111112
    %v4323 = vmul.f32 %v3747, 1.1111112
    %v4324 = vmul.f32 %v3748, 1.1111112
    %v4325 = vmul.f32 %v3749, 1.1111112
    %v4326 = vmul.f32 %v3750, 1.1111112
    %v4327 = vmul.f32 %v3751, 1.1111112
    %v4328 = vmul.f32 %v3752, 1.1111112
    %v4329 = vmul.f32 %v3753, 1.1111112
    %v4330 = vmul.f32 %v3754, 1.1111112
    %v4331 = vmul.f32 %v3755, 1.1111112
    %v4332 = vmul.f32 %v3756, 1.1111112
    %v4333 = vmul.f32 %v3757, 1.1111112
    %v4334 = vmul.f32 %v3758, 1.1111112
    %v4335 = vmul.f32 %v3759, 1.1111112
    %v4336 = vmul.f32 %v3760, 1.1111112
    %v4337 = vmul.f32 %v3761, 1.1111112
    %v4338 = vmul.f32 %v3762, 1.1111112
    %v4339 = vmul.f32 %v3763, 1.1111112
    %v4340 = vmul.f32 %v3764, 1.1111112
    %v4341 = vmul.f32 %v3765, 1.1111112
    %v4342 = vmul.f32 %v3766, 1.1111112
    %v4343 = vmul.f32 %v3767, 1.1111112
    %v4344 = vmul.f32 %v3768, 1.1111112
    %v4345 = vmul.f32 %v3769, 1.1111112
    %v4346 = vmul.f32 %v3770, 1.1111112
    %v4347 = vmul.f32 %v3771, 1.1111112
    %v4348 = vmul.f32 %v3772, 1.1111112
    %v4349 = vmul.f32 %v3773, 1.1111112
    %v4350 = vmul.f32 %v3774, 1.1111112
    %v4351 = vmul.f32 %v3775, 1.1111112
    %v4352 = vmul.f32 %v3776, 1.1111112
    %v4353 = vmul.f32 %v3777, 1.1111112
    %v4354 = vmul.f32 %v3778, 1.1111112
    %v4355 = vmul.f32 %v3779, 1.1111112
    %v4356 = vmul.f32 %v3780, 1.1111112
    %v4357 = vmul.f32 %v3781, 1.1111112
    %v4358 = vmul.f32 %v3782, 1.1111112
    %v4359 = vmul.f32 %v3783, 1.1111112
    %v4360 = vmul.f32 %v3784, 1.1111112
    %v4361 = vmul.f32 %v3785, 1.1111112
    %v4362 = vmul.f32 %v3786, 1.1111112
    %v4363 = vmul.f32 %v3787, 1.1111112
    %v4364 = vmul.f32 %v3788, 1.1111112
    %v4365 = vmul.f32 %v3789, 1.1111112
    %v4366 = vmul.f32 %v3790, 1.1111112
    %v4367 = vmul.f32 %v3791, 1.1111112
    %v4368 = vmul.f32 %v3792, 1.1111112
    %v4369 = vmul.f32 %v3793, 1.1111112
    %v4370 = vmul.f32 %v3794, 1.1111112
    %v4371 = vmul.f32 %v3795, 1.1111112
    %v4372 = vmul.f32 %v3796, 1.1111112
    %v4373 = vmul.f32 %v3797, 1.1111112
    %v4374 = vmul.f32 %v3798, 1.1111112
    %v4375 = vmul.f32 %v3799, 1.1111112
    %v4376 = vmul.f32 %v3800, 1.1111112
    %v4377 = vmul.f32 %v3801, 1.1111112
    %v4378 = vmul.f32 %v3802, 1.1111112
    %v4379 = vmul.f32 %v3803, 1.1111112
    %v4380 = vmul.f32 %v3804, 1.1111112
    %v4381 = vmul.f32 %v3805, 1.1111112
    %v4382 = vmul.f32 %v3806, 1.1111112
    %v4383 = vmul.f32 %v3807, 1.1111112
    %v4384 = vmul.f32 %v3808, 1.1111112
    %v4385 = vmul.f32 %v3809, 1.1111112
    %v4386 = vmul.f32 %v3810, 1.1111112
    %v4387 = vmul.f32 %v3811, 1.1111112
    %v4388 = vmul.f32 %v3812, 1.1111112
    %v4389 = vmul.f32 %v3813, 1.1111112
    %v4390 = vmul.f32 %v3814, 1.1111112
    %v4391 = vmul.f32 %v3815, 1.1111112
    %v4392 = vmul.f32 %v3816, 1.1111112
    %v4393 = vmul.f32 %v3817, 1.1111112
    %v4394 = vmul.f32 %v3818, 1.1111112
    %v4395 = vmul.f32 %v3819, 1.1111112
    %v4396 = vmul.f32 %v3820, 1.1111112
    %v4397 = vmul.f32 %v3821, 1.1111112
    %v4398 = vmul.f32 %v3822, 1.1111112
    %v4399 = vmul.f32 %v3823, 1.1111112
    %v4400 = vmul.f32 %v3824, 1.1111112
    %v4401 = vmul.f32 %v3825, 1.1111112
    %v4402 = vmul.f32 %v3826, 1.1111112
    %v4403 = vmul.f32 %v3827, 1.1111112
    %v4404 = vmul.f32 %v3828, 1.1111112
    %v4405 = vmul.f32 %v3829, 1.1111112
    %v4406 = vmul.f32 %v3830, 1.1111112
    %v4407 = vmul.f32 %v3831, 1.1111112
    %v4408 = vmul.f32 %v3832, 1.1111112
    %v4409 = vmul.f32 %v3833, 1.1111112
    %v4410 = vmul.f32 %v3834, 1.1111112
    %v4411 = vmul.f32 %v3835, 1.1111112
    %v4412 = vmul.f32 %v3836, 1.1111112
    %v4413 = vmul.f32 %v3837, 1.1111112
    %v4414 = vmul.f32 %v3838, 1.1111112
    %v4415 = vmul.f32 %v3839, 1.1111112
    %v4416 = vmul.f32 %v3840, 1.1111112
    %v4417 = vmul.f32 %v3841, 1.1111112
    %v4418 = vmul.f32 %v3842, 1.1111112
    %v4419 = vmul.f32 %v3843, 1.1111112
    %v4420 = vmul.f32 %v3844, 1.1111112
    %v4421 = vmul.f32 %v3845, 1.1111112
    %v4422 = vmul.f32 %v3846, 1.1111112
    %v4423 = vmul.f32 %v3847, 1.1111112
    %v4424 = vmul.f32 %v3848, 1.1111112
    %v4425 = vmul.f32 %v3849, 1.1111112
    %v4426 = vmul.f32 %v3850, 1.1111112
    %v4427 = vmul.f32 %v3851, 1.1111112
    %v4428 = vmul.f32 %v3852, 1.1111112
    %v4429 = vmul.f32 %v3853, 1.1111112
    %v4430 = vmul.f32 %v3854, 1.1111112
    %v4431 = vmul.f32 %v3855, 1.1111112
    %v4432 = vmul.f32 %v3856, 1.1111112
    %v4433 = vmul.f32 %v3857, 1.1111112
    %v4434 = vmul.f32 %v3858, 1.1111112
    %v4435 = vmul.f32 %v3859, 1.1111112
    %v4436 = vmul.f32 %v3860, 1.1111112
    %v4437 = vmul.f32 %v3861, 1.1111112
    %v4438 = vmul.f32 %v3862, 1.1111112
    %v4439 = vmul.f32 %v3863, 1.1111112
    %v4440 = vmul.f32 %v3864, 1.1111112
    %v4441 = vmul.f32 %v3865, 1.1111112
    %v4442 = vmul.f32 %v3866, 1.1111112
    %v4443 = vmul.f32 %v3867, 1.1111112
    %v4444 = vmul.f32 %v3868, 1.1111112
    %v4445 = vmul.f32 %v3869, 1.1111112
    %v4446 = vmul.f32 %v3870, 1.1111112
    %v4447 = vmul.f32 %v3871, 1.1111112
    %v4448 = vmul.f32 %v3872, 1.1111112
    %v4449 = vmul.f32 %v3873, 1.1111112
    %v4450 = vmul.f32 %v3874, 1.1111112
    %v4451 = vmul.f32 %v3875, 1.1111112
    %v4452 = vmul.f32 %v3876, 1.1111112
    %v4453 = vmul.f32 %v3877, 1.1111112
    %v4454 = vmul.f32 %v3878, 1.1111112
    %v4455 = vmul.f32 %v3879, 1.1111112
    %v4456 = vmul.f32 %v3880, 1.1111112
    %v4457 = vmul.f32 %v3881, 1.1111112
    %v4458 = vmul.f32 %v3882, 1.1111112
    %v4459 = vmul.f32 %v3883, 1.1111112
    %v4460 = vmul.f32 %v3884, 1.1111112
    %v4461 = vmul.f32 %v3885, 1.1111112
    %v4462 = vmul.f32 %v3886, 1.1111112
    %v4463 = vmul.f32 %v3887, 1.1111112
    %v4464 = vmul.f32 %v3888, 1.1111112
    %v4465 = vmul.f32 %v3889, 1.1111112
    %v4466 = vmul.f32 %v3890, 1.1111112
    %v4467 = vmul.f32 %v3891, 1.1111112
    %v4468 = vmul.f32 %v3892, 1.1111112
    %v4469 = vmul.f32 %v3893, 1.1111112
    %v4470 = vmul.f32 %v3894, 1.1111112
    %v4471 = vmul.f32 %v3895, 1.1111112
    %v4472 = vmul.f32 %v3896, 1.1111112
    %v4473 = vmul.f32 %v3897, 1.1111112
    %v4474 = vmul.f32 %v3898, 1.1111112
    %v4475 = vmul.f32 %v3899, 1.1111112
    %v4476 = vmul.f32 %v3900, 1.1111112
    %v4477 = vmul.f32 %v3901, 1.1111112
    %v4478 = vmul.f32 %v3902, 1.1111112
    %v4479 = vmul.f32 %v3903, 1.1111112
    %v4480 = vmul.f32 %v3904, 1.1111112
    %v4481 = vmul.f32 %v3905, 1.1111112
    %v4482 = vmul.f32 %v3906, 1.1111112
    %v4483 = vmul.f32 %v3907, 1.1111112
    %v4484 = vmul.f32 %v3908, 1.1111112
    %v4485 = vmul.f32 %v3909, 1.1111112
    %v4486 = vmul.f32 %v3910, 1.1111112
    %v4487 = vmul.f32 %v3911, 1.1111112
    %v4488 = vmul.f32 %v3912, 1.1111112
    %v4489 = vmul.f32 %v3913, 1.1111112
    %v4490 = vmul.f32 %v3914, 1.1111112
    %v4491 = vmul.f32 %v3915, 1.1111112
    %v4492 = vmul.f32 %v3916, 1.1111112
    %v4493 = vmul.f32 %v3917, 1.1111112
    %v4494 = vmul.f32 %v3918, 1.1111112
    %v4495 = vmul.f32 %v3919, 1.1111112
    %v4496 = vmul.f32 %v3920, 1.1111112
    %v4497 = vmul.f32 %v3921, 1.1111112
    %v4498 = vmul.f32 %v3922, 1.1111112
    %v4499 = vmul.f32 %v3923, 1.1111112
    %v4500 = vmul.f32 %v3924, 1.1111112
    %v4501 = vmul.f32 %v3925, 1.1111112
    %v4502 = vmul.f32 %v3926, %v4214
    %v4503 = vmul.f32 %v3927, %v4215
    %v4504 = vmul.f32 %v3928, %v4216
    %v4505 = vmul.f32 %v3929, %v4217
    %v4506 = vmul.f32 %v3930, %v4218
    %v4507 = vmul.f32 %v3931, %v4219
    %v4508 = vmul.f32 %v3932, %v4220
    %v4509 = vmul.f32 %v3933, %v4221
    %v4510 = vmul.f32 %v3934, %v4222
    %v4511 = vmul.f32 %v3935, %v4223
    %v4512 = vmul.f32 %v3936, %v4224
    %v4513 = vmul.f32 %v3937, %v4225
    %v4514 = vmul.f32 %v3938, %v4226
    %v4515 = vmul.f32 %v3939, %v4227
    %v4516 = vmul.f32 %v3940, %v4228
    %v4517 = vmul.f32 %v3941, %v4229
    %v4518 = vmul.f32 %v3942, %v4230
    %v4519 = vmul.f32 %v3943, %v4231
    %v4520 = vmul.f32 %v3944, %v4232
    %v4521 = vmul.f32 %v3945, %v4233
    %v4522 = vmul.f32 %v3946, %v4234
    %v4523 = vmul.f32 %v3947, %v4235
    %v4524 = vmul.f32 %v3948, %v4236
    %v4525 = vmul.f32 %v3949, %v4237
    %v4526 = vmul.f32 %v3950, %v4238
    %v4527 = vmul.f32 %v3951, %v4239
    %v4528 = vmul.f32 %v3952, %v4240
    %v4529 = vmul.f32 %v3953, %v4241
    %v4530 = vmul.f32 %v3954, %v4242
    %v4531 = vmul.f32 %v3955, %v4243
    %v4532 = vmul.f32 %v3956, %v4244
    %v4533 = vmul.f32 %v3957, %v4245
    %v4534 = vmul.f32 %v3958, %v4246
    %v4535 = vmul.f32 %v3959, %v4247
    %v4536 = vmul.f32 %v3960, %v4248
    %v4537 = vmul.f32 %v3961, %v4249
    %v4538 = vmul.f32 %v3962, %v4250
    %v4539 = vmul.f32 %v3963, %v4251
    %v4540 = vmul.f32 %v3964, %v4252
    %v4541 = vmul.f32 %v3965, %v4253
    %v4542 = vmul.f32 %v3966, %v4254
    %v4543 = vmul.f32 %v3967, %v4255
    %v4544 = vmul.f32 %v3968, %v4256
    %v4545 = vmul.f32 %v3969, %v4257
    %v4546 = vmul.f32 %v3970, %v4258
    %v4547 = vmul.f32 %v3971, %v4259
    %v4548 = vmul.f32 %v3972, %v4260
    %v4549 = vmul.f32 %v3973, %v4261
    %v4550 = vmul.f32 %v3974, %v4262
    %v4551 = vmul.f32 %v3975, %v4263
    %v4552 = vmul.f32 %v3976, %v4264
    %v4553 = vmul.f32 %v3977, %v4265
    %v4554 = vmul.f32 %v3978, %v4266
    %v4555 = vmul.f32 %v3979, %v4267
    %v4556 = vmul.f32 %v3980, %v4268
    %v4557 = vmul.f32 %v3981, %v4269
    %v4558 = vmul.f32 %v3982, %v4270
    %v4559 = vmul.f32 %v3983, %v4271
    %v4560 = vmul.f32 %v3984, %v4272
    %v4561 = vmul.f32 %v3985, %v4273
    %v4562 = vmul.f32 %v3986, %v4274
    %v4563 = vmul.f32 %v3987, %v4275
    %v4564 = vmul.f32 %v3988, %v4276
    %v4565 = vmul.f32 %v3989, %v4277
    %v4566 = vmul.f32 %v3990, %v4278
    %v4567 = vmul.f32 %v3991, %v4279
    %v4568 = vmul.f32 %v3992, %v4280
    %v4569 = vmul.f32 %v3993, %v4281
    %v4570 = vmul.f32 %v3994, %v4282
    %v4571 = vmul.f32 %v3995, %v4283
    %v4572 = vmul.f32 %v3996, %v4284
    %v4573 = vmul.f32 %v3997, %v4285
    %v4574 = vmul.f32 %v3998, %v4286
    %v4575 = vmul.f32 %v3999, %v4287
    %v4576 = vmul.f32 %v4000, %v4288
    %v4577 = vmul.f32 %v4001, %v4289
    %v4578 = vmul.f32 %v4002, %v4290
    %v4579 = vmul.f32 %v4003, %v4291
    %v4580 = vmul.f32 %v4004, %v4292
    %v4581 = vmul.f32 %v4005, %v4293
    %v4582 = vmul.f32 %v4006, %v4294
    %v4583 = vmul.f32 %v4007, %v4295
    %v4584 = vmul.f32 %v4008, %v4296
    %v4585 = vmul.f32 %v4009, %v4297
    %v4586 = vmul.f32 %v4010, %v4298
    %v4587 = vmul.f32 %v4011, %v4299
    %v4588 = vmul.f32 %v4012, %v4300
    %v4589 = vmul.f32 %v4013, %v4301
    %v4590 = vmul.f32 %v4014, %v4302
    %v4591 = vmul.f32 %v4015, %v4303
    %v4592 = vmul.f32 %v4016, %v4304
    %v4593 = vmul.f32 %v4017, %v4305
    %v4594 = vmul.f32 %v4018, %v4306
    %v4595 = vmul.f32 %v4019, %v4307
    %v4596 = vmul.f32 %v4020, %v4308
    %v4597 = vmul.f32 %v4021, %v4309
    %v4598 = vmul.f32 %v4022, %v4310
    %v4599 = vmul.f32 %v4023, %v4311
    %v4600 = vmul.f32 %v4024, %v4312
    %v4601 = vmul.f32 %v4025, %v4313
    %v4602 = vmul.f32 %v4026, %v4314
    %v4603 = vmul.f32 %v4027, %v4315
    %v4604 = vmul.f32 %v4028, %v4316
    %v4605 = vmul.f32 %v4029, %v4317
    %v4606 = vmul.f32 %v4030, %v4318
    %v4607 = vmul.f32 %v4031, %v4319
    %v4608 = vmul.f32 %v4032, %v4320
    %v4609 = vmul.f32 %v4033, %v4321
    %v4610 = vmul.f32 %v4034, %v4322
    %v4611 = vmul.f32 %v4035, %v4323
    %v4612 = vmul.f32 %v4036, %v4324
    %v4613 = vmul.f32 %v4037, %v4325
    %v4614 = vmul.f32 %v4038, %v4326
    %v4615 = vmul.f32 %v4039, %v4327
    %v4616 = vmul.f32 %v4040, %v4328
    %v4617 = vmul.f32 %v4041, %v4329
    %v4618 = vmul.f32 %v4042, %v4330
    %v4619 = vmul.f32 %v4043, %v4331
    %v4620 = vmul.f32 %v4044, %v4332
    %v4621 = vmul.f32 %v4045, %v4333
    %v4622 = vmul.f32 %v4046, %v4334
    %v4623 = vmul.f32 %v4047, %v4335
    %v4624 = vmul.f32 %v4048, %v4336
    %v4625 = vmul.f32 %v4049, %v4337
    %v4626 = vmul.f32 %v4050, %v4338
    %v4627 = vmul.f32 %v4051, %v4339
    %v4628 = vmul.f32 %v4052, %v4340
    %v4629 = vmul.f32 %v4053, %v4341
    %v4630 = vmul.f32 %v4054, %v4342
    %v4631 = vmul.f32 %v4055, %v4343
    %v4632 = vmul.f32 %v4056, %v4344
    %v4633 = vmul.f32 %v4057, %v4345
    %v4634 = vmul.f32 %v4058, %v4346
    %v4635 = vmul.f32 %v4059, %v4347
    %v4636 = vmul.f32 %v4060, %v4348
    %v4637 = vmul.f32 %v4061, %v4349
    %v4638 = vmul.f32 %v4062, %v4350
    %v4639 = vmul.f32 %v4063, %v4351
    %v4640 = vmul.f32 %v4064, %v4352
    %v4641 = vmul.f32 %v4065, %v4353
    %v4642 = vmul.f32 %v4066, %v4354
    %v4643 = vmul.f32 %v4067, %v4355
    %v4644 = vmul.f32 %v4068, %v4356
    %v4645 = vmul.f32 %v4069, %v4357
    %v4646 = vmul.f32 %v4070, %v4358
    %v4647 = vmul.f32 %v4071, %v4359
    %v4648 = vmul.f32 %v4072, %v4360
    %v4649 = vmul.f32 %v4073, %v4361
    %v4650 = vmul.f32 %v4074, %v4362
    %v4651 = vmul.f32 %v4075, %v4363
    %v4652 = vmul.f32 %v4076, %v4364
    %v4653 = vmul.f32 %v4077, %v4365
    %v4654 = vmul.f32 %v4078, %v4366
    %v4655 = vmul.f32 %v4079, %v4367
    %v4656 = vmul.f32 %v4080, %v4368
    %v4657 = vmul.f32 %v4081, %v4369
    %v4658 = vmul.f32 %v4082, %v4370
    %v4659 = vmul.f32 %v4083, %v4371
    %v4660 = vmul.f32 %v4084, %v4372
    %v4661 = vmul.f32 %v4085, %v4373
    %v4662 = vmul.f32 %v4086, %v4374
    %v4663 = vmul.f32 %v4087, %v4375
    %v4664 = vmul.f32 %v4088, %v4376
    %v4665 = vmul.f32 %v4089, %v4377
    %v4666 = vmul.f32 %v4090, %v4378
    %v4667 = vmul.f32 %v4091, %v4379
    %v4668 = vmul.f32 %v4092, %v4380
    %v4669 = vmul.f32 %v4093, %v4381
    %v4670 = vmul.f32 %v4094, %v4382
    %v4671 = vmul.f32 %v4095, %v4383
    %v4672 = vmul.f32 %v4096, %v4384
    %v4673 = vmul.f32 %v4097, %v4385
    %v4674 = vmul.f32 %v4098, %v4386
    %v4675 = vmul.f32 %v4099, %v4387
    %v4676 = vmul.f32 %v4100, %v4388
    %v4677 = vmul.f32 %v4101, %v4389
    %v4678 = vmul.f32 %v4102, %v4390
    %v4679 = vmul.f32 %v4103, %v4391
    %v4680 = vmul.f32 %v4104, %v4392
    %v4681 = vmul.f32 %v4105, %v4393
    %v4682 = vmul.f32 %v4106, %v4394
    %v4683 = vmul.f32 %v4107, %v4395
    %v4684 = vmul.f32 %v4108, %v4396
    %v4685 = vmul.f32 %v4109, %v4397
    %v4686 = vmul.f32 %v4110, %v4398
    %v4687 = vmul.f32 %v4111, %v4399
    %v4688 = vmul.f32 %v4112, %v4400
    %v4689 = vmul.f32 %v4113, %v4401
    %v4690 = vmul.f32 %v4114, %v4402
    %v4691 = vmul.f32 %v4115, %v4403
    %v4692 = vmul.f32 %v4116, %v4404
    %v4693 = vmul.f32 %v4117, %v4405
    %v4694 = vmul.f32 %v4118, %v4406
    %v4695 = vmul.f32 %v4119, %v4407
    %v4696 = vmul.f32 %v4120, %v4408
    %v4697 = vmul.f32 %v4121, %v4409
    %v4698 = vmul.f32 %v4122, %v4410
    %v4699 = vmul.f32 %v4123, %v4411
    %v4700 = vmul.f32 %v4124, %v4412
    %v4701 = vmul.f32 %v4125, %v4413
    %v4702 = vmul.f32 %v4126, %v4414
    %v4703 = vmul.f32 %v4127, %v4415
    %v4704 = vmul.f32 %v4128, %v4416
    %v4705 = vmul.f32 %v4129, %v4417
    %v4706 = vmul.f32 %v4130, %v4418
    %v4707 = vmul.f32 %v4131, %v4419
    %v4708 = vmul.f32 %v4132, %v4420
    %v4709 = vmul.f32 %v4133, %v4421
    %v4710 = vmul.f32 %v4134, %v4422
    %v4711 = vmul.f32 %v4135, %v4423
    %v4712 = vmul.f32 %v4136, %v4424
    %v4713 = vmul.f32 %v4137, %v4425
    %v4714 = vmul.f32 %v4138, %v4426
    %v4715 = vmul.f32 %v4139, %v4427
    %v4716 = vmul.f32 %v4140, %v4428
    %v4717 = vmul.f32 %v4141, %v4429
    %v4718 = vmul.f32 %v4142, %v4430
    %v4719 = vmul.f32 %v4143, %v4431
    %v4720 = vmul.f32 %v4144, %v4432
    %v4721 = vmul.f32 %v4145, %v4433
    %v4722 = vmul.f32 %v4146, %v4434
    %v4723 = vmul.f32 %v4147, %v4435
    %v4724 = vmul.f32 %v4148, %v4436
    %v4725 = vmul.f32 %v4149, %v4437
    %v4726 = vmul.f32 %v4150, %v4438
    %v4727 = vmul.f32 %v4151, %v4439
    %v4728 = vmul.f32 %v4152, %v4440
    %v4729 = vmul.f32 %v4153, %v4441
    %v4730 = vmul.f32 %v4154, %v4442
    %v4731 = vmul.f32 %v4155, %v4443
    %v4732 = vmul.f32 %v4156, %v4444
    %v4733 = vmul.f32 %v4157, %v4445
    %v4734 = vmul.f32 %v4158, %v4446
    %v4735 = vmul.f32 %v4159, %v4447
    %v4736 = vmul.f32 %v4160, %v4448
    %v4737 = vmul.f32 %v4161, %v4449
    %v4738 = vmul.f32 %v4162, %v4450
    %v4739 = vmul.f32 %v4163, %v4451
    %v4740 = vmul.f32 %v4164, %v4452
    %v4741 = vmul.f32 %v4165, %v4453
    %v4742 = vmul.f32 %v4166, %v4454
    %v4743 = vmul.f32 %v4167, %v4455
    %v4744 = vmul.f32 %v4168, %v4456
    %v4745 = vmul.f32 %v4169, %v4457
    %v4746 = vmul.f32 %v4170, %v4458
    %v4747 = vmul.f32 %v4171, %v4459
    %v4748 = vmul.f32 %v4172, %v4460
    %v4749 = vmul.f32 %v4173, %v4461
    %v4750 = vmul.f32 %v4174, %v4462
    %v4751 = vmul.f32 %v4175, %v4463
    %v4752 = vmul.f32 %v4176, %v4464
    %v4753 = vmul.f32 %v4177, %v4465
    %v4754 = vmul.f32 %v4178, %v4466
    %v4755 = vmul.f32 %v4179, %v4467
    %v4756 = vmul.f32 %v4180, %v4468
    %v4757 = vmul.f32 %v4181, %v4469
    %v4758 = vmul.f32 %v4182, %v4470
    %v4759 = vmul.f32 %v4183, %v4471
    %v4760 = vmul.f32 %v4184, %v4472
    %v4761 = vmul.f32 %v4185, %v4473
    %v4762 = vmul.f32 %v4186, %v4474
    %v4763 = vmul.f32 %v4187, %v4475
    %v4764 = vmul.f32 %v4188, %v4476
    %v4765 = vmul.f32 %v4189, %v4477
    %v4766 = vmul.f32 %v4190, %v4478
    %v4767 = vmul.f32 %v4191, %v4479
    %v4768 = vmul.f32 %v4192, %v4480
    %v4769 = vmul.f32 %v4193, %v4481
    %v4770 = vmul.f32 %v4194, %v4482
    %v4771 = vmul.f32 %v4195, %v4483
    %v4772 = vmul.f32 %v4196, %v4484
    %v4773 = vmul.f32 %v4197, %v4485
    %v4774 = vmul.f32 %v4198, %v4486
    %v4775 = vmul.f32 %v4199, %v4487
    %v4776 = vmul.f32 %v4200, %v4488
    %v4777 = vmul.f32 %v4201, %v4489
    %v4778 = vmul.f32 %v4202, %v4490
    %v4779 = vmul.f32 %v4203, %v4491
    %v4780 = vmul.f32 %v4204, %v4492
    %v4781 = vmul.f32 %v4205, %v4493
    %v4782 = vmul.f32 %v4206, %v4494
    %v4783 = vmul.f32 %v4207, %v4495
    %v4784 = vmul.f32 %v4208, %v4496
    %v4785 = vmul.f32 %v4209, %v4497
    %v4786 = vmul.f32 %v4210, %v4498
    %v4787 = vmul.f32 %v4211, %v4499
    %v4788 = vmul.f32 %v4212, %v4500
    %v4789 = vmul.f32 %v4213, %v4501
    %4790 = vst [vmem:[#allocation7] sm:$0xff] %v4502
    %4791 = vst [vmem:[#allocation7 + $0x8] sm:$0xff] %v4503
    %4792 = vst [vmem:[#allocation7 + $0x10] sm:$0xff] %v4504
    %4793 = vst [vmem:[#allocation7 + $0x18] sm:$0xff] %v4505
    %4794 = vst [vmem:[#allocation7 + $0x20] sm:$0xff] %v4506
    %4795 = vst [vmem:[#allocation7 + $0x28] sm:$0xff] %v4507
    %4796 = vst [vmem:[#allocation7 + $0x30] sm:$0xff] %v4508
    %4797 = vst [vmem:[#allocation7 + $0x38] sm:$0xff] %v4509
    %4798 = vst [vmem:[#allocation7 + $0x40] sm:$0xff] %v4510
    %4799 = vst [vmem:[#allocation7 + $0x48] sm:$0xff] %v4511
    %4800 = vst [vmem:[#allocation7 + $0x50] sm:$0xff] %v4512
    %4801 = vst [vmem:[#allocation7 + $0x58] sm:$0xff] %v4513
    %4802 = vst [vmem:[#allocation7 + $0x60] sm:$0xff] %v4514
    %4803 = vst [vmem:[#allocation7 + $0x68] sm:$0xff] %v4515
    %4804 = vst [vmem:[#allocation7 + $0x70] sm:$0xff] %v4516
    %4805 = vst [vmem:[#allocation7 + $0x78] sm:$0xff] %v4517
    %4806 = vst [vmem:[#allocation7 + $0x80] sm:$0xff] %v4518
    %4807 = vst [vmem:[#allocation7 + $0x88] sm:$0xff] %v4519
    %4808 = vst [vmem:[#allocation7 + $0x90] sm:$0xff] %v4520
    %4809 = vst [vmem:[#allocation7 + $0x98] sm:$0xff] %v4521
    %4810 = vst [vmem:[#allocation7 + $0xa0] sm:$0xff] %v4522
    %4811 = vst [vmem:[#allocation7 + $0xa8] sm:$0xff] %v4523
    %4812 = vst [vmem:[#allocation7 + $0xb0] sm:$0xff] %v4524
    %4813 = vst [vmem:[#allocation7 + $0xb8] sm:$0xff] %v4525
    %4814 = vst [vmem:[#allocation7 + $0xc0] sm:$0xff] %v4526
    %4815 = vst [vmem:[#allocation7 + $0xc8] sm:$0xff] %v4527
    %4816 = vst [vmem:[#allocation7 + $0xd0] sm:$0xff] %v4528
    %4817 = vst [vmem:[#allocation7 + $0xd8] sm:$0xff] %v4529
    %4818 = vst [vmem:[#allocation7 + $0xe0] sm:$0xff] %v4530
    %4819 = vst [vmem:[#allocation7 + $0xe8] sm:$0xff] %v4531
    %4820 = vst [vmem:[#allocation7 + $0xf0] sm:$0xff] %v4532
    %4821 = vst [vmem:[#allocation7 + $0xf8] sm:$0xff] %v4533
    %4822 = vst [vmem:[#allocation7 + $0x100] sm:$0xff] %v4534
    %4823 = vst [vmem:[#allocation7 + $0x108] sm:$0xff] %v4535
    %4824 = vst [vmem:[#allocation7 + $0x110] sm:$0xff] %v4536
    %4825 = vst [vmem:[#allocation7 + $0x118] sm:$0xff] %v4537
    %4826 = vst [vmem:[#allocation7 + $0x120] sm:$0xff] %v4538
    %4827 = vst [vmem:[#allocation7 + $0x128] sm:$0xff] %v4539
    %4828 = vst [vmem:[#allocation7 + $0x130] sm:$0xff] %v4540
    %4829 = vst [vmem:[#allocation7 + $0x138] sm:$0xff] %v4541
    %4830 = vst [vmem:[#allocation7 + $0x140] sm:$0xff] %v4542
    %4831 = vst [vmem:[#allocation7 + $0x148] sm:$0xff] %v4543
    %4832 = vst [vmem:[#allocation7 + $0x150] sm:$0xff] %v4544
    %4833 = vst [vmem:[#allocation7 + $0x158] sm:$0xff] %v4545
    %4834 = vst [vmem:[#allocation7 + $0x160] sm:$0xff] %v4546
    %4835 = vst [vmem:[#allocation7 + $0x168] sm:$0xff] %v4547
    %4836 = vst [vmem:[#allocation7 + $0x170] sm:$0xff] %v4548
    %4837 = vst [vmem:[#allocation7 + $0x178] sm:$0xff] %v4549
    %4838 = vst [vmem:[#allocation7 + $0x180] sm:$0xff] %v4550
    %4839 = vst [vmem:[#allocation7 + $0x188] sm:$0xff] %v4551
    %4840 = vst [vmem:[#allocation7 + $0x190] sm:$0xff] %v4552
    %4841 = vst [vmem:[#allocation7 + $0x198] sm:$0xff] %v4553
    %4842 = vst [vmem:[#allocation7 + $0x1a0] sm:$0xff] %v4554
    %4843 = vst [vmem:[#allocation7 + $0x1a8] sm:$0xff] %v4555
    %4844 = vst [vmem:[#allocation7 + $0x1b0] sm:$0xff] %v4556
    %4845 = vst [vmem:[#allocation7 + $0x1b8] sm:$0xff] %v4557
    %4846 = vst [vmem:[#allocation7 + $0x1c0] sm:$0xff] %v4558
    %4847 = vst [vmem:[#allocation7 + $0x1c8] sm:$0xff] %v4559
    %4848 = vst [vmem:[#allocation7 + $0x1d0] sm:$0xff] %v4560
    %4849 = vst [vmem:[#allocation7 + $0x1d8] sm:$0xff] %v4561
    %4850 = vst [vmem:[#allocation7 + $0x1e0] sm:$0xff] %v4562
    %4851 = vst [vmem:[#allocation7 + $0x1e8] sm:$0xff] %v4563
    %4852 = vst [vmem:[#allocation7 + $0x1f0] sm:$0xff] %v4564
    %4853 = vst [vmem:[#allocation7 + $0x1f8] sm:$0xff] %v4565
    %4854 = vst [vmem:[#allocation7 + $0x200] sm:$0xff] %v4566
    %4855 = vst [vmem:[#allocation7 + $0x208] sm:$0xff] %v4567
    %4856 = vst [vmem:[#allocation7 + $0x210] sm:$0xff] %v4568
    %4857 = vst [vmem:[#allocation7 + $0x218] sm:$0xff] %v4569
    %4858 = vst [vmem:[#allocation7 + $0x220] sm:$0xff] %v4570
    %4859 = vst [vmem:[#allocation7 + $0x228] sm:$0xff] %v4571
    %4860 = vst [vmem:[#allocation7 + $0x230] sm:$0xff] %v4572
    %4861 = vst [vmem:[#allocation7 + $0x238] sm:$0xff] %v4573
    %4862 = vst [vmem:[#allocation7 + $0x240] sm:$0xff] %v4574
    %4863 = vst [vmem:[#allocation7 + $0x248] sm:$0xff] %v4575
    %4864 = vst [vmem:[#allocation7 + $0x250] sm:$0xff] %v4576
    %4865 = vst [vmem:[#allocation7 + $0x258] sm:$0xff] %v4577
    %4866 = vst [vmem:[#allocation7 + $0x260] sm:$0xff] %v4578
    %4867 = vst [vmem:[#allocation7 + $0x268] sm:$0xff] %v4579
    %4868 = vst [vmem:[#allocation7 + $0x270] sm:$0xff] %v4580
    %4869 = vst [vmem:[#allocation7 + $0x278] sm:$0xff] %v4581
    %4870 = vst [vmem:[#allocation7 + $0x280] sm:$0xff] %v4582
    %4871 = vst [vmem:[#allocation7 + $0x288] sm:$0xff] %v4583
    %4872 = vst [vmem:[#allocation7 + $0x290] sm:$0xff] %v4584
    %4873 = vst [vmem:[#allocation7 + $0x298] sm:$0xff] %v4585
    %4874 = vst [vmem:[#allocation7 + $0x2a0] sm:$0xff] %v4586
    %4875 = vst [vmem:[#allocation7 + $0x2a8] sm:$0xff] %v4587
    %4876 = vst [vmem:[#allocation7 + $0x2b0] sm:$0xff] %v4588
    %4877 = vst [vmem:[#allocation7 + $0x2b8] sm:$0xff] %v4589
    %4878 = vst [vmem:[#allocation7 + $0x2c0] sm:$0xff] %v4590
    %4879 = vst [vmem:[#allocation7 + $0x2c8] sm:$0xff] %v4591
    %4880 = vst [vmem:[#allocation7 + $0x2d0] sm:$0xff] %v4592
    %4881 = vst [vmem:[#allocation7 + $0x2d8] sm:$0xff] %v4593
    %4882 = vst [vmem:[#allocation7 + $0x2e0] sm:$0xff] %v4594
    %4883 = vst [vmem:[#allocation7 + $0x2e8] sm:$0xff] %v4595
    %4884 = vst [vmem:[#allocation7 + $0x2f0] sm:$0xff] %v4596
    %4885 = vst [vmem:[#allocation7 + $0x2f8] sm:$0xff] %v4597
    %4886 = vst [vmem:[#allocation7 + $0x300] sm:$0xff] %v4598
    %4887 = vst [vmem:[#allocation7 + $0x308] sm:$0xff] %v4599
    %4888 = vst [vmem:[#allocation7 + $0x310] sm:$0xff] %v4600
    %4889 = vst [vmem:[#allocation7 + $0x318] sm:$0xff] %v4601
    %4890 = vst [vmem:[#allocation7 + $0x320] sm:$0xff] %v4602
    %4891 = vst [vmem:[#allocation7 + $0x328] sm:$0xff] %v4603
    %4892 = vst [vmem:[#allocation7 + $0x330] sm:$0xff] %v4604
    %4893 = vst [vmem:[#allocation7 + $0x338] sm:$0xff] %v4605
    %4894 = vst [vmem:[#allocation7 + $0x340] sm:$0xff] %v4606
    %4895 = vst [vmem:[#allocation7 + $0x348] sm:$0xff] %v4607
    %4896 = vst [vmem:[#allocation7 + $0x350] sm:$0xff] %v4608
    %4897 = vst [vmem:[#allocation7 + $0x358] sm:$0xff] %v4609
    %4898 = vst [vmem:[#allocation7 + $0x360] sm:$0xff] %v4610
    %4899 = vst [vmem:[#allocation7 + $0x368] sm:$0xff] %v4611
    %4900 = vst [vmem:[#allocation7 + $0x370] sm:$0xff] %v4612
    %4901 = vst [vmem:[#allocation7 + $0x378] sm:$0xff] %v4613
    %4902 = vst [vmem:[#allocation7 + $0x380] sm:$0xff] %v4614
    %4903 = vst [vmem:[#allocation7 + $0x388] sm:$0xff] %v4615
    %4904 = vst [vmem:[#allocation7 + $0x390] sm:$0xff] %v4616
    %4905 = vst [vmem:[#allocation7 + $0x398] sm:$0xff] %v4617
    %4906 = vst [vmem:[#allocation7 + $0x3a0] sm:$0xff] %v4618
    %4907 = vst [vmem:[#allocation7 + $0x3a8] sm:$0xff] %v4619
    %4908 = vst [vmem:[#allocation7 + $0x3b0] sm:$0xff] %v4620
    %4909 = vst [vmem:[#allocation7 + $0x3b8] sm:$0xff] %v4621
    %4910 = vst [vmem:[#allocation7 + $0x3c0] sm:$0xff] %v4622
    %4911 = vst [vmem:[#allocation7 + $0x3c8] sm:$0xff] %v4623
    %4912 = vst [vmem:[#allocation7 + $0x3d0] sm:$0xff] %v4624
    %4913 = vst [vmem:[#allocation7 + $0x3d8] sm:$0xff] %v4625
    %4914 = vst [vmem:[#allocation7 + $0x3e0] sm:$0xff] %v4626
    %4915 = vst [vmem:[#allocation7 + $0x3e8] sm:$0xff] %v4627
    %4916 = vst [vmem:[#allocation7 + $0x3f0] sm:$0xff] %v4628
    %4917 = vst [vmem:[#allocation7 + $0x3f8] sm:$0xff] %v4629
    %4918 = vst [vmem:[#allocation7 + $0x400] sm:$0xff] %v4630
    %4919 = vst [vmem:[#allocation7 + $0x408] sm:$0xff] %v4631
    %4920 = vst [vmem:[#allocation7 + $0x410] sm:$0xff] %v4632
    %4921 = vst [vmem:[#allocation7 + $0x418] sm:$0xff] %v4633
    %4922 = vst [vmem:[#allocation7 + $0x420] sm:$0xff] %v4634
    %4923 = vst [vmem:[#allocation7 + $0x428] sm:$0xff] %v4635
    %4924 = vst [vmem:[#allocation7 + $0x430] sm:$0xff] %v4636
    %4925 = vst [vmem:[#allocation7 + $0x438] sm:$0xff] %v4637
    %4926 = vst [vmem:[#allocation7 + $0x440] sm:$0xff] %v4638
    %4927 = vst [vmem:[#allocation7 + $0x448] sm:$0xff] %v4639
    %4928 = vst [vmem:[#allocation7 + $0x450] sm:$0xff] %v4640
    %4929 = vst [vmem:[#allocation7 + $0x458] sm:$0xff] %v4641
    %4930 = vst [vmem:[#allocation7 + $0x460] sm:$0xff] %v4642
    %4931 = vst [vmem:[#allocation7 + $0x468] sm:$0xff] %v4643
    %4932 = vst [vmem:[#allocation7 + $0x470] sm:$0xff] %v4644
    %4933 = vst [vmem:[#allocation7 + $0x478] sm:$0xff] %v4645
    %4934 = vst [vmem:[#allocation7 + $0x480] sm:$0xff] %v4646
    %4935 = vst [vmem:[#allocation7 + $0x488] sm:$0xff] %v4647
    %4936 = vst [vmem:[#allocation7 + $0x490] sm:$0xff] %v4648
    %4937 = vst [vmem:[#allocation7 + $0x498] sm:$0xff] %v4649
    %4938 = vst [vmem:[#allocation7 + $0x4a0] sm:$0xff] %v4650
    %4939 = vst [vmem:[#allocation7 + $0x4a8] sm:$0xff] %v4651
    %4940 = vst [vmem:[#allocation7 + $0x4b0] sm:$0xff] %v4652
    %4941 = vst [vmem:[#allocation7 + $0x4b8] sm:$0xff] %v4653
    %4942 = vst [vmem:[#allocation7 + $0x4c0] sm:$0xff] %v4654
    %4943 = vst [vmem:[#allocation7 + $0x4c8] sm:$0xff] %v4655
    %4944 = vst [vmem:[#allocation7 + $0x4d0] sm:$0xff] %v4656
    %4945 = vst [vmem:[#allocation7 + $0x4d8] sm:$0xff] %v4657
    %4946 = vst [vmem:[#allocation7 + $0x4e0] sm:$0xff] %v4658
    %4947 = vst [vmem:[#allocation7 + $0x4e8] sm:$0xff] %v4659
    %4948 = vst [vmem:[#allocation7 + $0x4f0] sm:$0xff] %v4660
    %4949 = vst [vmem:[#allocation7 + $0x4f8] sm:$0xff] %v4661
    %4950 = vst [vmem:[#allocation7 + $0x500] sm:$0xff] %v4662
    %4951 = vst [vmem:[#allocation7 + $0x508] sm:$0xff] %v4663
    %4952 = vst [vmem:[#allocation7 + $0x510] sm:$0xff] %v4664
    %4953 = vst [vmem:[#allocation7 + $0x518] sm:$0xff] %v4665
    %4954 = vst [vmem:[#allocation7 + $0x520] sm:$0xff] %v4666
    %4955 = vst [vmem:[#allocation7 + $0x528] sm:$0xff] %v4667
    %4956 = vst [vmem:[#allocation7 + $0x530] sm:$0xff] %v4668
    %4957 = vst [vmem:[#allocation7 + $0x538] sm:$0xff] %v4669
    %4958 = vst [vmem:[#allocation7 + $0x540] sm:$0xff] %v4670
    %4959 = vst [vmem:[#allocation7 + $0x548] sm:$0xff] %v4671
    %4960 = vst [vmem:[#allocation7 + $0x550] sm:$0xff] %v4672
    %4961 = vst [vmem:[#allocation7 + $0x558] sm:$0xff] %v4673
    %4962 = vst [vmem:[#allocation7 + $0x560] sm:$0xff] %v4674
    %4963 = vst [vmem:[#allocation7 + $0x568] sm:$0xff] %v4675
    %4964 = vst [vmem:[#allocation7 + $0x570] sm:$0xff] %v4676
    %4965 = vst [vmem:[#allocation7 + $0x578] sm:$0xff] %v4677
    %4966 = vst [vmem:[#allocation7 + $0x580] sm:$0xff] %v4678
    %4967 = vst [vmem:[#allocation7 + $0x588] sm:$0xff] %v4679
    %4968 = vst [vmem:[#allocation7 + $0x590] sm:$0xff] %v4680
    %4969 = vst [vmem:[#allocation7 + $0x598] sm:$0xff] %v4681
    %4970 = vst [vmem:[#allocation7 + $0x5a0] sm:$0xff] %v4682
    %4971 = vst [vmem:[#allocation7 + $0x5a8] sm:$0xff] %v4683
    %4972 = vst [vmem:[#allocation7 + $0x5b0] sm:$0xff] %v4684
    %4973 = vst [vmem:[#allocation7 + $0x5b8] sm:$0xff] %v4685
    %4974 = vst [vmem:[#allocation7 + $0x5c0] sm:$0xff] %v4686
    %4975 = vst [vmem:[#allocation7 + $0x5c8] sm:$0xff] %v4687
    %4976 = vst [vmem:[#allocation7 + $0x5d0] sm:$0xff] %v4688
    %4977 = vst [vmem:[#allocation7 + $0x5d8] sm:$0xff] %v4689
    %4978 = vst [vmem:[#allocation7 + $0x5e0] sm:$0xff] %v4690
    %4979 = vst [vmem:[#allocation7 + $0x5e8] sm:$0xff] %v4691
    %4980 = vst [vmem:[#allocation7 + $0x5f0] sm:$0xff] %v4692
    %4981 = vst [vmem:[#allocation7 + $0x5f8] sm:$0xff] %v4693
    %4982 = vst [vmem:[#allocation7 + $0x600] sm:$0xff] %v4694
    %4983 = vst [vmem:[#allocation7 + $0x608] sm:$0xff] %v4695
    %4984 = vst [vmem:[#allocation7 + $0x610] sm:$0xff] %v4696
    %4985 = vst [vmem:[#allocation7 + $0x618] sm:$0xff] %v4697
    %4986 = vst [vmem:[#allocation7 + $0x620] sm:$0xff] %v4698
    %4987 = vst [vmem:[#allocation7 + $0x628] sm:$0xff] %v4699
    %4988 = vst [vmem:[#allocation7 + $0x630] sm:$0xff] %v4700
    %4989 = vst [vmem:[#allocation7 + $0x638] sm:$0xff] %v4701
    %4990 = vst [vmem:[#allocation7 + $0x640] sm:$0xff] %v4702
    %4991 = vst [vmem:[#allocation7 + $0x648] sm:$0xff] %v4703
    %4992 = vst [vmem:[#allocation7 + $0x650] sm:$0xff] %v4704
    %4993 = vst [vmem:[#allocation7 + $0x658] sm:$0xff] %v4705
    %4994 = vst [vmem:[#allocation7 + $0x660] sm:$0xff] %v4706
    %4995 = vst [vmem:[#allocation7 + $0x668] sm:$0xff] %v4707
    %4996 = vst [vmem:[#allocation7 + $0x670] sm:$0xff] %v4708
    %4997 = vst [vmem:[#allocation7 + $0x678] sm:$0xff] %v4709
    %4998 = vst [vmem:[#allocation7 + $0x680] sm:$0xff] %v4710
    %4999 = vst [vmem:[#allocation7 + $0x688] sm:$0xff] %v4711
    %5000 = vst [vmem:[#allocation7 + $0x690] sm:$0xff] %v4712
    %5001 = vst [vmem:[#allocation7 + $0x698] sm:$0xff] %v4713
    %5002 = vst [vmem:[#allocation7 + $0x6a0] sm:$0xff] %v4714
    %5003 = vst [vmem:[#allocation7 + $0x6a8] sm:$0xff] %v4715
    %5004 = vst [vmem:[#allocation7 + $0x6b0] sm:$0xff] %v4716
    %5005 = vst [vmem:[#allocation7 + $0x6b8] sm:$0xff] %v4717
    %5006 = vst [vmem:[#allocation7 + $0x6c0] sm:$0xff] %v4718
    %5007 = vst [vmem:[#allocation7 + $0x6c8] sm:$0xff] %v4719
    %5008 = vst [vmem:[#allocation7 + $0x6d0] sm:$0xff] %v4720
    %5009 = vst [vmem:[#allocation7 + $0x6d8] sm:$0xff] %v4721
    %5010 = vst [vmem:[#allocation7 + $0x6e0] sm:$0xff] %v4722
    %5011 = vst [vmem:[#allocation7 + $0x6e8] sm:$0xff] %v4723
    %5012 = vst [vmem:[#allocation7 + $0x6f0] sm:$0xff] %v4724
    %5013 = vst [vmem:[#allocation7 + $0x6f8] sm:$0xff] %v4725
    %5014 = vst [vmem:[#allocation7 + $0x700] sm:$0xff] %v4726
    %5015 = vst [vmem:[#allocation7 + $0x708] sm:$0xff] %v4727
    %5016 = vst [vmem:[#allocation7 + $0x710] sm:$0xff] %v4728
    %5017 = vst [vmem:[#allocation7 + $0x718] sm:$0xff] %v4729
    %5018 = vst [vmem:[#allocation7 + $0x720] sm:$0xff] %v4730
    %5019 = vst [vmem:[#allocation7 + $0x728] sm:$0xff] %v4731
    %5020 = vst [vmem:[#allocation7 + $0x730] sm:$0xff] %v4732
    %5021 = vst [vmem:[#allocation7 + $0x738] sm:$0xff] %v4733
    %5022 = vst [vmem:[#allocation7 + $0x740] sm:$0xff] %v4734
    %5023 = vst [vmem:[#allocation7 + $0x748] sm:$0xff] %v4735
    %5024 = vst [vmem:[#allocation7 + $0x750] sm:$0xff] %v4736
    %5025 = vst [vmem:[#allocation7 + $0x758] sm:$0xff] %v4737
    %5026 = vst [vmem:[#allocation7 + $0x760] sm:$0xff] %v4738
    %5027 = vst [vmem:[#allocation7 + $0x768] sm:$0xff] %v4739
    %5028 = vst [vmem:[#allocation7 + $0x770] sm:$0xff] %v4740
    %5029 = vst [vmem:[#allocation7 + $0x778] sm:$0xff] %v4741
    %5030 = vst [vmem:[#allocation7 + $0x780] sm:$0xff] %v4742
    %5031 = vst [vmem:[#allocation7 + $0x788] sm:$0xff] %v4743
    %5032 = vst [vmem:[#allocation7 + $0x790] sm:$0xff] %v4744
    %5033 = vst [vmem:[#allocation7 + $0x798] sm:$0xff] %v4745
    %5034 = vst [vmem:[#allocation7 + $0x7a0] sm:$0xff] %v4746
    %5035 = vst [vmem:[#allocation7 + $0x7a8] sm:$0xff] %v4747
    %5036 = vst [vmem:[#allocation7 + $0x7b0] sm:$0xff] %v4748
    %5037 = vst [vmem:[#allocation7 + $0x7b8] sm:$0xff] %v4749
    %5038 = vst [vmem:[#allocation7 + $0x7c0] sm:$0xff] %v4750
    %5039 = vst [vmem:[#allocation7 + $0x7c8] sm:$0xff] %v4751
    %5040 = vst [vmem:[#allocation7 + $0x7d0] sm:$0xff] %v4752
    %5041 = vst [vmem:[#allocation7 + $0x7d8] sm:$0xff] %v4753
    %5042 = vst [vmem:[#allocation7 + $0x7e0] sm:$0xff] %v4754
    %5043 = vst [vmem:[#allocation7 + $0x7e8] sm:$0xff] %v4755
    %5044 = vst [vmem:[#allocation7 + $0x7f0] sm:$0xff] %v4756
    %5045 = vst [vmem:[#allocation7 + $0x7f8] sm:$0xff] %v4757
    %5046 = vst [vmem:[#allocation7 + $0x800] sm:$0xff] %v4758
    %5047 = vst [vmem:[#allocation7 + $0x808] sm:$0xff] %v4759
    %5048 = vst [vmem:[#allocation7 + $0x810] sm:$0xff] %v4760
    %5049 = vst [vmem:[#allocation7 + $0x818] sm:$0xff] %v4761
    %5050 = vst [vmem:[#allocation7 + $0x820] sm:$0xff] %v4762
    %5051 = vst [vmem:[#allocation7 + $0x828] sm:$0xff] %v4763
    %5052 = vst [vmem:[#allocation7 + $0x830] sm:$0xff] %v4764
    %5053 = vst [vmem:[#allocation7 + $0x838] sm:$0xff] %v4765
    %5054 = vst [vmem:[#allocation7 + $0x840] sm:$0xff] %v4766
    %5055 = vst [vmem:[#allocation7 + $0x848] sm:$0xff] %v4767
    %5056 = vst [vmem:[#allocation7 + $0x850] sm:$0xff] %v4768
    %5057 = vst [vmem:[#allocation7 + $0x858] sm:$0xff] %v4769
    %5058 = vst [vmem:[#allocation7 + $0x860] sm:$0xff] %v4770
    %5059 = vst [vmem:[#allocation7 + $0x868] sm:$0xff] %v4771
    %5060 = vst [vmem:[#allocation7 + $0x870] sm:$0xff] %v4772
    %5061 = vst [vmem:[#allocation7 + $0x878] sm:$0xff] %v4773
    %5062 = vst [vmem:[#allocation7 + $0x880] sm:$0xff] %v4774
    %5063 = vst [vmem:[#allocation7 + $0x888] sm:$0xff] %v4775
    %5064 = vst [vmem:[#allocation7 + $0x890] sm:$0xff] %v4776
    %5065 = vst [vmem:[#allocation7 + $0x898] sm:$0xff] %v4777
    %5066 = vst [vmem:[#allocation7 + $0x8a0] sm:$0xff] %v4778
    %5067 = vst [vmem:[#allocation7 + $0x8a8] sm:$0xff] %v4779
    %5068 = vst [vmem:[#allocation7 + $0x8b0] sm:$0xff] %v4780
    %5069 = vst [vmem:[#allocation7 + $0x8b8] sm:$0xff] %v4781
    %5070 = vst [vmem:[#allocation7 + $0x8c0] sm:$0xff] %v4782
    %5071 = vst [vmem:[#allocation7 + $0x8c8] sm:$0xff] %v4783
    %5072 = vst [vmem:[#allocation7 + $0x8d0] sm:$0xff] %v4784
    %5073 = vst [vmem:[#allocation7 + $0x8d8] sm:$0xff] %v4785
    %5074 = vst [vmem:[#allocation7 + $0x8e0] sm:$0xff] %v4786
    %5075 = vst [vmem:[#allocation7 + $0x8e8] sm:$0xff] %v4787
    %5076 = vst [vmem:[#allocation7 + $0x8f0] sm:$0xff] %v4788
    %5077 = vst [vmem:[#allocation7 + $0x8f8] sm:$0xff] %v4789
    // Predicated region
    $region10: #{tpu_custom_call.1} parent=1 // pred_check
      _
    $region11: #{tpu_custom_call.1} parent=1 // pred_check_branch
      %5079 = sbr.rel (0) target = $region13
    $region12: #{tpu_custom_call.1} parent=1 // pred_region
      %s5081 = ssub.s32 36864, 36864
      %5082 = vsyncadd [#allocation6], %s5081
      %s5083 = sshll.u32 [#allocation7], 4
      %s5084 = int_to_ptr.vmem [resolvable:$true] %s5083
      %5089 = dma.vmem_to_hbm [thread:$0]  %s5084, 36864, %s2, [#allocation6], 768, 768, 48
    $region13: #{tpu_custom_call.1} parent=1 // pred_fallthru
      _
    // Predicated region
    $region14: #{tpu_custom_call.1} parent=1 // pred_check
      _
    $region15: #{tpu_custom_call.1} parent=1 // pred_check_branch
      %5091 = sbr.rel (0) target = $region17
    $region16: #{tpu_custom_call.1} parent=1 // pred_region
      %5092 = dma.done [#allocation6], 36864
    $region17: #{tpu_custom_call.1} parent=1 // pred_fallthru
      _
    %5093 = vsyncpa [#allocation5], 1
    %5094 = vsyncpa [#allocation6], 1

</llo_original>
